<compile_context>
chip_gen: v7x
topology: tpu7x:2x2x1
jax: 0.10.0
libtpu: 0.0.40
codegen_flags: <defaults>
</compile_context>

<pallas_src>
import functools
import math

import jax
import jax.numpy as jnp
from jax.experimental import pallas as pl
from jax.experimental.pallas import tpu as pltpu


def _leaky(v):
    # spec's MLP uses F.leaky_relu(..., negative_slope=0.2)
    return jnp.where(v > 0, v, 0.2 * v)


def _block_diag_apply(a, h_flat, gb, npg):
    """Apply block-diagonal A_hat (per-graph (npg,npg) blocks) to (gb*npg, F).

    a:      (gb, npg, npg) f32
    h_flat: (gb*npg, F)    f32
    returns (gb, npg, F)   f32
    Unrolled npg-step broadcast-FMA on the VPU (A@XW FLOPs are tiny).
    """
    feat = h_flat.shape[-1]
    h = h_flat.reshape(gb, npg, feat)
    acc = a[:, :, 0:1] * h[:, 0:1, :]
    for j in range(1, npg):
        acc = acc + a[:, :, j:j + 1] * h[:, j:j + 1, :]
    return acc


def _gnn_kernel(a_ref, x_ref,
                w1_ref, b1_ref,
                w2_ref, b2_ref,
                w3_ref, b3_ref,
                w4_ref, b4_ref,
                out_ref,
                *, graphs_per_block, nodes_per_graph):
    gb, npg = graphs_per_block, nodes_per_graph
    a = a_ref[...]            # (gb, npg, npg) f32, per-graph normalized adjacency
    x = x_ref[...]            # (gb*npg, D)   bf16 node features

    # --- GCNConv 1:  A_hat @ (X @ W1) + b1 , leaky_relu(0.2) ---
    xw = jnp.dot(x, w1_ref[...], preferred_element_type=jnp.float32)   # (BLK, H)
    h1 = _block_diag_apply(a, xw, gb, npg) + b1_ref[...]                # (gb, npg, H)
    h1 = _leaky(h1)

    # --- GCNConv 2:  A_hat @ (H1 @ W2) + b2 , leaky_relu(0.2) ---
    hid = h1.shape[-1]
    hw = jnp.dot(h1.reshape(gb * npg, hid).astype(jnp.bfloat16), w2_ref[...],
                 preferred_element_type=jnp.float32)                    # (BLK, 8)
    h2 = _block_diag_apply(a, hw, gb, npg) + b2_ref[...]                # (gb, npg, 8)
    h2 = _leaky(h2)

    # --- mean readout over each graph's nodes (cross-sublane reduce) ---
    g = jnp.mean(h2, axis=1)                                            # (gb, 8)

    # --- epilogue: tiny MXU dots, f32 math ---
    # lin1 (8 -> 8) + leaky_relu(0.2)
    g = jnp.dot(g, w3_ref[...], preferred_element_type=jnp.float32) + b3_ref[...]
    g = _leaky(g)
    # dropout(p=0.5) eval mode -> identity
    # lin2 (8 -> 2) against a zero-padded (8, 128) weight => lane-dense store.
    out = jnp.dot(g, w4_ref[...], preferred_element_type=jnp.float32) + b4_ref[...]
    out_ref[...] = out.astype(out_ref.dtype)                            # bf16 store


def gcn_norm_per_graph(edge_index, batch_size, nodes_per_graph):
    """Per-graph dense gcn_norm with self-loops (plain-JAX glue).

    Assumes graphs are contiguous, equal-sized, and edges never cross graphs
    (standard PyG batching).  Returns (batch_size, npg, npg) f32.
    """
    npg = nodes_per_graph
    src, dst = edge_index[0], edge_index[1]
    gid = dst // npg
    li = dst % npg                         # local target index (message dst)
    lj = src % npg                         # local source index (message src)
    A = jnp.zeros((batch_size, npg, npg), jnp.float32)
    A = A.at[gid, li, lj].add(1.0)
    A = A + jnp.eye(npg, dtype=jnp.float32)[None, :, :]   # self-loops
    deg = jnp.sum(A, axis=2)                               # in-degree incl. self
    dinv = jnp.where(deg > 0, 1.0 / jnp.sqrt(deg), 0.0)
    return A * dinv[:, :, None] * dinv[:, None, :]


def _round_up(v, m):
    return -(-v // m) * m


def _block_vmem_bytes(gb, npg, input_dim):
    blk = gb * npg
    x_b = blk * input_dim * 2          # bf16 features
    a_b = gb * npg * npg * 4           # f32 per-graph adjacency
    o_b = gb * 128 * 2                 # bf16 lane-dense output
    w_b = 256 * 1024                   # weights + padded bias tiles (fixed allowance)
    return 2 * (x_b + a_b + o_b) + w_b  # double-buffered streaming blocks


def gnn_forward(x, edge_index, batch_size, params):
    """batch_size is a static Python int (graphs contiguous, equal-sized)."""
    n, input_dim = x.shape
    assert n % batch_size == 0
    npg = n // batch_size                                     # nodes per graph

    # ---- VMEM budget (v7x has 64 MiB physical; v5e/v6e 128 MiB) ----
    try:
        vmem_cap = int(pltpu.get_tpu_info().vmem_capacity_bytes)
    except Exception:
        vmem_cap = 64 * 1024 * 1024
    vmem_limit = min(vmem_cap // 2, 64 * 1024 * 1024)
    vmem_budget = vmem_limit // 2                             # double-buffer headroom

    # ---- block sizing ----
    # gb must be a multiple of 8 (sublane-dense output rows); BLK = gb*npg must
    # be a multiple of 128 (fills MXU rows) => gb multiple of 128/gcd(128,npg).
    g_step = max(8, 128 // math.gcd(128, npg))
    target_rows = 512                                         # amortize grid-step overhead
    gb = _round_up(max(1, -(-target_rows // npg)), g_step)
    gb_cover = _round_up(batch_size, g_step)                  # don't over-pad tiny batches
    gb = min(gb, gb_cover)
    # v7x: if the batch can split, prefer >=2 blocks so the "parallel" grid
    # axis shards across both TensorCores (neutral on v5e/v6e).
    if gb_cover > g_step:
        gb = min(gb, max(g_step, _round_up(-(-batch_size // 2), g_step)))
    # cap against VMEM
    while gb > g_step and _block_vmem_bytes(gb, npg, input_dim) > vmem_budget:
        gb -= g_step

    b_pad = _round_up(batch_size, gb)
    num_blocks = b_pad // gb
    blk = gb * npg
    n_pad = b_pad * npg

    # ---- wrapper-side glue (plain JAX, no dense (N,N) array) ----
    a_graphs = jnp.zeros((b_pad, npg, npg), jnp.float32)
    a_graphs = a_graphs.at[:batch_size].set(
        gcn_norm_per_graph(edge_index, batch_size, npg))

    x_pad = jnp.zeros((n_pad, input_dim), jnp.float32).at[:n, :].set(x)
    x_pad = x_pad.astype(jnp.bfloat16)

    w1 = params["w1"].astype(jnp.bfloat16)
    w2 = params["w2"].astype(jnp.bfloat16)
    b1 = params["b1"].astype(jnp.float32)
    b2 = params["b2"].astype(jnp.float32)
    w3 = params["w3"].astype(jnp.float32)
    b3 = params["b3"].astype(jnp.float32)
    # lane-dense zero-padded lin2 weight/bias: (8, 128) / (1, 128)
    w4 = jnp.zeros((params["w4"].shape[0], 128), jnp.float32).at[:, :2].set(params["w4"])
    b4 = jnp.zeros((1, 128), jnp.float32).at[:, :2].set(params["b4"])

    kernel = functools.partial(_gnn_kernel,
                               graphs_per_block=gb, nodes_per_graph=npg)

    def const_spec(arr):
        zeros = (0,) * arr.ndim
        return pl.BlockSpec(arr.shape, lambda i, z=zeros: z)

    in_specs = [
        pl.BlockSpec((gb, npg, npg), lambda i: (i, 0, 0)),    # per-graph A_hat blocks
        pl.BlockSpec((blk, input_dim), lambda i: (i, 0)),     # node features
        const_spec(w1), const_spec(b1),
        const_spec(w2), const_spec(b2),
        const_spec(w3), const_spec(b3),
        const_spec(w4), const_spec(b4),
    ]
    out_spec = pl.BlockSpec((gb, 128), lambda i: (i, 0))

    out_pad = pl.pallas_call(
        kernel,
        out_shape=jax.ShapeDtypeStruct((b_pad, 128), jnp.bfloat16),
        grid=(num_blocks,),
        in_specs=in_specs,
        out_specs=out_spec,
        compiler_params=pltpu.CompilerParams(
            dimension_semantics=("parallel",),
            vmem_limit_bytes=vmem_limit),
    )(a_graphs, x_pad, w1, b1, w2, b2, w3, b3, w4, b4)

    return out_pad[:batch_size, :2].astype(jnp.float32)


def init_params(key, input_dim=384, hidden_dim=32):
    ks = jax.random.split(key, 8)
    scale = 0.1
    return {
        # GCNConv weights stored already transposed: (in, out)
        "w1": scale * jax.random.normal(ks[0], (input_dim, hidden_dim), jnp.float32),
        "b1": jnp.zeros((1, hidden_dim), jnp.float32),
        "w2": scale * jax.random.normal(ks[1], (hidden_dim, 8), jnp.float32),
        "b2": scale * jax.random.normal(ks[2], (1, 8), jnp.float32),
        # Linear layers, stored transposed: (in, out)
        "w3": scale * jax.random.normal(ks[3], (8, 8), jnp.float32),
        "b3": scale * jax.random.normal(ks[4], (1, 8), jnp.float32),
        "w4": scale * jax.random.normal(ks[5], (8, 2), jnp.float32),
        "b4": scale * jax.random.normal(ks[6], (1, 2), jnp.float32),
    }


if __name__ == "__main__":
    key = jax.random.PRNGKey(0)
    k_x, k_p = jax.random.split(key)

    batch_size = 2
    nodes_per_graph = 8
    n = batch_size * nodes_per_graph
    input_dim = 384
    hidden_dim = 32

    # node features
    x = jax.random.normal(k_x, (n, input_dim), jnp.float32)

    # edge_index: bidirectional ring inside each graph (no cross-graph edges)
    src, dst = [], []
    for g in range(batch_size):
        base = g * nodes_per_graph
        for i in range(nodes_per_graph):
            a, b = base + i, base + (i + 1) % nodes_per_graph
            src += [a, b]
            dst += [b, a]
    edge_index = jnp.array([src, dst], dtype=jnp.int32)

    params = init_params(k_p, input_dim=input_dim, hidden_dim=hidden_dim)

    out = gnn_forward(x, edge_index, batch_size, params)
    jax.block_until_ready(out)
    assert out.shape == (batch_size, 2)
    assert bool(jnp.all(jnp.isfinite(out)))
    print("KERNEL_OK")
</pallas_src>

<mosaic_0001>
module attributes {stable_mosaic.version = 11 : i64} {
  func.func @_gnn_kernel(%arg0: i32, %arg1: memref<16x8x8xf32, #tpu.memory_space<vmem>>, %arg2: memref<128x384xbf16, #tpu.memory_space<vmem>>, %arg3: memref<384x32xbf16, #tpu.memory_space<vmem>>, %arg4: memref<1x32xf32, #tpu.memory_space<vmem>>, %arg5: memref<32x8xbf16, #tpu.memory_space<vmem>>, %arg6: memref<1x8xf32, #tpu.memory_space<vmem>>, %arg7: memref<8x8xf32, #tpu.memory_space<vmem>>, %arg8: memref<1x8xf32, #tpu.memory_space<vmem>>, %arg9: memref<8x128xf32, #tpu.memory_space<vmem>>, %arg10: memref<1x128xf32, #tpu.memory_space<vmem>>, %arg11: memref<16x128xbf16, #tpu.memory_space<vmem>>) attributes {dimension_semantics = [#tpu.dimension_semantics<parallel>], iteration_bounds = array<i64: 1>, scalar_prefetch = 0 : i64, scratch_operands = 0 : i64, tpu.core_type = #tpu.core_type<tc>, window_params = [{transform_indices = @transform_0, window_bounds = array<i64: 16, 8, 8>}, {transform_indices = @transform_1, window_bounds = array<i64: 128, 384>}, {pipeline_mode = #tpu.pipeline_mode<synchronous>, transform_indices = @transform_2, window_bounds = array<i64: 384, 32>}, {pipeline_mode = #tpu.pipeline_mode<synchronous>, transform_indices = @transform_3, window_bounds = array<i64: 1, 32>}, {pipeline_mode = #tpu.pipeline_mode<synchronous>, transform_indices = @transform_4, window_bounds = array<i64: 32, 8>}, {pipeline_mode = #tpu.pipeline_mode<synchronous>, transform_indices = @transform_5, window_bounds = array<i64: 1, 8>}, {pipeline_mode = #tpu.pipeline_mode<synchronous>, transform_indices = @transform_6, window_bounds = array<i64: 8, 8>}, {pipeline_mode = #tpu.pipeline_mode<synchronous>, transform_indices = @transform_7, window_bounds = array<i64: 1, 8>}, {pipeline_mode = #tpu.pipeline_mode<synchronous>, transform_indices = @transform_8, window_bounds = array<i64: 8, 128>}, {pipeline_mode = #tpu.pipeline_mode<synchronous>, transform_indices = @transform_9, window_bounds = array<i64: 1, 128>}, {transform_indices = @transform_10, window_bounds = array<i64: 16, 128>}]} {
    %c0 = arith.constant 0 : index
    %c0_0 = arith.constant 0 : index
    %c0_1 = arith.constant 0 : index
    %0 = vector.load %arg1[%c0, %c0_0, %c0_1] : memref<16x8x8xf32, #tpu.memory_space<vmem>>, vector<16x8x8xf32>
    %c0_2 = arith.constant 0 : index
    %c0_3 = arith.constant 0 : index
    %1 = vector.load %arg2[%c0_2, %c0_3] : memref<128x384xbf16, #tpu.memory_space<vmem>>, vector<128x384xbf16>
    %c0_4 = arith.constant 0 : index
    %c0_5 = arith.constant 0 : index
    %2 = vector.load %arg3[%c0_4, %c0_5] : memref<384x32xbf16, #tpu.memory_space<vmem>>, vector<384x32xbf16>
    %cst = arith.constant dense<0.000000e+00> : vector<128x32xf32>
    %3 = tpu.matmul %1, %2, %cst {dimension_numbers = #tpu.dot_dimension_numbers<[1], [0], [0], [1], [0, 0, 1, 1], [], []>} : vector<128x384xbf16>, vector<384x32xbf16>, vector<128x32xf32> -> vector<128x32xf32>
    %4 = vector.shape_cast %3 : vector<128x32xf32> to vector<16x8x32xf32>
    %5 = vector.extract_strided_slice %0 {offsets = [0, 0, 0], sizes = [16, 8, 1], strides = [1, 1, 1]} : vector<16x8x8xf32> to vector<16x8x1xf32>
    %6 = vector.extract_strided_slice %4 {offsets = [0, 0, 0], sizes = [16, 1, 32], strides = [1, 1, 1]} : vector<16x8x32xf32> to vector<16x1x32xf32>
    %7 = vector.broadcast %5 : vector<16x8x1xf32> to vector<16x8x32xf32>
    %8 = vector.broadcast %6 : vector<16x1x32xf32> to vector<16x8x32xf32>
    %9 = arith.mulf %7, %8 : vector<16x8x32xf32>
    %10 = vector.extract_strided_slice %0 {offsets = [0, 0, 1], sizes = [16, 8, 1], strides = [1, 1, 1]} : vector<16x8x8xf32> to vector<16x8x1xf32>
    %11 = vector.extract_strided_slice %4 {offsets = [0, 1, 0], sizes = [16, 1, 32], strides = [1, 1, 1]} : vector<16x8x32xf32> to vector<16x1x32xf32>
    %12 = vector.broadcast %10 : vector<16x8x1xf32> to vector<16x8x32xf32>
    %13 = vector.broadcast %11 : vector<16x1x32xf32> to vector<16x8x32xf32>
    %14 = arith.mulf %12, %13 : vector<16x8x32xf32>
    %15 = arith.addf %9, %14 : vector<16x8x32xf32>
    %16 = vector.extract_strided_slice %0 {offsets = [0, 0, 2], sizes = [16, 8, 1], strides = [1, 1, 1]} : vector<16x8x8xf32> to vector<16x8x1xf32>
    %17 = vector.extract_strided_slice %4 {offsets = [0, 2, 0], sizes = [16, 1, 32], strides = [1, 1, 1]} : vector<16x8x32xf32> to vector<16x1x32xf32>
    %18 = vector.broadcast %16 : vector<16x8x1xf32> to vector<16x8x32xf32>
    %19 = vector.broadcast %17 : vector<16x1x32xf32> to vector<16x8x32xf32>
    %20 = arith.mulf %18, %19 : vector<16x8x32xf32>
    %21 = arith.addf %15, %20 : vector<16x8x32xf32>
    %22 = vector.extract_strided_slice %0 {offsets = [0, 0, 3], sizes = [16, 8, 1], strides = [1, 1, 1]} : vector<16x8x8xf32> to vector<16x8x1xf32>
    %23 = vector.extract_strided_slice %4 {offsets = [0, 3, 0], sizes = [16, 1, 32], strides = [1, 1, 1]} : vector<16x8x32xf32> to vector<16x1x32xf32>
    %24 = vector.broadcast %22 : vector<16x8x1xf32> to vector<16x8x32xf32>
    %25 = vector.broadcast %23 : vector<16x1x32xf32> to vector<16x8x32xf32>
    %26 = arith.mulf %24, %25 : vector<16x8x32xf32>
    %27 = arith.addf %21, %26 : vector<16x8x32xf32>
    %28 = vector.extract_strided_slice %0 {offsets = [0, 0, 4], sizes = [16, 8, 1], strides = [1, 1, 1]} : vector<16x8x8xf32> to vector<16x8x1xf32>
    %29 = vector.extract_strided_slice %4 {offsets = [0, 4, 0], sizes = [16, 1, 32], strides = [1, 1, 1]} : vector<16x8x32xf32> to vector<16x1x32xf32>
    %30 = vector.broadcast %28 : vector<16x8x1xf32> to vector<16x8x32xf32>
    %31 = vector.broadcast %29 : vector<16x1x32xf32> to vector<16x8x32xf32>
    %32 = arith.mulf %30, %31 : vector<16x8x32xf32>
    %33 = arith.addf %27, %32 : vector<16x8x32xf32>
    %34 = vector.extract_strided_slice %0 {offsets = [0, 0, 5], sizes = [16, 8, 1], strides = [1, 1, 1]} : vector<16x8x8xf32> to vector<16x8x1xf32>
    %35 = vector.extract_strided_slice %4 {offsets = [0, 5, 0], sizes = [16, 1, 32], strides = [1, 1, 1]} : vector<16x8x32xf32> to vector<16x1x32xf32>
    %36 = vector.broadcast %34 : vector<16x8x1xf32> to vector<16x8x32xf32>
    %37 = vector.broadcast %35 : vector<16x1x32xf32> to vector<16x8x32xf32>
    %38 = arith.mulf %36, %37 : vector<16x8x32xf32>
    %39 = arith.addf %33, %38 : vector<16x8x32xf32>
    %40 = vector.extract_strided_slice %0 {offsets = [0, 0, 6], sizes = [16, 8, 1], strides = [1, 1, 1]} : vector<16x8x8xf32> to vector<16x8x1xf32>
    %41 = vector.extract_strided_slice %4 {offsets = [0, 6, 0], sizes = [16, 1, 32], strides = [1, 1, 1]} : vector<16x8x32xf32> to vector<16x1x32xf32>
    %42 = vector.broadcast %40 : vector<16x8x1xf32> to vector<16x8x32xf32>
    %43 = vector.broadcast %41 : vector<16x1x32xf32> to vector<16x8x32xf32>
    %44 = arith.mulf %42, %43 : vector<16x8x32xf32>
    %45 = arith.addf %39, %44 : vector<16x8x32xf32>
    %46 = vector.extract_strided_slice %0 {offsets = [0, 0, 7], sizes = [16, 8, 1], strides = [1, 1, 1]} : vector<16x8x8xf32> to vector<16x8x1xf32>
    %47 = vector.extract_strided_slice %4 {offsets = [0, 7, 0], sizes = [16, 1, 32], strides = [1, 1, 1]} : vector<16x8x32xf32> to vector<16x1x32xf32>
    %48 = vector.broadcast %46 : vector<16x8x1xf32> to vector<16x8x32xf32>
    %49 = vector.broadcast %47 : vector<16x1x32xf32> to vector<16x8x32xf32>
    %50 = arith.mulf %48, %49 : vector<16x8x32xf32>
    %51 = arith.addf %45, %50 : vector<16x8x32xf32>
    %c0_6 = arith.constant 0 : index
    %c0_7 = arith.constant 0 : index
    %52 = vector.load %arg4[%c0_6, %c0_7] : memref<1x32xf32, #tpu.memory_space<vmem>>, vector<1x32xf32>
    %53 = vector.shape_cast %52 : vector<1x32xf32> to vector<1x1x32xf32>
    %54 = vector.broadcast %53 : vector<1x1x32xf32> to vector<16x8x32xf32>
    %55 = arith.addf %51, %54 : vector<16x8x32xf32>
    %cst_8 = arith.constant 0.000000e+00 : f32
    %56 = vector.broadcast %cst_8 : f32 to vector<16x8x32xf32>
    %57 = arith.cmpf ogt, %55, %56 : vector<16x8x32xf32>
    %cst_9 = arith.constant 2.000000e-01 : f32
    %58 = vector.broadcast %cst_9 : f32 to vector<16x8x32xf32>
    %59 = arith.mulf %58, %55 : vector<16x8x32xf32>
    %60 = arith.select %57, %55, %59 : vector<16x8x32xi1>, vector<16x8x32xf32>
    %61 = vector.shape_cast %60 : vector<16x8x32xf32> to vector<128x32xf32>
    %62 = arith.truncf %61 : vector<128x32xf32> to vector<128x32xbf16>
    %c0_10 = arith.constant 0 : index
    %c0_11 = arith.constant 0 : index
    %63 = vector.load %arg5[%c0_10, %c0_11] : memref<32x8xbf16, #tpu.memory_space<vmem>>, vector<32x8xbf16>
    %cst_12 = arith.constant dense<0.000000e+00> : vector<128x8xf32>
    %64 = tpu.matmul %62, %63, %cst_12 {dimension_numbers = #tpu.dot_dimension_numbers<[1], [0], [0], [1], [0, 0, 1, 1], [], []>} : vector<128x32xbf16>, vector<32x8xbf16>, vector<128x8xf32> -> vector<128x8xf32>
    %65 = vector.shape_cast %64 : vector<128x8xf32> to vector<16x8x8xf32>
    %66 = vector.extract_strided_slice %0 {offsets = [0, 0, 0], sizes = [16, 8, 1], strides = [1, 1, 1]} : vector<16x8x8xf32> to vector<16x8x1xf32>
    %67 = vector.extract_strided_slice %65 {offsets = [0, 0, 0], sizes = [16, 1, 8], strides = [1, 1, 1]} : vector<16x8x8xf32> to vector<16x1x8xf32>
    %68 = vector.broadcast %66 : vector<16x8x1xf32> to vector<16x8x8xf32>
    %69 = vector.broadcast %67 : vector<16x1x8xf32> to vector<16x8x8xf32>
    %70 = arith.mulf %68, %69 : vector<16x8x8xf32>
    %71 = vector.extract_strided_slice %0 {offsets = [0, 0, 1], sizes = [16, 8, 1], strides = [1, 1, 1]} : vector<16x8x8xf32> to vector<16x8x1xf32>
    %72 = vector.extract_strided_slice %65 {offsets = [0, 1, 0], sizes = [16, 1, 8], strides = [1, 1, 1]} : vector<16x8x8xf32> to vector<16x1x8xf32>
    %73 = vector.broadcast %71 : vector<16x8x1xf32> to vector<16x8x8xf32>
    %74 = vector.broadcast %72 : vector<16x1x8xf32> to vector<16x8x8xf32>
    %75 = arith.mulf %73, %74 : vector<16x8x8xf32>
    %76 = arith.addf %70, %75 : vector<16x8x8xf32>
    %77 = vector.extract_strided_slice %0 {offsets = [0, 0, 2], sizes = [16, 8, 1], strides = [1, 1, 1]} : vector<16x8x8xf32> to vector<16x8x1xf32>
    %78 = vector.extract_strided_slice %65 {offsets = [0, 2, 0], sizes = [16, 1, 8], strides = [1, 1, 1]} : vector<16x8x8xf32> to vector<16x1x8xf32>
    %79 = vector.broadcast %77 : vector<16x8x1xf32> to vector<16x8x8xf32>
    %80 = vector.broadcast %78 : vector<16x1x8xf32> to vector<16x8x8xf32>
    %81 = arith.mulf %79, %80 : vector<16x8x8xf32>
    %82 = arith.addf %76, %81 : vector<16x8x8xf32>
    %83 = vector.extract_strided_slice %0 {offsets = [0, 0, 3], sizes = [16, 8, 1], strides = [1, 1, 1]} : vector<16x8x8xf32> to vector<16x8x1xf32>
    %84 = vector.extract_strided_slice %65 {offsets = [0, 3, 0], sizes = [16, 1, 8], strides = [1, 1, 1]} : vector<16x8x8xf32> to vector<16x1x8xf32>
    %85 = vector.broadcast %83 : vector<16x8x1xf32> to vector<16x8x8xf32>
    %86 = vector.broadcast %84 : vector<16x1x8xf32> to vector<16x8x8xf32>
    %87 = arith.mulf %85, %86 : vector<16x8x8xf32>
    %88 = arith.addf %82, %87 : vector<16x8x8xf32>
    %89 = vector.extract_strided_slice %0 {offsets = [0, 0, 4], sizes = [16, 8, 1], strides = [1, 1, 1]} : vector<16x8x8xf32> to vector<16x8x1xf32>
    %90 = vector.extract_strided_slice %65 {offsets = [0, 4, 0], sizes = [16, 1, 8], strides = [1, 1, 1]} : vector<16x8x8xf32> to vector<16x1x8xf32>
    %91 = vector.broadcast %89 : vector<16x8x1xf32> to vector<16x8x8xf32>
    %92 = vector.broadcast %90 : vector<16x1x8xf32> to vector<16x8x8xf32>
    %93 = arith.mulf %91, %92 : vector<16x8x8xf32>
    %94 = arith.addf %88, %93 : vector<16x8x8xf32>
    %95 = vector.extract_strided_slice %0 {offsets = [0, 0, 5], sizes = [16, 8, 1], strides = [1, 1, 1]} : vector<16x8x8xf32> to vector<16x8x1xf32>
    %96 = vector.extract_strided_slice %65 {offsets = [0, 5, 0], sizes = [16, 1, 8], strides = [1, 1, 1]} : vector<16x8x8xf32> to vector<16x1x8xf32>
    %97 = vector.broadcast %95 : vector<16x8x1xf32> to vector<16x8x8xf32>
    %98 = vector.broadcast %96 : vector<16x1x8xf32> to vector<16x8x8xf32>
    %99 = arith.mulf %97, %98 : vector<16x8x8xf32>
    %100 = arith.addf %94, %99 : vector<16x8x8xf32>
    %101 = vector.extract_strided_slice %0 {offsets = [0, 0, 6], sizes = [16, 8, 1], strides = [1, 1, 1]} : vector<16x8x8xf32> to vector<16x8x1xf32>
    %102 = vector.extract_strided_slice %65 {offsets = [0, 6, 0], sizes = [16, 1, 8], strides = [1, 1, 1]} : vector<16x8x8xf32> to vector<16x1x8xf32>
    %103 = vector.broadcast %101 : vector<16x8x1xf32> to vector<16x8x8xf32>
    %104 = vector.broadcast %102 : vector<16x1x8xf32> to vector<16x8x8xf32>
    %105 = arith.mulf %103, %104 : vector<16x8x8xf32>
    %106 = arith.addf %100, %105 : vector<16x8x8xf32>
    %107 = vector.extract_strided_slice %0 {offsets = [0, 0, 7], sizes = [16, 8, 1], strides = [1, 1, 1]} : vector<16x8x8xf32> to vector<16x8x1xf32>
    %108 = vector.extract_strided_slice %65 {offsets = [0, 7, 0], sizes = [16, 1, 8], strides = [1, 1, 1]} : vector<16x8x8xf32> to vector<16x1x8xf32>
    %109 = vector.broadcast %107 : vector<16x8x1xf32> to vector<16x8x8xf32>
    %110 = vector.broadcast %108 : vector<16x1x8xf32> to vector<16x8x8xf32>
    %111 = arith.mulf %109, %110 : vector<16x8x8xf32>
    %112 = arith.addf %106, %111 : vector<16x8x8xf32>
    %c0_13 = arith.constant 0 : index
    %c0_14 = arith.constant 0 : index
    %113 = vector.load %arg6[%c0_13, %c0_14] : memref<1x8xf32, #tpu.memory_space<vmem>>, vector<1x8xf32>
    %114 = vector.shape_cast %113 : vector<1x8xf32> to vector<1x1x8xf32>
    %115 = vector.broadcast %114 : vector<1x1x8xf32> to vector<16x8x8xf32>
    %116 = arith.addf %112, %115 : vector<16x8x8xf32>
    %cst_15 = arith.constant 0.000000e+00 : f32
    %117 = vector.broadcast %cst_15 : f32 to vector<16x8x8xf32>
    %118 = arith.cmpf ogt, %116, %117 : vector<16x8x8xf32>
    %cst_16 = arith.constant 2.000000e-01 : f32
    %119 = vector.broadcast %cst_16 : f32 to vector<16x8x8xf32>
    %120 = arith.mulf %119, %116 : vector<16x8x8xf32>
    %121 = arith.select %118, %116, %120 : vector<16x8x8xi1>, vector<16x8x8xf32>
    %cst_17 = arith.constant dense<0.000000e+00> : vector<16x8xf32>
    %122 = vector.multi_reduction <add>, %121, %cst_17 [1] : vector<16x8x8xf32> to vector<16x8xf32>
    %cst_18 = arith.constant 8.000000e+00 : f32
    %123 = vector.broadcast %cst_18 : f32 to vector<16x8xf32>
    %124 = arith.divf %122, %123 : vector<16x8xf32>
    %c0_19 = arith.constant 0 : index
    %c0_20 = arith.constant 0 : index
    %125 = vector.load %arg7[%c0_19, %c0_20] : memref<8x8xf32, #tpu.memory_space<vmem>>, vector<8x8xf32>
    %cst_21 = arith.constant dense<0.000000e+00> : vector<16x8xf32>
    %126 = tpu.matmul %124, %125, %cst_21 {dimension_numbers = #tpu.dot_dimension_numbers<[1], [0], [0], [1], [0, 0, 1, 1], [], []>} : vector<16x8xf32>, vector<8x8xf32>, vector<16x8xf32> -> vector<16x8xf32>
    %c0_22 = arith.constant 0 : index
    %c0_23 = arith.constant 0 : index
    %127 = vector.load %arg8[%c0_22, %c0_23] : memref<1x8xf32, #tpu.memory_space<vmem>>, vector<1x8xf32>
    %128 = vector.broadcast %127 : vector<1x8xf32> to vector<16x8xf32>
    %129 = arith.addf %126, %128 : vector<16x8xf32>
    %cst_24 = arith.constant 0.000000e+00 : f32
    %130 = vector.broadcast %cst_24 : f32 to vector<16x8xf32>
    %131 = arith.cmpf ogt, %129, %130 : vector<16x8xf32>
    %cst_25 = arith.constant 2.000000e-01 : f32
    %132 = vector.broadcast %cst_25 : f32 to vector<16x8xf32>
    %133 = arith.mulf %132, %129 : vector<16x8xf32>
    %134 = arith.select %131, %129, %133 : vector<16x8xi1>, vector<16x8xf32>
    %c0_26 = arith.constant 0 : index
    %c0_27 = arith.constant 0 : index
    %135 = vector.load %arg9[%c0_26, %c0_27] : memref<8x128xf32, #tpu.memory_space<vmem>>, vector<8x128xf32>
    %cst_28 = arith.constant dense<0.000000e+00> : vector<16x128xf32>
    %136 = tpu.matmul %134, %135, %cst_28 {dimension_numbers = #tpu.dot_dimension_numbers<[1], [0], [0], [1], [0, 0, 1, 1], [], []>} : vector<16x8xf32>, vector<8x128xf32>, vector<16x128xf32> -> vector<16x128xf32>
    %c0_29 = arith.constant 0 : index
    %c0_30 = arith.constant 0 : index
    %137 = vector.load %arg10[%c0_29, %c0_30] : memref<1x128xf32, #tpu.memory_space<vmem>>, vector<1x128xf32>
    %138 = vector.broadcast %137 : vector<1x128xf32> to vector<16x128xf32>
    %139 = arith.addf %136, %138 : vector<16x128xf32>
    %140 = arith.truncf %139 : vector<16x128xf32> to vector<16x128xbf16>
    %c0_31 = arith.constant 0 : index
    %c0_32 = arith.constant 0 : index
    %141 = vector.load %arg11[%c0_31, %c0_32] : memref<16x128xbf16, #tpu.memory_space<vmem>>, vector<16x128xbf16>
    tpu.vector_store %arg11[%c0_31, %c0_32], %140 {strides = array<i32>} : memref<16x128xbf16, #tpu.memory_space<vmem>>, vector<16x128xbf16>,
    return
  }
  func.func @transform_0(%arg0: i32) -> (i32, i32, i32) {
    %c0_i32 = arith.constant 0 : i32
    %c0_i32_0 = arith.constant 0 : i32
    %c0_i32_1 = arith.constant 0 : i32
    return %arg0, %c0_i32, %c0_i32_0 : i32, i32, i32
  }
  func.func @transform_1(%arg0: i32) -> (i32, i32) {
    %c0_i32 = arith.constant 0 : i32
    %c0_i32_0 = arith.constant 0 : i32
    return %arg0, %c0_i32 : i32, i32
  }
  func.func @transform_2(%arg0: i32) -> (i32, i32) {
    %c0_i32 = arith.constant 0 : i32
    %c0_i32_0 = arith.constant 0 : i32
    %c0_i32_1 = arith.constant 0 : i32
    return %c0_i32, %c0_i32_0 : i32, i32
  }
  func.func @transform_3(%arg0: i32) -> (i32, i32) {
    %c0_i32 = arith.constant 0 : i32
    %c0_i32_0 = arith.constant 0 : i32
    %c0_i32_1 = arith.constant 0 : i32
    return %c0_i32, %c0_i32_0 : i32, i32
  }
  func.func @transform_4(%arg0: i32) -> (i32, i32) {
    %c0_i32 = arith.constant 0 : i32
    %c0_i32_0 = arith.constant 0 : i32
    %c0_i32_1 = arith.constant 0 : i32
    return %c0_i32, %c0_i32_0 : i32, i32
  }
  func.func @transform_5(%arg0: i32) -> (i32, i32) {
    %c0_i32 = arith.constant 0 : i32
    %c0_i32_0 = arith.constant 0 : i32
    %c0_i32_1 = arith.constant 0 : i32
    return %c0_i32, %c0_i32_0 : i32, i32
  }
  func.func @transform_6(%arg0: i32) -> (i32, i32) {
    %c0_i32 = arith.constant 0 : i32
    %c0_i32_0 = arith.constant 0 : i32
    %c0_i32_1 = arith.constant 0 : i32
    return %c0_i32, %c0_i32_0 : i32, i32
  }
  func.func @transform_7(%arg0: i32) -> (i32, i32) {
    %c0_i32 = arith.constant 0 : i32
    %c0_i32_0 = arith.constant 0 : i32
    %c0_i32_1 = arith.constant 0 : i32
    return %c0_i32, %c0_i32_0 : i32, i32
  }
  func.func @transform_8(%arg0: i32) -> (i32, i32) {
    %c0_i32 = arith.constant 0 : i32
    %c0_i32_0 = arith.constant 0 : i32
    %c0_i32_1 = arith.constant 0 : i32
    return %c0_i32, %c0_i32_0 : i32, i32
  }
  func.func @transform_9(%arg0: i32) -> (i32, i32) {
    %c0_i32 = arith.constant 0 : i32
    %c0_i32_0 = arith.constant 0 : i32
    %c0_i32_1 = arith.constant 0 : i32
    return %c0_i32, %c0_i32_0 : i32, i32
  }
  func.func @transform_10(%arg0: i32) -> (i32, i32) {
    %c0_i32 = arith.constant 0 : i32
    %c0_i32_0 = arith.constant 0 : i32
    return %arg0, %c0_i32 : i32, i32
  }
}

</mosaic_0001>

<llo_original>
// kernel: tpu_custom_call.1
$region0: #{tpu_custom_call.1}
  #allocation0 [shape = 'u32[]', space=smem, size = 0x4, offset = 0x4, fixed_abs, tag = 'smem constant byte address 0x4 - core index']
  #allocation1 [shape = 'u32[144,128]{1,0:T(1,128)}', space=vmem, size = 0x12000, scoped, tag = 'internal scratch']
  %s0 = inlined_call_operand.vmem [shape: f32[16,8,8], index: 0, kind: input, shape index: {}]
  %s1 = inlined_call_operand.vmem [shape: bf16[128,384], index: 1, kind: input, shape index: {}]
  %s2 = inlined_call_operand.vmem [shape: bf16[384,32], index: 2, kind: input, shape index: {}]
  %s3 = inlined_call_operand.vmem [shape: f32[1,32], index: 3, kind: input, shape index: {}]
  %s4 = inlined_call_operand.vmem [shape: bf16[32,8], index: 4, kind: input, shape index: {}]
  %s5 = inlined_call_operand.vmem [shape: f32[1,8], index: 5, kind: input, shape index: {}]
  %s6 = inlined_call_operand.vmem [shape: f32[8,8], index: 6, kind: input, shape index: {}]
  %s7 = inlined_call_operand.vmem [shape: f32[1,8], index: 7, kind: input, shape index: {}]
  %s8 = inlined_call_operand.vmem [shape: f32[8,128], index: 8, kind: input, shape index: {}]
  %s9 = inlined_call_operand.vmem [shape: f32[1,128], index: 9, kind: input, shape index: {}]
  %s10 = inlined_call_operand.hbm [shape: bf16[16,128], index: 10, kind: output, shape index: {}]
  %s11 = sld [smem:[#allocation0]]
  $region50: #{tpu_custom_call.1} parent=0
    _
  %s13 = ssub.s32 1, %s11
  %s14 = scalar_select 0, %s13, %s11
  $region1: #{tpu_custom_call.1} parent=0
    #allocation2 [shape = 'u8[4096]{0}', space=vmem, size = 0x1000, scoped, tag = 'output window, operand 0, single buffered']
    #allocation3 [shape = 's32[1]{0}', space=sflag, size = 0x4, scoped, tag = 'scoped memory for tpu_custom_call.1']
    %15 = vsyncpa [#allocation3], 0
    // Predicated region
    $region2: #{tpu_custom_call.1} parent=1 // pred_check
      _
    $region3: #{tpu_custom_call.1} parent=1 // pred_check_branch
      %17 = sbr.rel (0) target = $region5
    $region4: #{tpu_custom_call.1} parent=1 // pred_region
      _
    $region5: #{tpu_custom_call.1} parent=1 // pred_fallthru
      _
    // Predicated region
    $region6: #{tpu_custom_call.1} parent=1 // pred_check
      _
    $region7: #{tpu_custom_call.1} parent=1 // pred_check_branch
      %19 = sbr.rel (0) target = $region9
    $region8: #{tpu_custom_call.1} parent=1 // pred_region
      _
    $region9: #{tpu_custom_call.1} parent=1 // pred_fallthru
      _
    // Predicated region
    $region10: #{tpu_custom_call.1} parent=1 // pred_check
      _
    $region11: #{tpu_custom_call.1} parent=1 // pred_check_branch
      %21 = sbr.rel (0) target = $region13
    $region12: #{tpu_custom_call.1} parent=1 // pred_region
      _
    $region13: #{tpu_custom_call.1} parent=1 // pred_fallthru
      _
    // Predicated region
    $region14: #{tpu_custom_call.1} parent=1 // pred_check
      _
    $region15: #{tpu_custom_call.1} parent=1 // pred_check_branch
      %23 = sbr.rel (0) target = $region17
    $region16: #{tpu_custom_call.1} parent=1 // pred_region
      _
    $region17: #{tpu_custom_call.1} parent=1 // pred_fallthru
      _
    // Predicated region
    $region18: #{tpu_custom_call.1} parent=1 // pred_check
      _
    $region19: #{tpu_custom_call.1} parent=1 // pred_check_branch
      %25 = sbr.rel (0) target = $region21
    $region20: #{tpu_custom_call.1} parent=1 // pred_region
      _
    $region21: #{tpu_custom_call.1} parent=1 // pred_fallthru
      _
    // Predicated region
    $region22: #{tpu_custom_call.1} parent=1 // pred_check
      _
    $region23: #{tpu_custom_call.1} parent=1 // pred_check_branch
      %27 = sbr.rel (0) target = $region25
    $region24: #{tpu_custom_call.1} parent=1 // pred_region
      _
    $region25: #{tpu_custom_call.1} parent=1 // pred_fallthru
      _
    // Predicated region
    $region26: #{tpu_custom_call.1} parent=1 // pred_check
      _
    $region27: #{tpu_custom_call.1} parent=1 // pred_check_branch
      %29 = sbr.rel (0) target = $region29
    $region28: #{tpu_custom_call.1} parent=1 // pred_region
      _
    $region29: #{tpu_custom_call.1} parent=1 // pred_fallthru
      _
    // Predicated region
    $region30: #{tpu_custom_call.1} parent=1 // pred_check
      _
    $region31: #{tpu_custom_call.1} parent=1 // pred_check_branch
      %31 = sbr.rel (0) target = $region33
    $region32: #{tpu_custom_call.1} parent=1 // pred_region
      _
    $region33: #{tpu_custom_call.1} parent=1 // pred_fallthru
      _
    // Predicated region
    $region34: #{tpu_custom_call.1} parent=1 // pred_check
      _
    $region35: #{tpu_custom_call.1} parent=1 // pred_check_branch
      %33 = sbr.rel (0) target = $region37
    $region36: #{tpu_custom_call.1} parent=1 // pred_region
      _
    $region37: #{tpu_custom_call.1} parent=1 // pred_fallthru
      _
    // Predicated region
    $region38: #{tpu_custom_call.1} parent=1 // pred_check
      _
    $region39: #{tpu_custom_call.1} parent=1 // pred_check_branch
      %35 = sbr.rel (0) target = $region41
    $region40: #{tpu_custom_call.1} parent=1 // pred_region
      _
    $region41: #{tpu_custom_call.1} parent=1 // pred_fallthru
      _
    %v37 = vld [vmem:[%s0] sm:$0xff]
    %v38 = vld [vmem:[%s0 + $0x8] sm:$0xff]
    %v39 = vld [vmem:[%s0 + $0x10] sm:$0xff]
    %v40 = vld [vmem:[%s0 + $0x18] sm:$0xff]
    %v41 = vld [vmem:[%s0 + $0x20] sm:$0xff]
    %v42 = vld [vmem:[%s0 + $0x28] sm:$0xff]
    %v43 = vld [vmem:[%s0 + $0x30] sm:$0xff]
    %v44 = vld [vmem:[%s0 + $0x38] sm:$0xff]
    %v45 = vld [vmem:[%s0 + $0x40] sm:$0xff]
    %v46 = vld [vmem:[%s0 + $0x48] sm:$0xff]
    %v47 = vld [vmem:[%s0 + $0x50] sm:$0xff]
    %v48 = vld [vmem:[%s0 + $0x58] sm:$0xff]
    %v49 = vld [vmem:[%s0 + $0x60] sm:$0xff]
    %v50 = vld [vmem:[%s0 + $0x68] sm:$0xff]
    %v51 = vld [vmem:[%s0 + $0x70] sm:$0xff]
    %v52 = vld [vmem:[%s0 + $0x78] sm:$0xff]
    %v53 = vld [vmem:[%s1] sm:$0xff]
    %v54 = vld [vmem:[%s1 + $0x8] sm:$0xf]
    %v55 = vld [vmem:[%s1 + $0xc] sm:$0xff]
    %v56 = vld [vmem:[%s1 + $0x14] sm:$0xf]
    %v57 = vld [vmem:[%s1 + $0x18] sm:$0xff]
    %v58 = vld [vmem:[%s1 + $0x20] sm:$0xf]
    %v59 = vld [vmem:[%s1 + $0x24] sm:$0xff]
    %v60 = vld [vmem:[%s1 + $0x2c] sm:$0xf]
    %v61 = vld [vmem:[%s1 + $0x30] sm:$0xff]
    %v62 = vld [vmem:[%s1 + $0x38] sm:$0xf]
    %v63 = vld [vmem:[%s1 + $0x3c] sm:$0xff]
    %v64 = vld [vmem:[%s1 + $0x44] sm:$0xf]
    %v65 = vld [vmem:[%s1 + $0x48] sm:$0xff]
    %v66 = vld [vmem:[%s1 + $0x50] sm:$0xf]
    %v67 = vld [vmem:[%s1 + $0x54] sm:$0xff]
    %v68 = vld [vmem:[%s1 + $0x5c] sm:$0xf]
    %v69 = vld [vmem:[%s1 + $0x60] sm:$0xff]
    %v70 = vld [vmem:[%s1 + $0x68] sm:$0xf]
    %v71 = vld [vmem:[%s1 + $0x6c] sm:$0xff]
    %v72 = vld [vmem:[%s1 + $0x74] sm:$0xf]
    %v73 = vld [vmem:[%s1 + $0x78] sm:$0xff]
    %v74 = vld [vmem:[%s1 + $0x80] sm:$0xf]
    %v75 = vld [vmem:[%s1 + $0x84] sm:$0xff]
    %v76 = vld [vmem:[%s1 + $0x8c] sm:$0xf]
    %v77 = vld [vmem:[%s1 + $0x90] sm:$0xff]
    %v78 = vld [vmem:[%s1 + $0x98] sm:$0xf]
    %v79 = vld [vmem:[%s1 + $0x9c] sm:$0xff]
    %v80 = vld [vmem:[%s1 + $0xa4] sm:$0xf]
    %v81 = vld [vmem:[%s1 + $0xa8] sm:$0xff]
    %v82 = vld [vmem:[%s1 + $0xb0] sm:$0xf]
    %v83 = vld [vmem:[%s1 + $0xb4] sm:$0xff]
    %v84 = vld [vmem:[%s1 + $0xbc] sm:$0xf]
    %v85 = vld [vmem:[%s2] sm:$0xf]
    %v86 = vld [vmem:[%s2 + $0x4] sm:$0xf]
    %v87 = vld [vmem:[%s2 + $0x8] sm:$0xf]
    %v88 = vld [vmem:[%s2 + $0xc] sm:$0xf]
    %v89 = vld [vmem:[%s2 + $0x10] sm:$0xf]
    %v90 = vld [vmem:[%s2 + $0x14] sm:$0xf]
    %v91 = vld [vmem:[%s2 + $0x18] sm:$0xf]
    %v92 = vld [vmem:[%s2 + $0x1c] sm:$0xf]
    %v93 = vld [vmem:[%s2 + $0x20] sm:$0xf]
    %v94 = vld [vmem:[%s2 + $0x24] sm:$0xf]
    %v95 = vld [vmem:[%s2 + $0x28] sm:$0xf]
    %v96 = vld [vmem:[%s2 + $0x2c] sm:$0xf]
    %v97 = vld [vmem:[%s2 + $0x30] sm:$0xf]
    %v98 = vld [vmem:[%s2 + $0x34] sm:$0xf]
    %v99 = vld [vmem:[%s2 + $0x38] sm:$0xf]
    %v100 = vld [vmem:[%s2 + $0x3c] sm:$0xf]
    %v101 = vld [vmem:[%s2 + $0x40] sm:$0xf]
    %v102 = vld [vmem:[%s2 + $0x44] sm:$0xf]
    %v103 = vld [vmem:[%s2 + $0x48] sm:$0xf]
    %v104 = vld [vmem:[%s2 + $0x4c] sm:$0xf]
    %v105 = vld [vmem:[%s2 + $0x50] sm:$0xf]
    %v106 = vld [vmem:[%s2 + $0x54] sm:$0xf]
    %v107 = vld [vmem:[%s2 + $0x58] sm:$0xf]
    %v108 = vld [vmem:[%s2 + $0x5c] sm:$0xf]
    %v109 = vld [vmem:[%s2 + $0x60] sm:$0xf]
    %v110 = vld [vmem:[%s2 + $0x64] sm:$0xf]
    %v111 = vld [vmem:[%s2 + $0x68] sm:$0xf]
    %v112 = vld [vmem:[%s2 + $0x6c] sm:$0xf]
    %v113 = vld [vmem:[%s2 + $0x70] sm:$0xf]
    %v114 = vld [vmem:[%s2 + $0x74] sm:$0xf]
    %v115 = vld [vmem:[%s2 + $0x78] sm:$0xf]
    %v116 = vld [vmem:[%s2 + $0x7c] sm:$0xf]
    %v117 = vld [vmem:[%s2 + $0x80] sm:$0xf]
    %v118 = vld [vmem:[%s2 + $0x84] sm:$0xf]
    %v119 = vld [vmem:[%s2 + $0x88] sm:$0xf]
    %v120 = vld [vmem:[%s2 + $0x8c] sm:$0xf]
    %v121 = vld [vmem:[%s2 + $0x90] sm:$0xf]
    %v122 = vld [vmem:[%s2 + $0x94] sm:$0xf]
    %v123 = vld [vmem:[%s2 + $0x98] sm:$0xf]
    %v124 = vld [vmem:[%s2 + $0x9c] sm:$0xf]
    %v125 = vld [vmem:[%s2 + $0xa0] sm:$0xf]
    %v126 = vld [vmem:[%s2 + $0xa4] sm:$0xf]
    %v127 = vld [vmem:[%s2 + $0xa8] sm:$0xf]
    %v128 = vld [vmem:[%s2 + $0xac] sm:$0xf]
    %v129 = vld [vmem:[%s2 + $0xb0] sm:$0xf]
    %v130 = vld [vmem:[%s2 + $0xb4] sm:$0xf]
    %v131 = vld [vmem:[%s2 + $0xb8] sm:$0xf]
    %v132 = vld [vmem:[%s2 + $0xbc] sm:$0xf]
    %v165 = vunpack.c.l.b16 %v53
    %v166 = vunpack.c.h.b16 %v53
    %v167 = vunpack.c.l.b16 %v54
    %v168 = vunpack.c.l.b16 %v55
    %v169 = vunpack.c.h.b16 %v55
    %v170 = vunpack.c.l.b16 %v56
    %v171 = vunpack.c.l.b16 %v57
    %v172 = vunpack.c.h.b16 %v57
    %v173 = vunpack.c.l.b16 %v58
    %v174 = vunpack.c.l.b16 %v59
    %v175 = vunpack.c.h.b16 %v59
    %v176 = vunpack.c.l.b16 %v60
    %v177 = vunpack.c.l.b16 %v61
    %v178 = vunpack.c.h.b16 %v61
    %v179 = vunpack.c.l.b16 %v62
    %v180 = vunpack.c.l.b16 %v63
    %v181 = vunpack.c.h.b16 %v63
    %v182 = vunpack.c.l.b16 %v64
    %v183 = vunpack.c.l.b16 %v65
    %v184 = vunpack.c.h.b16 %v65
    %v185 = vunpack.c.l.b16 %v66
    %v186 = vunpack.c.l.b16 %v67
    %v187 = vunpack.c.h.b16 %v67
    %v188 = vunpack.c.l.b16 %v68
    %v189 = vunpack.c.l.b16 %v69
    %v190 = vunpack.c.h.b16 %v69
    %v191 = vunpack.c.l.b16 %v70
    %v192 = vunpack.c.l.b16 %v71
    %v193 = vunpack.c.h.b16 %v71
    %v194 = vunpack.c.l.b16 %v72
    %v195 = vunpack.c.l.b16 %v73
    %v196 = vunpack.c.h.b16 %v73
    %v197 = vunpack.c.l.b16 %v74
    %v198 = vunpack.c.l.b16 %v75
    %v199 = vunpack.c.h.b16 %v75
    %v200 = vunpack.c.l.b16 %v76
    %v201 = vunpack.c.l.b16 %v77
    %v202 = vunpack.c.h.b16 %v77
    %v203 = vunpack.c.l.b16 %v78
    %v204 = vunpack.c.l.b16 %v79
    %v205 = vunpack.c.h.b16 %v79
    %v206 = vunpack.c.l.b16 %v80
    %v207 = vunpack.c.l.b16 %v81
    %v208 = vunpack.c.h.b16 %v81
    %v209 = vunpack.c.l.b16 %v82
    %v210 = vunpack.c.l.b16 %v83
    %v211 = vunpack.c.h.b16 %v83
    %v212 = vunpack.c.l.b16 %v84
    %v213 = vpack.c.b16 %v168, %v165
    %v214 = vpack.c.b16 %v169, %v166
    %v215 = vpack.c.b16 %v170, %v167
    %v216 = vpack.c.b16 %v174, %v171
    %v217 = vpack.c.b16 %v175, %v172
    %v218 = vpack.c.b16 %v176, %v173
    %v219 = vpack.c.b16 %v180, %v177
    %v220 = vpack.c.b16 %v181, %v178
    %v221 = vpack.c.b16 %v182, %v179
    %v222 = vpack.c.b16 %v186, %v183
    %v223 = vpack.c.b16 %v187, %v184
    %v224 = vpack.c.b16 %v188, %v185
    %v225 = vpack.c.b16 %v192, %v189
    %v226 = vpack.c.b16 %v193, %v190
    %v227 = vpack.c.b16 %v194, %v191
    %v228 = vpack.c.b16 %v198, %v195
    %v229 = vpack.c.b16 %v199, %v196
    %v230 = vpack.c.b16 %v200, %v197
    %v231 = vpack.c.b16 %v204, %v201
    %v232 = vpack.c.b16 %v205, %v202
    %v233 = vpack.c.b16 %v206, %v203
    %v234 = vpack.c.b16 %v210, %v207
    %v235 = vpack.c.b16 %v211, %v208
    %v236 = vpack.c.b16 %v212, %v209
    %v309 = vunpack.c.l.b16 %v85
    %v310 = vunpack.c.l.b16 %v86
    %v311 = vunpack.c.l.b16 %v87
    %v312 = vunpack.c.l.b16 %v88
    %v313 = vunpack.c.l.b16 %v89
    %v314 = vunpack.c.l.b16 %v90
    %v315 = vunpack.c.l.b16 %v91
    %v316 = vunpack.c.l.b16 %v92
    %v317 = vunpack.c.l.b16 %v93
    %v318 = vunpack.c.l.b16 %v94
    %v319 = vunpack.c.l.b16 %v95
    %v320 = vunpack.c.l.b16 %v96
    %v321 = vunpack.c.l.b16 %v97
    %v322 = vunpack.c.l.b16 %v98
    %v323 = vunpack.c.l.b16 %v99
    %v324 = vunpack.c.l.b16 %v100
    %v325 = vunpack.c.l.b16 %v101
    %v326 = vunpack.c.l.b16 %v102
    %v327 = vunpack.c.l.b16 %v103
    %v328 = vunpack.c.l.b16 %v104
    %v329 = vunpack.c.l.b16 %v105
    %v330 = vunpack.c.l.b16 %v106
    %v331 = vunpack.c.l.b16 %v107
    %v332 = vunpack.c.l.b16 %v108
    %v333 = vunpack.c.l.b16 %v109
    %v334 = vunpack.c.l.b16 %v110
    %v335 = vunpack.c.l.b16 %v111
    %v336 = vunpack.c.l.b16 %v112
    %v337 = vunpack.c.l.b16 %v113
    %v338 = vunpack.c.l.b16 %v114
    %v339 = vunpack.c.l.b16 %v115
    %v340 = vunpack.c.l.b16 %v116
    %v341 = vunpack.c.l.b16 %v117
    %v342 = vunpack.c.l.b16 %v118
    %v343 = vunpack.c.l.b16 %v119
    %v344 = vunpack.c.l.b16 %v120
    %v345 = vunpack.c.l.b16 %v121
    %v346 = vunpack.c.l.b16 %v122
    %v347 = vunpack.c.l.b16 %v123
    %v348 = vunpack.c.l.b16 %v124
    %v349 = vunpack.c.l.b16 %v125
    %v350 = vunpack.c.l.b16 %v126
    %v351 = vunpack.c.l.b16 %v127
    %v352 = vunpack.c.l.b16 %v128
    %v353 = vunpack.c.l.b16 %v129
    %v354 = vunpack.c.l.b16 %v130
    %v355 = vunpack.c.l.b16 %v131
    %v356 = vunpack.c.l.b16 %v132
    %v357 = vpack.c.b16 %v310, %v309
    %v358 = vpack.c.b16 %v312, %v311
    %v359 = vpack.c.b16 %v314, %v313
    %v360 = vpack.c.b16 %v316, %v315
    %v361 = vpack.c.b16 %v318, %v317
    %v362 = vpack.c.b16 %v320, %v319
    %v363 = vpack.c.b16 %v322, %v321
    %v364 = vpack.c.b16 %v324, %v323
    %v365 = vpack.c.b16 %v326, %v325
    %v366 = vpack.c.b16 %v328, %v327
    %v367 = vpack.c.b16 %v330, %v329
    %v368 = vpack.c.b16 %v332, %v331
    %v369 = vpack.c.b16 %v334, %v333
    %v370 = vpack.c.b16 %v336, %v335
    %v371 = vpack.c.b16 %v338, %v337
    %v372 = vpack.c.b16 %v340, %v339
    %v373 = vpack.c.b16 %v342, %v341
    %v374 = vpack.c.b16 %v344, %v343
    %v375 = vpack.c.b16 %v346, %v345
    %v376 = vpack.c.b16 %v348, %v347
    %v377 = vpack.c.b16 %v350, %v349
    %v378 = vpack.c.b16 %v352, %v351
    %v379 = vpack.c.b16 %v354, %v353
    %v380 = vpack.c.b16 %v356, %v355
    %405 = vmatprep.subr.bf16.mxu0 0
    %406 = vmatpush1.bf16.msra.mxu0 %v357
    %407 = vmatprep.subr.bf16.mxu0 0
    %408 = vmatpush1.bf16.msra.mxu0 %v358
    %409 = vmatprep.subr.bf16.mxu0 0
    %410 = vmatpush1.bf16.msra.mxu0 %v359
    %411 = vmatprep.subr.bf16.mxu0 0
    %412 = vmatpush1.bf16.msra.mxu0 %v360
    %413 = vmatprep.subr.bf16.mxu0 0
    %414 = vmatpush1.bf16.msra.mxu0 %v361
    %415 = vmatprep.subr.bf16.mxu0 0
    %416 = vmatpush1.bf16.msra.mxu0 %v362
    %417 = vmatprep.subr.bf16.mxu0 0
    %418 = vmatpush1.bf16.msra.mxu0 %v363
    %419 = vmatprep.subr.bf16.mxu0 0
    %420 = vmatpush1.bf16.msra.mxu0 %v364
    %421 = vmatprep.subr.bf16.mxu0 0
    %422 = vmatpush1.bf16.msra.mxu0 %v365
    %423 = vmatprep.subr.bf16.mxu0 0
    %424 = vmatpush1.bf16.msra.mxu0 %v366
    %425 = vmatprep.subr.bf16.mxu0 0
    %426 = vmatpush1.bf16.msra.mxu0 %v367
    %427 = vmatprep.subr.bf16.mxu0 0
    %428 = vmatpush1.bf16.msra.mxu0 %v368
    %429 = vmatprep.subr.bf16.mxu0 0
    %430 = vmatpush1.bf16.msra.mxu0 %v369
    %431 = vmatprep.subr.bf16.mxu0 0
    %432 = vmatpush1.bf16.msra.mxu0 %v370
    %433 = vmatprep.subr.bf16.mxu0 0
    %434 = vmatpush1.bf16.msra.mxu0 %v371
    %435 = vmatprep.subr.bf16.mxu0 0
    %436 = vmatpush1.bf16.msra.mxu0 %v372
    %437 = vmatprep.mubr.bf16.mxu0 %v214
    %438 = vmatmul.mubr.bf16.gmra.mrb[0].mxu0 %v213
    %v439 = vpop.f32.mrb[0].mxu0
    %v440 = vadd.f32 0.0, %v439
    %v441 = vpop.f32.mrb[0].mxu0
    %v442 = vpop.f32.mrb[0].mxu0
    %v443 = vadd.f32 0.0, %v442
    %v444 = vpop.f32.mrb[0].mxu0
    %445 = vmatprep.mubr.bf16.mxu0 %v217
    %446 = vmatmul.mubr.bf16.gmra.mrb[0].mxu0 %v216
    %v447 = vpop.f32.mrb[0].mxu0
    %v448 = vadd.f32 0.0, %v447
    %v449 = vpop.f32.mrb[0].mxu0
    %v450 = vpop.f32.mrb[0].mxu0
    %v451 = vadd.f32 0.0, %v450
    %v452 = vpop.f32.mrb[0].mxu0
    %453 = vmatprep.mubr.bf16.mxu0 %v220
    %454 = vmatmul.mubr.bf16.gmra.mrb[0].mxu0 %v219
    %v455 = vpop.f32.mrb[0].mxu0
    %v456 = vadd.f32 0.0, %v455
    %v457 = vpop.f32.mrb[0].mxu0
    %v458 = vpop.f32.mrb[0].mxu0
    %v459 = vadd.f32 0.0, %v458
    %v460 = vpop.f32.mrb[0].mxu0
    %461 = vmatprep.mubr.bf16.mxu0 %v223
    %462 = vmatmul.mubr.bf16.gmra.mrb[0].mxu0 %v222
    %v463 = vpop.f32.mrb[0].mxu0
    %v464 = vadd.f32 0.0, %v463
    %v465 = vpop.f32.mrb[0].mxu0
    %v466 = vpop.f32.mrb[0].mxu0
    %v467 = vadd.f32 0.0, %v466
    %v468 = vpop.f32.mrb[0].mxu0
    %469 = vmatprep.mubr.bf16.mxu0 %v226
    %470 = vmatmul.mubr.bf16.gmra.mrb[0].mxu0 %v225
    %v471 = vpop.f32.mrb[0].mxu0
    %v472 = vadd.f32 0.0, %v471
    %v473 = vpop.f32.mrb[0].mxu0
    %v474 = vpop.f32.mrb[0].mxu0
    %v475 = vadd.f32 0.0, %v474
    %v476 = vpop.f32.mrb[0].mxu0
    %477 = vmatprep.mubr.bf16.mxu0 %v229
    %478 = vmatmul.mubr.bf16.gmra.mrb[0].mxu0 %v228
    %v479 = vpop.f32.mrb[0].mxu0
    %v480 = vadd.f32 0.0, %v479
    %v481 = vpop.f32.mrb[0].mxu0
    %v482 = vpop.f32.mrb[0].mxu0
    %v483 = vadd.f32 0.0, %v482
    %v484 = vpop.f32.mrb[0].mxu0
    %485 = vmatprep.mubr.bf16.mxu0 %v232
    %486 = vmatmul.mubr.bf16.gmra.mrb[0].mxu0 %v231
    %v487 = vpop.f32.mrb[0].mxu0
    %v488 = vadd.f32 0.0, %v487
    %v489 = vpop.f32.mrb[0].mxu0
    %v490 = vpop.f32.mrb[0].mxu0
    %v491 = vadd.f32 0.0, %v490
    %v492 = vpop.f32.mrb[0].mxu0
    %493 = vmatprep.mubr.bf16.mxu0 %v235
    %494 = vmatmul.mubr.bf16.gmra.mrb[0].mxu0 %v234
    %v495 = vpop.f32.mrb[0].mxu0
    %v496 = vadd.f32 0.0, %v495
    %v497 = vpop.f32.mrb[0].mxu0
    %v498 = vpop.f32.mrb[0].mxu0
    %v499 = vadd.f32 0.0, %v498
    %v500 = vpop.f32.mrb[0].mxu0
    %501 = vdwg.mxu0
    %502 = vmatprep.subr.bf16.mxu0 0
    %503 = vmatpush1.bf16.msra.mxu0 %v373
    %504 = vmatprep.subr.bf16.mxu0 0
    %505 = vmatpush1.bf16.msra.mxu0 %v374
    %506 = vmatprep.subr.bf16.mxu0 0
    %507 = vmatpush1.bf16.msra.mxu0 %v375
    %508 = vmatprep.subr.bf16.mxu0 0
    %509 = vmatpush1.bf16.msra.mxu0 %v376
    %510 = vmatprep.subr.bf16.mxu0 0
    %511 = vmatpush1.bf16.msra.mxu0 %v377
    %512 = vmatprep.subr.bf16.mxu0 0
    %513 = vmatpush1.bf16.msra.mxu0 %v378
    %514 = vmatprep.subr.bf16.mxu0 0
    %515 = vmatpush1.bf16.msra.mxu0 %v379
    %516 = vmatprep.subr.bf16.mxu0 0
    %517 = vmatpush1.bf16.msra.mxu0 %v380
    %518 = vmatprep.subr.bf16.mxu0 0
    %519 = vmatpush1.bf16.msra.mxu0 0
    %520 = vmatprep.subr.bf16.mxu0 0
    %521 = vmatpush1.bf16.msra.mxu0 0
    %522 = vmatprep.subr.bf16.mxu0 0
    %523 = vmatpush1.bf16.msra.mxu0 0
    %524 = vmatprep.subr.bf16.mxu0 0
    %525 = vmatpush1.bf16.msra.mxu0 0
    %526 = vmatprep.subr.bf16.mxu0 0
    %527 = vmatpush1.bf16.msra.mxu0 0
    %528 = vmatprep.subr.bf16.mxu0 0
    %529 = vmatpush1.bf16.msra.mxu0 0
    %530 = vmatprep.subr.bf16.mxu0 0
    %531 = vmatpush1.bf16.msra.mxu0 0
    %532 = vmatprep.subr.bf16.mxu0 0
    %533 = vmatpush1.bf16.msra.mxu0 0
    %534 = vmatprep.mubr.bf16.mxu0 0
    %535 = vmatmul.mubr.bf16.gmra.mrb[0].mxu0 %v215
    %v536 = vpop.f32.mrb[0].mxu0
    %v537 = vadd.f32 %v440, %v536
    %v538 = vpop.f32.mrb[0].mxu0
    %v539 = vpop.f32.mrb[0].mxu0
    %v540 = vadd.f32 %v443, %v539
    %v541 = vpop.f32.mrb[0].mxu0
    %542 = vmatprep.mubr.bf16.mxu0 0
    %543 = vmatmul.mubr.bf16.gmra.mrb[0].mxu0 %v218
    %v544 = vpop.f32.mrb[0].mxu0
    %v545 = vadd.f32 %v448, %v544
    %v546 = vpop.f32.mrb[0].mxu0
    %v547 = vpop.f32.mrb[0].mxu0
    %v548 = vadd.f32 %v451, %v547
    %v549 = vpop.f32.mrb[0].mxu0
    %550 = vmatprep.mubr.bf16.mxu0 0
    %551 = vmatmul.mubr.bf16.gmra.mrb[0].mxu0 %v221
    %v552 = vpop.f32.mrb[0].mxu0
    %v553 = vadd.f32 %v456, %v552
    %v554 = vpop.f32.mrb[0].mxu0
    %v555 = vpop.f32.mrb[0].mxu0
    %v556 = vadd.f32 %v459, %v555
    %v557 = vpop.f32.mrb[0].mxu0
    %558 = vmatprep.mubr.bf16.mxu0 0
    %559 = vmatmul.mubr.bf16.gmra.mrb[0].mxu0 %v224
    %v560 = vpop.f32.mrb[0].mxu0
    %v561 = vadd.f32 %v464, %v560
    %v562 = vpop.f32.mrb[0].mxu0
    %v563 = vpop.f32.mrb[0].mxu0
    %v564 = vadd.f32 %v467, %v563
    %v565 = vpop.f32.mrb[0].mxu0
    %566 = vmatprep.mubr.bf16.mxu0 0
    %567 = vmatmul.mubr.bf16.gmra.mrb[0].mxu0 %v227
    %v568 = vpop.f32.mrb[0].mxu0
    %v569 = vadd.f32 %v472, %v568
    %v570 = vpop.f32.mrb[0].mxu0
    %v571 = vpop.f32.mrb[0].mxu0
    %v572 = vadd.f32 %v475, %v571
    %v573 = vpop.f32.mrb[0].mxu0
    %574 = vmatprep.mubr.bf16.mxu0 0
    %575 = vmatmul.mubr.bf16.gmra.mrb[0].mxu0 %v230
    %v576 = vpop.f32.mrb[0].mxu0
    %v577 = vadd.f32 %v480, %v576
    %v578 = vpop.f32.mrb[0].mxu0
    %v579 = vpop.f32.mrb[0].mxu0
    %v580 = vadd.f32 %v483, %v579
    %v581 = vpop.f32.mrb[0].mxu0
    %582 = vmatprep.mubr.bf16.mxu0 0
    %583 = vmatmul.mubr.bf16.gmra.mrb[0].mxu0 %v233
    %v584 = vpop.f32.mrb[0].mxu0
    %v585 = vadd.f32 %v488, %v584
    %v586 = vpop.f32.mrb[0].mxu0
    %v587 = vpop.f32.mrb[0].mxu0
    %v588 = vadd.f32 %v491, %v587
    %v589 = vpop.f32.mrb[0].mxu0
    %590 = vmatprep.mubr.bf16.mxu0 0
    %591 = vmatmul.mubr.bf16.gmra.mrb[0].mxu0 %v236
    %v592 = vpop.f32.mrb[0].mxu0
    %v593 = vadd.f32 %v496, %v592
    %v594 = vpop.f32.mrb[0].mxu0
    %v595 = vpop.f32.mrb[0].mxu0
    %v596 = vadd.f32 %v499, %v595
    %v597 = vpop.f32.mrb[0].mxu0
    %598 = vdwg.mxu0
    %600 = vset.pattern.permute.xlu0 0
    %601 = vperm.xlu0 %600, %v37
    %v602 = vpop.permute.xlu0 %601
    %605 = vset.pattern.permute.xlu0 0
    %606 = vperm.xlu0 %605, %v38
    %v607 = vpop.permute.xlu0 %606
    %610 = vset.pattern.permute.xlu0 0
    %611 = vperm.xlu0 %610, %v39
    %v612 = vpop.permute.xlu0 %611
    %615 = vset.pattern.permute.xlu0 0
    %616 = vperm.xlu0 %615, %v40
    %v617 = vpop.permute.xlu0 %616
    %620 = vset.pattern.permute.xlu0 0
    %621 = vperm.xlu0 %620, %v41
    %v622 = vpop.permute.xlu0 %621
    %625 = vset.pattern.permute.xlu0 0
    %626 = vperm.xlu0 %625, %v42
    %v627 = vpop.permute.xlu0 %626
    %630 = vset.pattern.permute.xlu0 0
    %631 = vperm.xlu0 %630, %v43
    %v632 = vpop.permute.xlu0 %631
    %635 = vset.pattern.permute.xlu0 0
    %636 = vperm.xlu0 %635, %v44
    %v637 = vpop.permute.xlu0 %636
    %640 = vset.pattern.permute.xlu0 0
    %641 = vperm.xlu0 %640, %v45
    %v642 = vpop.permute.xlu0 %641
    %645 = vset.pattern.permute.xlu0 0
    %646 = vperm.xlu0 %645, %v46
    %v647 = vpop.permute.xlu0 %646
    %650 = vset.pattern.permute.xlu0 0
    %651 = vperm.xlu0 %650, %v47
    %v652 = vpop.permute.xlu0 %651
    %655 = vset.pattern.permute.xlu0 0
    %656 = vperm.xlu0 %655, %v48
    %v657 = vpop.permute.xlu0 %656
    %660 = vset.pattern.permute.xlu0 0
    %661 = vperm.xlu0 %660, %v49
    %v662 = vpop.permute.xlu0 %661
    %665 = vset.pattern.permute.xlu0 0
    %666 = vperm.xlu0 %665, %v50
    %v667 = vpop.permute.xlu0 %666
    %670 = vset.pattern.permute.xlu0 0
    %671 = vperm.xlu0 %670, %v51
    %v672 = vpop.permute.xlu0 %671
    %675 = vset.pattern.permute.xlu0 0
    %676 = vperm.xlu0 %675, %v52
    %v677 = vpop.permute.xlu0 %676
    %v679 = vlaneseq
    %v680 = vshrl.u32 %v679, 7
    %v681 = vsub.s32 0, %v680
    %v682 = vrot.slane %v537, %v681
    %v683 = vlaneseq
    %v684 = vshrl.u32 %v683, 7
    %v685 = vsub.s32 0, %v684
    %v686 = vrot.slane %v540, %v685
    %v687 = vlaneseq
    %v688 = vshrl.u32 %v687, 7
    %v689 = vsub.s32 0, %v688
    %v690 = vrot.slane %v545, %v689
    %v691 = vlaneseq
    %v692 = vshrl.u32 %v691, 7
    %v693 = vsub.s32 0, %v692
    %v694 = vrot.slane %v548, %v693
    %v695 = vlaneseq
    %v696 = vshrl.u32 %v695, 7
    %v697 = vsub.s32 0, %v696
    %v698 = vrot.slane %v553, %v697
    %v699 = vlaneseq
    %v700 = vshrl.u32 %v699, 7
    %v701 = vsub.s32 0, %v700
    %v702 = vrot.slane %v556, %v701
    %v703 = vlaneseq
    %v704 = vshrl.u32 %v703, 7
    %v705 = vsub.s32 0, %v704
    %v706 = vrot.slane %v561, %v705
    %v707 = vlaneseq
    %v708 = vshrl.u32 %v707, 7
    %v709 = vsub.s32 0, %v708
    %v710 = vrot.slane %v564, %v709
    %v711 = vlaneseq
    %v712 = vshrl.u32 %v711, 7
    %v713 = vsub.s32 0, %v712
    %v714 = vrot.slane %v569, %v713
    %v715 = vlaneseq
    %v716 = vshrl.u32 %v715, 7
    %v717 = vsub.s32 0, %v716
    %v718 = vrot.slane %v572, %v717
    %v719 = vlaneseq
    %v720 = vshrl.u32 %v719, 7
    %v721 = vsub.s32 0, %v720
    %v722 = vrot.slane %v577, %v721
    %v723 = vlaneseq
    %v724 = vshrl.u32 %v723, 7
    %v725 = vsub.s32 0, %v724
    %v726 = vrot.slane %v580, %v725
    %v727 = vlaneseq
    %v728 = vshrl.u32 %v727, 7
    %v729 = vsub.s32 0, %v728
    %v730 = vrot.slane %v585, %v729
    %v731 = vlaneseq
    %v732 = vshrl.u32 %v731, 7
    %v733 = vsub.s32 0, %v732
    %v734 = vrot.slane %v588, %v733
    %v735 = vlaneseq
    %v736 = vshrl.u32 %v735, 7
    %v737 = vsub.s32 0, %v736
    %v738 = vrot.slane %v593, %v737
    %v739 = vlaneseq
    %v740 = vshrl.u32 %v739, 7
    %v741 = vsub.s32 0, %v740
    %v742 = vrot.slane %v596, %v741
    %v743 = vmul.f32 %v602, %v682
    %v744 = vmul.f32 %v607, %v686
    %v745 = vmul.f32 %v612, %v690
    %v746 = vmul.f32 %v617, %v694
    %v747 = vmul.f32 %v622, %v698
    %v748 = vmul.f32 %v627, %v702
    %v749 = vmul.f32 %v632, %v706
    %v750 = vmul.f32 %v637, %v710
    %v751 = vmul.f32 %v642, %v714
    %v752 = vmul.f32 %v647, %v718
    %v753 = vmul.f32 %v652, %v722
    %v754 = vmul.f32 %v657, %v726
    %v755 = vmul.f32 %v662, %v730
    %v756 = vmul.f32 %v667, %v734
    %v757 = vmul.f32 %v672, %v738
    %v758 = vmul.f32 %v677, %v742
    %759 = vset.pattern.permute.xlu0 1
    %760 = vperm.xlu0 %759, %v37
    %v761 = vpop.permute.xlu0 %760
    %763 = vset.pattern.permute.xlu0 1
    %764 = vperm.xlu0 %763, %v38
    %v765 = vpop.permute.xlu0 %764
    %767 = vset.pattern.permute.xlu0 1
    %768 = vperm.xlu0 %767, %v39
    %v769 = vpop.permute.xlu0 %768
    %771 = vset.pattern.permute.xlu0 1
    %772 = vperm.xlu0 %771, %v40
    %v773 = vpop.permute.xlu0 %772
    %775 = vset.pattern.permute.xlu0 1
    %776 = vperm.xlu0 %775, %v41
    %v777 = vpop.permute.xlu0 %776
    %779 = vset.pattern.permute.xlu0 1
    %780 = vperm.xlu0 %779, %v42
    %v781 = vpop.permute.xlu0 %780
    %783 = vset.pattern.permute.xlu0 1
    %784 = vperm.xlu0 %783, %v43
    %v785 = vpop.permute.xlu0 %784
    %787 = vset.pattern.permute.xlu0 1
    %788 = vperm.xlu0 %787, %v44
    %v789 = vpop.permute.xlu0 %788
    %791 = vset.pattern.permute.xlu0 1
    %792 = vperm.xlu0 %791, %v45
    %v793 = vpop.permute.xlu0 %792
    %795 = vset.pattern.permute.xlu0 1
    %796 = vperm.xlu0 %795, %v46
    %v797 = vpop.permute.xlu0 %796
    %799 = vset.pattern.permute.xlu0 1
    %800 = vperm.xlu0 %799, %v47
    %v801 = vpop.permute.xlu0 %800
    %803 = vset.pattern.permute.xlu0 1
    %804 = vperm.xlu0 %803, %v48
    %v805 = vpop.permute.xlu0 %804
    %807 = vset.pattern.permute.xlu0 1
    %808 = vperm.xlu0 %807, %v49
    %v809 = vpop.permute.xlu0 %808
    %811 = vset.pattern.permute.xlu0 1
    %812 = vperm.xlu0 %811, %v50
    %v813 = vpop.permute.xlu0 %812
    %815 = vset.pattern.permute.xlu0 1
    %816 = vperm.xlu0 %815, %v51
    %v817 = vpop.permute.xlu0 %816
    %819 = vset.pattern.permute.xlu0 1
    %820 = vperm.xlu0 %819, %v52
    %v821 = vpop.permute.xlu0 %820
    %v823 = vlaneseq
    %v824 = vshrl.u32 %v823, 7
    %v825 = vsub.s32 1, %v824
    %v826 = vrot.slane %v537, %v825
    %v827 = vlaneseq
    %v828 = vshrl.u32 %v827, 7
    %v829 = vsub.s32 1, %v828
    %v830 = vrot.slane %v540, %v829
    %v831 = vlaneseq
    %v832 = vshrl.u32 %v831, 7
    %v833 = vsub.s32 1, %v832
    %v834 = vrot.slane %v545, %v833
    %v835 = vlaneseq
    %v836 = vshrl.u32 %v835, 7
    %v837 = vsub.s32 1, %v836
    %v838 = vrot.slane %v548, %v837
    %v839 = vlaneseq
    %v840 = vshrl.u32 %v839, 7
    %v841 = vsub.s32 1, %v840
    %v842 = vrot.slane %v553, %v841
    %v843 = vlaneseq
    %v844 = vshrl.u32 %v843, 7
    %v845 = vsub.s32 1, %v844
    %v846 = vrot.slane %v556, %v845
    %v847 = vlaneseq
    %v848 = vshrl.u32 %v847, 7
    %v849 = vsub.s32 1, %v848
    %v850 = vrot.slane %v561, %v849
    %v851 = vlaneseq
    %v852 = vshrl.u32 %v851, 7
    %v853 = vsub.s32 1, %v852
    %v854 = vrot.slane %v564, %v853
    %v855 = vlaneseq
    %v856 = vshrl.u32 %v855, 7
    %v857 = vsub.s32 1, %v856
    %v858 = vrot.slane %v569, %v857
    %v859 = vlaneseq
    %v860 = vshrl.u32 %v859, 7
    %v861 = vsub.s32 1, %v860
    %v862 = vrot.slane %v572, %v861
    %v863 = vlaneseq
    %v864 = vshrl.u32 %v863, 7
    %v865 = vsub.s32 1, %v864
    %v866 = vrot.slane %v577, %v865
    %v867 = vlaneseq
    %v868 = vshrl.u32 %v867, 7
    %v869 = vsub.s32 1, %v868
    %v870 = vrot.slane %v580, %v869
    %v871 = vlaneseq
    %v872 = vshrl.u32 %v871, 7
    %v873 = vsub.s32 1, %v872
    %v874 = vrot.slane %v585, %v873
    %v875 = vlaneseq
    %v876 = vshrl.u32 %v875, 7
    %v877 = vsub.s32 1, %v876
    %v878 = vrot.slane %v588, %v877
    %v879 = vlaneseq
    %v880 = vshrl.u32 %v879, 7
    %v881 = vsub.s32 1, %v880
    %v882 = vrot.slane %v593, %v881
    %v883 = vlaneseq
    %v884 = vshrl.u32 %v883, 7
    %v885 = vsub.s32 1, %v884
    %v886 = vrot.slane %v596, %v885
    %v887 = vmul.f32 %v761, %v826
    %v888 = vmul.f32 %v765, %v830
    %v889 = vmul.f32 %v769, %v834
    %v890 = vmul.f32 %v773, %v838
    %v891 = vmul.f32 %v777, %v842
    %v892 = vmul.f32 %v781, %v846
    %v893 = vmul.f32 %v785, %v850
    %v894 = vmul.f32 %v789, %v854
    %v895 = vmul.f32 %v793, %v858
    %v896 = vmul.f32 %v797, %v862
    %v897 = vmul.f32 %v801, %v866
    %v898 = vmul.f32 %v805, %v870
    %v899 = vmul.f32 %v809, %v874
    %v900 = vmul.f32 %v813, %v878
    %v901 = vmul.f32 %v817, %v882
    %v902 = vmul.f32 %v821, %v886
    %v903 = vadd.f32 %v743, %v887
    %v904 = vadd.f32 %v744, %v888
    %v905 = vadd.f32 %v745, %v889
    %v906 = vadd.f32 %v746, %v890
    %v907 = vadd.f32 %v747, %v891
    %v908 = vadd.f32 %v748, %v892
    %v909 = vadd.f32 %v749, %v893
    %v910 = vadd.f32 %v750, %v894
    %v911 = vadd.f32 %v751, %v895
    %v912 = vadd.f32 %v752, %v896
    %v913 = vadd.f32 %v753, %v897
    %v914 = vadd.f32 %v754, %v898
    %v915 = vadd.f32 %v755, %v899
    %v916 = vadd.f32 %v756, %v900
    %v917 = vadd.f32 %v757, %v901
    %v918 = vadd.f32 %v758, %v902
    %919 = vset.pattern.permute.xlu0 2
    %920 = vperm.xlu0 %919, %v37
    %v921 = vpop.permute.xlu0 %920
    %923 = vset.pattern.permute.xlu0 2
    %924 = vperm.xlu0 %923, %v38
    %v925 = vpop.permute.xlu0 %924
    %927 = vset.pattern.permute.xlu0 2
    %928 = vperm.xlu0 %927, %v39
    %v929 = vpop.permute.xlu0 %928
    %931 = vset.pattern.permute.xlu0 2
    %932 = vperm.xlu0 %931, %v40
    %v933 = vpop.permute.xlu0 %932
    %935 = vset.pattern.permute.xlu0 2
    %936 = vperm.xlu0 %935, %v41
    %v937 = vpop.permute.xlu0 %936
    %939 = vset.pattern.permute.xlu0 2
    %940 = vperm.xlu0 %939, %v42
    %v941 = vpop.permute.xlu0 %940
    %943 = vset.pattern.permute.xlu0 2
    %944 = vperm.xlu0 %943, %v43
    %v945 = vpop.permute.xlu0 %944
    %947 = vset.pattern.permute.xlu0 2
    %948 = vperm.xlu0 %947, %v44
    %v949 = vpop.permute.xlu0 %948
    %951 = vset.pattern.permute.xlu0 2
    %952 = vperm.xlu0 %951, %v45
    %v953 = vpop.permute.xlu0 %952
    %955 = vset.pattern.permute.xlu0 2
    %956 = vperm.xlu0 %955, %v46
    %v957 = vpop.permute.xlu0 %956
    %959 = vset.pattern.permute.xlu0 2
    %960 = vperm.xlu0 %959, %v47
    %v961 = vpop.permute.xlu0 %960
    %963 = vset.pattern.permute.xlu0 2
    %964 = vperm.xlu0 %963, %v48
    %v965 = vpop.permute.xlu0 %964
    %967 = vset.pattern.permute.xlu0 2
    %968 = vperm.xlu0 %967, %v49
    %v969 = vpop.permute.xlu0 %968
    %971 = vset.pattern.permute.xlu0 2
    %972 = vperm.xlu0 %971, %v50
    %v973 = vpop.permute.xlu0 %972
    %975 = vset.pattern.permute.xlu0 2
    %976 = vperm.xlu0 %975, %v51
    %v977 = vpop.permute.xlu0 %976
    %979 = vset.pattern.permute.xlu0 2
    %980 = vperm.xlu0 %979, %v52
    %v981 = vpop.permute.xlu0 %980
    %v983 = vlaneseq
    %v984 = vshrl.u32 %v983, 7
    %v985 = vsub.s32 2, %v984
    %v986 = vrot.slane %v537, %v985
    %v987 = vlaneseq
    %v988 = vshrl.u32 %v987, 7
    %v989 = vsub.s32 2, %v988
    %v990 = vrot.slane %v540, %v989
    %v991 = vlaneseq
    %v992 = vshrl.u32 %v991, 7
    %v993 = vsub.s32 2, %v992
    %v994 = vrot.slane %v545, %v993
    %v995 = vlaneseq
    %v996 = vshrl.u32 %v995, 7
    %v997 = vsub.s32 2, %v996
    %v998 = vrot.slane %v548, %v997
    %v999 = vlaneseq
    %v1000 = vshrl.u32 %v999, 7
    %v1001 = vsub.s32 2, %v1000
    %v1002 = vrot.slane %v553, %v1001
    %v1003 = vlaneseq
    %v1004 = vshrl.u32 %v1003, 7
    %v1005 = vsub.s32 2, %v1004
    %v1006 = vrot.slane %v556, %v1005
    %v1007 = vlaneseq
    %v1008 = vshrl.u32 %v1007, 7
    %v1009 = vsub.s32 2, %v1008
    %v1010 = vrot.slane %v561, %v1009
    %v1011 = vlaneseq
    %v1012 = vshrl.u32 %v1011, 7
    %v1013 = vsub.s32 2, %v1012
    %v1014 = vrot.slane %v564, %v1013
    %v1015 = vlaneseq
    %v1016 = vshrl.u32 %v1015, 7
    %v1017 = vsub.s32 2, %v1016
    %v1018 = vrot.slane %v569, %v1017
    %v1019 = vlaneseq
    %v1020 = vshrl.u32 %v1019, 7
    %v1021 = vsub.s32 2, %v1020
    %v1022 = vrot.slane %v572, %v1021
    %v1023 = vlaneseq
    %v1024 = vshrl.u32 %v1023, 7
    %v1025 = vsub.s32 2, %v1024
    %v1026 = vrot.slane %v577, %v1025
    %v1027 = vlaneseq
    %v1028 = vshrl.u32 %v1027, 7
    %v1029 = vsub.s32 2, %v1028
    %v1030 = vrot.slane %v580, %v1029
    %v1031 = vlaneseq
    %v1032 = vshrl.u32 %v1031, 7
    %v1033 = vsub.s32 2, %v1032
    %v1034 = vrot.slane %v585, %v1033
    %v1035 = vlaneseq
    %v1036 = vshrl.u32 %v1035, 7
    %v1037 = vsub.s32 2, %v1036
    %v1038 = vrot.slane %v588, %v1037
    %v1039 = vlaneseq
    %v1040 = vshrl.u32 %v1039, 7
    %v1041 = vsub.s32 2, %v1040
    %v1042 = vrot.slane %v593, %v1041
    %v1043 = vlaneseq
    %v1044 = vshrl.u32 %v1043, 7
    %v1045 = vsub.s32 2, %v1044
    %v1046 = vrot.slane %v596, %v1045
    %v1047 = vmul.f32 %v921, %v986
    %v1048 = vmul.f32 %v925, %v990
    %v1049 = vmul.f32 %v929, %v994
    %v1050 = vmul.f32 %v933, %v998
    %v1051 = vmul.f32 %v937, %v1002
    %v1052 = vmul.f32 %v941, %v1006
    %v1053 = vmul.f32 %v945, %v1010
    %v1054 = vmul.f32 %v949, %v1014
    %v1055 = vmul.f32 %v953, %v1018
    %v1056 = vmul.f32 %v957, %v1022
    %v1057 = vmul.f32 %v961, %v1026
    %v1058 = vmul.f32 %v965, %v1030
    %v1059 = vmul.f32 %v969, %v1034
    %v1060 = vmul.f32 %v973, %v1038
    %v1061 = vmul.f32 %v977, %v1042
    %v1062 = vmul.f32 %v981, %v1046
    %v1063 = vadd.f32 %v903, %v1047
    %v1064 = vadd.f32 %v904, %v1048
    %v1065 = vadd.f32 %v905, %v1049
    %v1066 = vadd.f32 %v906, %v1050
    %v1067 = vadd.f32 %v907, %v1051
    %v1068 = vadd.f32 %v908, %v1052
    %v1069 = vadd.f32 %v909, %v1053
    %v1070 = vadd.f32 %v910, %v1054
    %v1071 = vadd.f32 %v911, %v1055
    %v1072 = vadd.f32 %v912, %v1056
    %v1073 = vadd.f32 %v913, %v1057
    %v1074 = vadd.f32 %v914, %v1058
    %v1075 = vadd.f32 %v915, %v1059
    %v1076 = vadd.f32 %v916, %v1060
    %v1077 = vadd.f32 %v917, %v1061
    %v1078 = vadd.f32 %v918, %v1062
    %1079 = vset.pattern.permute.xlu0 3
    %1080 = vperm.xlu0 %1079, %v37
    %v1081 = vpop.permute.xlu0 %1080
    %1083 = vset.pattern.permute.xlu0 3
    %1084 = vperm.xlu0 %1083, %v38
    %v1085 = vpop.permute.xlu0 %1084
    %1087 = vset.pattern.permute.xlu0 3
    %1088 = vperm.xlu0 %1087, %v39
    %v1089 = vpop.permute.xlu0 %1088
    %1091 = vset.pattern.permute.xlu0 3
    %1092 = vperm.xlu0 %1091, %v40
    %v1093 = vpop.permute.xlu0 %1092
    %1095 = vset.pattern.permute.xlu0 3
    %1096 = vperm.xlu0 %1095, %v41
    %v1097 = vpop.permute.xlu0 %1096
    %1099 = vset.pattern.permute.xlu0 3
    %1100 = vperm.xlu0 %1099, %v42
    %v1101 = vpop.permute.xlu0 %1100
    %1103 = vset.pattern.permute.xlu0 3
    %1104 = vperm.xlu0 %1103, %v43
    %v1105 = vpop.permute.xlu0 %1104
    %1107 = vset.pattern.permute.xlu0 3
    %1108 = vperm.xlu0 %1107, %v44
    %v1109 = vpop.permute.xlu0 %1108
    %1111 = vset.pattern.permute.xlu0 3
    %1112 = vperm.xlu0 %1111, %v45
    %v1113 = vpop.permute.xlu0 %1112
    %1115 = vset.pattern.permute.xlu0 3
    %1116 = vperm.xlu0 %1115, %v46
    %v1117 = vpop.permute.xlu0 %1116
    %1119 = vset.pattern.permute.xlu0 3
    %1120 = vperm.xlu0 %1119, %v47
    %v1121 = vpop.permute.xlu0 %1120
    %1123 = vset.pattern.permute.xlu0 3
    %1124 = vperm.xlu0 %1123, %v48
    %v1125 = vpop.permute.xlu0 %1124
    %1127 = vset.pattern.permute.xlu0 3
    %1128 = vperm.xlu0 %1127, %v49
    %v1129 = vpop.permute.xlu0 %1128
    %1131 = vset.pattern.permute.xlu0 3
    %1132 = vperm.xlu0 %1131, %v50
    %v1133 = vpop.permute.xlu0 %1132
    %1135 = vset.pattern.permute.xlu0 3
    %1136 = vperm.xlu0 %1135, %v51
    %v1137 = vpop.permute.xlu0 %1136
    %1139 = vset.pattern.permute.xlu0 3
    %1140 = vperm.xlu0 %1139, %v52
    %v1141 = vpop.permute.xlu0 %1140
    %v1143 = vlaneseq
    %v1144 = vshrl.u32 %v1143, 7
    %v1145 = vsub.s32 3, %v1144
    %v1146 = vrot.slane %v537, %v1145
    %v1147 = vlaneseq
    %v1148 = vshrl.u32 %v1147, 7
    %v1149 = vsub.s32 3, %v1148
    %v1150 = vrot.slane %v540, %v1149
    %v1151 = vlaneseq
    %v1152 = vshrl.u32 %v1151, 7
    %v1153 = vsub.s32 3, %v1152
    %v1154 = vrot.slane %v545, %v1153
    %v1155 = vlaneseq
    %v1156 = vshrl.u32 %v1155, 7
    %v1157 = vsub.s32 3, %v1156
    %v1158 = vrot.slane %v548, %v1157
    %v1159 = vlaneseq
    %v1160 = vshrl.u32 %v1159, 7
    %v1161 = vsub.s32 3, %v1160
    %v1162 = vrot.slane %v553, %v1161
    %v1163 = vlaneseq
    %v1164 = vshrl.u32 %v1163, 7
    %v1165 = vsub.s32 3, %v1164
    %v1166 = vrot.slane %v556, %v1165
    %v1167 = vlaneseq
    %v1168 = vshrl.u32 %v1167, 7
    %v1169 = vsub.s32 3, %v1168
    %v1170 = vrot.slane %v561, %v1169
    %v1171 = vlaneseq
    %v1172 = vshrl.u32 %v1171, 7
    %v1173 = vsub.s32 3, %v1172
    %v1174 = vrot.slane %v564, %v1173
    %v1175 = vlaneseq
    %v1176 = vshrl.u32 %v1175, 7
    %v1177 = vsub.s32 3, %v1176
    %v1178 = vrot.slane %v569, %v1177
    %v1179 = vlaneseq
    %v1180 = vshrl.u32 %v1179, 7
    %v1181 = vsub.s32 3, %v1180
    %v1182 = vrot.slane %v572, %v1181
    %v1183 = vlaneseq
    %v1184 = vshrl.u32 %v1183, 7
    %v1185 = vsub.s32 3, %v1184
    %v1186 = vrot.slane %v577, %v1185
    %v1187 = vlaneseq
    %v1188 = vshrl.u32 %v1187, 7
    %v1189 = vsub.s32 3, %v1188
    %v1190 = vrot.slane %v580, %v1189
    %v1191 = vlaneseq
    %v1192 = vshrl.u32 %v1191, 7
    %v1193 = vsub.s32 3, %v1192
    %v1194 = vrot.slane %v585, %v1193
    %v1195 = vlaneseq
    %v1196 = vshrl.u32 %v1195, 7
    %v1197 = vsub.s32 3, %v1196
    %v1198 = vrot.slane %v588, %v1197
    %v1199 = vlaneseq
    %v1200 = vshrl.u32 %v1199, 7
    %v1201 = vsub.s32 3, %v1200
    %v1202 = vrot.slane %v593, %v1201
    %v1203 = vlaneseq
    %v1204 = vshrl.u32 %v1203, 7
    %v1205 = vsub.s32 3, %v1204
    %v1206 = vrot.slane %v596, %v1205
    %v1207 = vmul.f32 %v1081, %v1146
    %v1208 = vmul.f32 %v1085, %v1150
    %v1209 = vmul.f32 %v1089, %v1154
    %v1210 = vmul.f32 %v1093, %v1158
    %v1211 = vmul.f32 %v1097, %v1162
    %v1212 = vmul.f32 %v1101, %v1166
    %v1213 = vmul.f32 %v1105, %v1170
    %v1214 = vmul.f32 %v1109, %v1174
    %v1215 = vmul.f32 %v1113, %v1178
    %v1216 = vmul.f32 %v1117, %v1182
    %v1217 = vmul.f32 %v1121, %v1186
    %v1218 = vmul.f32 %v1125, %v1190
    %v1219 = vmul.f32 %v1129, %v1194
    %v1220 = vmul.f32 %v1133, %v1198
    %v1221 = vmul.f32 %v1137, %v1202
    %v1222 = vmul.f32 %v1141, %v1206
    %v1223 = vadd.f32 %v1063, %v1207
    %v1224 = vadd.f32 %v1064, %v1208
    %v1225 = vadd.f32 %v1065, %v1209
    %v1226 = vadd.f32 %v1066, %v1210
    %v1227 = vadd.f32 %v1067, %v1211
    %v1228 = vadd.f32 %v1068, %v1212
    %v1229 = vadd.f32 %v1069, %v1213
    %v1230 = vadd.f32 %v1070, %v1214
    %v1231 = vadd.f32 %v1071, %v1215
    %v1232 = vadd.f32 %v1072, %v1216
    %v1233 = vadd.f32 %v1073, %v1217
    %v1234 = vadd.f32 %v1074, %v1218
    %v1235 = vadd.f32 %v1075, %v1219
    %v1236 = vadd.f32 %v1076, %v1220
    %v1237 = vadd.f32 %v1077, %v1221
    %v1238 = vadd.f32 %v1078, %v1222
    %1239 = vset.pattern.permute.xlu0 4
    %1240 = vperm.xlu0 %1239, %v37
    %v1241 = vpop.permute.xlu0 %1240
    %1243 = vset.pattern.permute.xlu0 4
    %1244 = vperm.xlu0 %1243, %v38
    %v1245 = vpop.permute.xlu0 %1244
    %1247 = vset.pattern.permute.xlu0 4
    %1248 = vperm.xlu0 %1247, %v39
    %v1249 = vpop.permute.xlu0 %1248
    %1251 = vset.pattern.permute.xlu0 4
    %1252 = vperm.xlu0 %1251, %v40
    %v1253 = vpop.permute.xlu0 %1252
    %1255 = vset.pattern.permute.xlu0 4
    %1256 = vperm.xlu0 %1255, %v41
    %v1257 = vpop.permute.xlu0 %1256
    %1259 = vset.pattern.permute.xlu0 4
    %1260 = vperm.xlu0 %1259, %v42
    %v1261 = vpop.permute.xlu0 %1260
    %1263 = vset.pattern.permute.xlu0 4
    %1264 = vperm.xlu0 %1263, %v43
    %v1265 = vpop.permute.xlu0 %1264
    %1267 = vset.pattern.permute.xlu0 4
    %1268 = vperm.xlu0 %1267, %v44
    %v1269 = vpop.permute.xlu0 %1268
    %1271 = vset.pattern.permute.xlu0 4
    %1272 = vperm.xlu0 %1271, %v45
    %v1273 = vpop.permute.xlu0 %1272
    %1275 = vset.pattern.permute.xlu0 4
    %1276 = vperm.xlu0 %1275, %v46
    %v1277 = vpop.permute.xlu0 %1276
    %1279 = vset.pattern.permute.xlu0 4
    %1280 = vperm.xlu0 %1279, %v47
    %v1281 = vpop.permute.xlu0 %1280
    %1283 = vset.pattern.permute.xlu0 4
    %1284 = vperm.xlu0 %1283, %v48
    %v1285 = vpop.permute.xlu0 %1284
    %1287 = vset.pattern.permute.xlu0 4
    %1288 = vperm.xlu0 %1287, %v49
    %v1289 = vpop.permute.xlu0 %1288
    %1291 = vset.pattern.permute.xlu0 4
    %1292 = vperm.xlu0 %1291, %v50
    %v1293 = vpop.permute.xlu0 %1292
    %1295 = vset.pattern.permute.xlu0 4
    %1296 = vperm.xlu0 %1295, %v51
    %v1297 = vpop.permute.xlu0 %1296
    %1299 = vset.pattern.permute.xlu0 4
    %1300 = vperm.xlu0 %1299, %v52
    %v1301 = vpop.permute.xlu0 %1300
    %v1303 = vlaneseq
    %v1304 = vshrl.u32 %v1303, 7
    %v1305 = vsub.s32 4, %v1304
    %v1306 = vrot.slane %v537, %v1305
    %v1307 = vlaneseq
    %v1308 = vshrl.u32 %v1307, 7
    %v1309 = vsub.s32 4, %v1308
    %v1310 = vrot.slane %v540, %v1309
    %v1311 = vlaneseq
    %v1312 = vshrl.u32 %v1311, 7
    %v1313 = vsub.s32 4, %v1312
    %v1314 = vrot.slane %v545, %v1313
    %v1315 = vlaneseq
    %v1316 = vshrl.u32 %v1315, 7
    %v1317 = vsub.s32 4, %v1316
    %v1318 = vrot.slane %v548, %v1317
    %v1319 = vlaneseq
    %v1320 = vshrl.u32 %v1319, 7
    %v1321 = vsub.s32 4, %v1320
    %v1322 = vrot.slane %v553, %v1321
    %v1323 = vlaneseq
    %v1324 = vshrl.u32 %v1323, 7
    %v1325 = vsub.s32 4, %v1324
    %v1326 = vrot.slane %v556, %v1325
    %v1327 = vlaneseq
    %v1328 = vshrl.u32 %v1327, 7
    %v1329 = vsub.s32 4, %v1328
    %v1330 = vrot.slane %v561, %v1329
    %v1331 = vlaneseq
    %v1332 = vshrl.u32 %v1331, 7
    %v1333 = vsub.s32 4, %v1332
    %v1334 = vrot.slane %v564, %v1333
    %v1335 = vlaneseq
    %v1336 = vshrl.u32 %v1335, 7
    %v1337 = vsub.s32 4, %v1336
    %v1338 = vrot.slane %v569, %v1337
    %v1339 = vlaneseq
    %v1340 = vshrl.u32 %v1339, 7
    %v1341 = vsub.s32 4, %v1340
    %v1342 = vrot.slane %v572, %v1341
    %v1343 = vlaneseq
    %v1344 = vshrl.u32 %v1343, 7
    %v1345 = vsub.s32 4, %v1344
    %v1346 = vrot.slane %v577, %v1345
    %v1347 = vlaneseq
    %v1348 = vshrl.u32 %v1347, 7
    %v1349 = vsub.s32 4, %v1348
    %v1350 = vrot.slane %v580, %v1349
    %v1351 = vlaneseq
    %v1352 = vshrl.u32 %v1351, 7
    %v1353 = vsub.s32 4, %v1352
    %v1354 = vrot.slane %v585, %v1353
    %v1355 = vlaneseq
    %v1356 = vshrl.u32 %v1355, 7
    %v1357 = vsub.s32 4, %v1356
    %v1358 = vrot.slane %v588, %v1357
    %v1359 = vlaneseq
    %v1360 = vshrl.u32 %v1359, 7
    %v1361 = vsub.s32 4, %v1360
    %v1362 = vrot.slane %v593, %v1361
    %v1363 = vlaneseq
    %v1364 = vshrl.u32 %v1363, 7
    %v1365 = vsub.s32 4, %v1364
    %v1366 = vrot.slane %v596, %v1365
    %v1367 = vmul.f32 %v1241, %v1306
    %v1368 = vmul.f32 %v1245, %v1310
    %v1369 = vmul.f32 %v1249, %v1314
    %v1370 = vmul.f32 %v1253, %v1318
    %v1371 = vmul.f32 %v1257, %v1322
    %v1372 = vmul.f32 %v1261, %v1326
    %v1373 = vmul.f32 %v1265, %v1330
    %v1374 = vmul.f32 %v1269, %v1334
    %v1375 = vmul.f32 %v1273, %v1338
    %v1376 = vmul.f32 %v1277, %v1342
    %v1377 = vmul.f32 %v1281, %v1346
    %v1378 = vmul.f32 %v1285, %v1350
    %v1379 = vmul.f32 %v1289, %v1354
    %v1380 = vmul.f32 %v1293, %v1358
    %v1381 = vmul.f32 %v1297, %v1362
    %v1382 = vmul.f32 %v1301, %v1366
    %v1383 = vadd.f32 %v1223, %v1367
    %v1384 = vadd.f32 %v1224, %v1368
    %v1385 = vadd.f32 %v1225, %v1369
    %v1386 = vadd.f32 %v1226, %v1370
    %v1387 = vadd.f32 %v1227, %v1371
    %v1388 = vadd.f32 %v1228, %v1372
    %v1389 = vadd.f32 %v1229, %v1373
    %v1390 = vadd.f32 %v1230, %v1374
    %v1391 = vadd.f32 %v1231, %v1375
    %v1392 = vadd.f32 %v1232, %v1376
    %v1393 = vadd.f32 %v1233, %v1377
    %v1394 = vadd.f32 %v1234, %v1378
    %v1395 = vadd.f32 %v1235, %v1379
    %v1396 = vadd.f32 %v1236, %v1380
    %v1397 = vadd.f32 %v1237, %v1381
    %v1398 = vadd.f32 %v1238, %v1382
    %1399 = vset.pattern.permute.xlu0 5
    %1400 = vperm.xlu0 %1399, %v37
    %v1401 = vpop.permute.xlu0 %1400
    %1403 = vset.pattern.permute.xlu0 5
    %1404 = vperm.xlu0 %1403, %v38
    %v1405 = vpop.permute.xlu0 %1404
    %1407 = vset.pattern.permute.xlu0 5
    %1408 = vperm.xlu0 %1407, %v39
    %v1409 = vpop.permute.xlu0 %1408
    %1411 = vset.pattern.permute.xlu0 5
    %1412 = vperm.xlu0 %1411, %v40
    %v1413 = vpop.permute.xlu0 %1412
    %1415 = vset.pattern.permute.xlu0 5
    %1416 = vperm.xlu0 %1415, %v41
    %v1417 = vpop.permute.xlu0 %1416
    %1419 = vset.pattern.permute.xlu0 5
    %1420 = vperm.xlu0 %1419, %v42
    %v1421 = vpop.permute.xlu0 %1420
    %1423 = vset.pattern.permute.xlu0 5
    %1424 = vperm.xlu0 %1423, %v43
    %v1425 = vpop.permute.xlu0 %1424
    %1427 = vset.pattern.permute.xlu0 5
    %1428 = vperm.xlu0 %1427, %v44
    %v1429 = vpop.permute.xlu0 %1428
    %1431 = vset.pattern.permute.xlu0 5
    %1432 = vperm.xlu0 %1431, %v45
    %v1433 = vpop.permute.xlu0 %1432
    %1435 = vset.pattern.permute.xlu0 5
    %1436 = vperm.xlu0 %1435, %v46
    %v1437 = vpop.permute.xlu0 %1436
    %1439 = vset.pattern.permute.xlu0 5
    %1440 = vperm.xlu0 %1439, %v47
    %v1441 = vpop.permute.xlu0 %1440
    %1443 = vset.pattern.permute.xlu0 5
    %1444 = vperm.xlu0 %1443, %v48
    %v1445 = vpop.permute.xlu0 %1444
    %1447 = vset.pattern.permute.xlu0 5
    %1448 = vperm.xlu0 %1447, %v49
    %v1449 = vpop.permute.xlu0 %1448
    %1451 = vset.pattern.permute.xlu0 5
    %1452 = vperm.xlu0 %1451, %v50
    %v1453 = vpop.permute.xlu0 %1452
    %1455 = vset.pattern.permute.xlu0 5
    %1456 = vperm.xlu0 %1455, %v51
    %v1457 = vpop.permute.xlu0 %1456
    %1459 = vset.pattern.permute.xlu0 5
    %1460 = vperm.xlu0 %1459, %v52
    %v1461 = vpop.permute.xlu0 %1460
    %v1463 = vlaneseq
    %v1464 = vshrl.u32 %v1463, 7
    %v1465 = vsub.s32 5, %v1464
    %v1466 = vrot.slane %v537, %v1465
    %v1467 = vlaneseq
    %v1468 = vshrl.u32 %v1467, 7
    %v1469 = vsub.s32 5, %v1468
    %v1470 = vrot.slane %v540, %v1469
    %v1471 = vlaneseq
    %v1472 = vshrl.u32 %v1471, 7
    %v1473 = vsub.s32 5, %v1472
    %v1474 = vrot.slane %v545, %v1473
    %v1475 = vlaneseq
    %v1476 = vshrl.u32 %v1475, 7
    %v1477 = vsub.s32 5, %v1476
    %v1478 = vrot.slane %v548, %v1477
    %v1479 = vlaneseq
    %v1480 = vshrl.u32 %v1479, 7
    %v1481 = vsub.s32 5, %v1480
    %v1482 = vrot.slane %v553, %v1481
    %v1483 = vlaneseq
    %v1484 = vshrl.u32 %v1483, 7
    %v1485 = vsub.s32 5, %v1484
    %v1486 = vrot.slane %v556, %v1485
    %v1487 = vlaneseq
    %v1488 = vshrl.u32 %v1487, 7
    %v1489 = vsub.s32 5, %v1488
    %v1490 = vrot.slane %v561, %v1489
    %v1491 = vlaneseq
    %v1492 = vshrl.u32 %v1491, 7
    %v1493 = vsub.s32 5, %v1492
    %v1494 = vrot.slane %v564, %v1493
    %v1495 = vlaneseq
    %v1496 = vshrl.u32 %v1495, 7
    %v1497 = vsub.s32 5, %v1496
    %v1498 = vrot.slane %v569, %v1497
    %v1499 = vlaneseq
    %v1500 = vshrl.u32 %v1499, 7
    %v1501 = vsub.s32 5, %v1500
    %v1502 = vrot.slane %v572, %v1501
    %v1503 = vlaneseq
    %v1504 = vshrl.u32 %v1503, 7
    %v1505 = vsub.s32 5, %v1504
    %v1506 = vrot.slane %v577, %v1505
    %v1507 = vlaneseq
    %v1508 = vshrl.u32 %v1507, 7
    %v1509 = vsub.s32 5, %v1508
    %v1510 = vrot.slane %v580, %v1509
    %v1511 = vlaneseq
    %v1512 = vshrl.u32 %v1511, 7
    %v1513 = vsub.s32 5, %v1512
    %v1514 = vrot.slane %v585, %v1513
    %v1515 = vlaneseq
    %v1516 = vshrl.u32 %v1515, 7
    %v1517 = vsub.s32 5, %v1516
    %v1518 = vrot.slane %v588, %v1517
    %v1519 = vlaneseq
    %v1520 = vshrl.u32 %v1519, 7
    %v1521 = vsub.s32 5, %v1520
    %v1522 = vrot.slane %v593, %v1521
    %v1523 = vlaneseq
    %v1524 = vshrl.u32 %v1523, 7
    %v1525 = vsub.s32 5, %v1524
    %v1526 = vrot.slane %v596, %v1525
    %v1527 = vmul.f32 %v1401, %v1466
    %v1528 = vmul.f32 %v1405, %v1470
    %v1529 = vmul.f32 %v1409, %v1474
    %v1530 = vmul.f32 %v1413, %v1478
    %v1531 = vmul.f32 %v1417, %v1482
    %v1532 = vmul.f32 %v1421, %v1486
    %v1533 = vmul.f32 %v1425, %v1490
    %v1534 = vmul.f32 %v1429, %v1494
    %v1535 = vmul.f32 %v1433, %v1498
    %v1536 = vmul.f32 %v1437, %v1502
    %v1537 = vmul.f32 %v1441, %v1506
    %v1538 = vmul.f32 %v1445, %v1510
    %v1539 = vmul.f32 %v1449, %v1514
    %v1540 = vmul.f32 %v1453, %v1518
    %v1541 = vmul.f32 %v1457, %v1522
    %v1542 = vmul.f32 %v1461, %v1526
    %v1543 = vadd.f32 %v1383, %v1527
    %v1544 = vadd.f32 %v1384, %v1528
    %v1545 = vadd.f32 %v1385, %v1529
    %v1546 = vadd.f32 %v1386, %v1530
    %v1547 = vadd.f32 %v1387, %v1531
    %v1548 = vadd.f32 %v1388, %v1532
    %v1549 = vadd.f32 %v1389, %v1533
    %v1550 = vadd.f32 %v1390, %v1534
    %v1551 = vadd.f32 %v1391, %v1535
    %v1552 = vadd.f32 %v1392, %v1536
    %v1553 = vadd.f32 %v1393, %v1537
    %v1554 = vadd.f32 %v1394, %v1538
    %v1555 = vadd.f32 %v1395, %v1539
    %v1556 = vadd.f32 %v1396, %v1540
    %v1557 = vadd.f32 %v1397, %v1541
    %v1558 = vadd.f32 %v1398, %v1542
    %1559 = vset.pattern.permute.xlu0 6
    %1560 = vperm.xlu0 %1559, %v37
    %v1561 = vpop.permute.xlu0 %1560
    %1563 = vset.pattern.permute.xlu0 6
    %1564 = vperm.xlu0 %1563, %v38
    %v1565 = vpop.permute.xlu0 %1564
    %1567 = vset.pattern.permute.xlu0 6
    %1568 = vperm.xlu0 %1567, %v39
    %v1569 = vpop.permute.xlu0 %1568
    %1571 = vset.pattern.permute.xlu0 6
    %1572 = vperm.xlu0 %1571, %v40
    %v1573 = vpop.permute.xlu0 %1572
    %1575 = vset.pattern.permute.xlu0 6
    %1576 = vperm.xlu0 %1575, %v41
    %v1577 = vpop.permute.xlu0 %1576
    %1579 = vset.pattern.permute.xlu0 6
    %1580 = vperm.xlu0 %1579, %v42
    %v1581 = vpop.permute.xlu0 %1580
    %1583 = vset.pattern.permute.xlu0 6
    %1584 = vperm.xlu0 %1583, %v43
    %v1585 = vpop.permute.xlu0 %1584
    %1587 = vset.pattern.permute.xlu0 6
    %1588 = vperm.xlu0 %1587, %v44
    %v1589 = vpop.permute.xlu0 %1588
    %1591 = vset.pattern.permute.xlu0 6
    %1592 = vperm.xlu0 %1591, %v45
    %v1593 = vpop.permute.xlu0 %1592
    %1595 = vset.pattern.permute.xlu0 6
    %1596 = vperm.xlu0 %1595, %v46
    %v1597 = vpop.permute.xlu0 %1596
    %1599 = vset.pattern.permute.xlu0 6
    %1600 = vperm.xlu0 %1599, %v47
    %v1601 = vpop.permute.xlu0 %1600
    %1603 = vset.pattern.permute.xlu0 6
    %1604 = vperm.xlu0 %1603, %v48
    %v1605 = vpop.permute.xlu0 %1604
    %1607 = vset.pattern.permute.xlu0 6
    %1608 = vperm.xlu0 %1607, %v49
    %v1609 = vpop.permute.xlu0 %1608
    %1611 = vset.pattern.permute.xlu0 6
    %1612 = vperm.xlu0 %1611, %v50
    %v1613 = vpop.permute.xlu0 %1612
    %1615 = vset.pattern.permute.xlu0 6
    %1616 = vperm.xlu0 %1615, %v51
    %v1617 = vpop.permute.xlu0 %1616
    %1619 = vset.pattern.permute.xlu0 6
    %1620 = vperm.xlu0 %1619, %v52
    %v1621 = vpop.permute.xlu0 %1620
    %v1623 = vlaneseq
    %v1624 = vshrl.u32 %v1623, 7
    %v1625 = vsub.s32 6, %v1624
    %v1626 = vrot.slane %v537, %v1625
    %v1627 = vlaneseq
    %v1628 = vshrl.u32 %v1627, 7
    %v1629 = vsub.s32 6, %v1628
    %v1630 = vrot.slane %v540, %v1629
    %v1631 = vlaneseq
    %v1632 = vshrl.u32 %v1631, 7
    %v1633 = vsub.s32 6, %v1632
    %v1634 = vrot.slane %v545, %v1633
    %v1635 = vlaneseq
    %v1636 = vshrl.u32 %v1635, 7
    %v1637 = vsub.s32 6, %v1636
    %v1638 = vrot.slane %v548, %v1637
    %v1639 = vlaneseq
    %v1640 = vshrl.u32 %v1639, 7
    %v1641 = vsub.s32 6, %v1640
    %v1642 = vrot.slane %v553, %v1641
    %v1643 = vlaneseq
    %v1644 = vshrl.u32 %v1643, 7
    %v1645 = vsub.s32 6, %v1644
    %v1646 = vrot.slane %v556, %v1645
    %v1647 = vlaneseq
    %v1648 = vshrl.u32 %v1647, 7
    %v1649 = vsub.s32 6, %v1648
    %v1650 = vrot.slane %v561, %v1649
    %v1651 = vlaneseq
    %v1652 = vshrl.u32 %v1651, 7
    %v1653 = vsub.s32 6, %v1652
    %v1654 = vrot.slane %v564, %v1653
    %v1655 = vlaneseq
    %v1656 = vshrl.u32 %v1655, 7
    %v1657 = vsub.s32 6, %v1656
    %v1658 = vrot.slane %v569, %v1657
    %v1659 = vlaneseq
    %v1660 = vshrl.u32 %v1659, 7
    %v1661 = vsub.s32 6, %v1660
    %v1662 = vrot.slane %v572, %v1661
    %v1663 = vlaneseq
    %v1664 = vshrl.u32 %v1663, 7
    %v1665 = vsub.s32 6, %v1664
    %v1666 = vrot.slane %v577, %v1665
    %v1667 = vlaneseq
    %v1668 = vshrl.u32 %v1667, 7
    %v1669 = vsub.s32 6, %v1668
    %v1670 = vrot.slane %v580, %v1669
    %v1671 = vlaneseq
    %v1672 = vshrl.u32 %v1671, 7
    %v1673 = vsub.s32 6, %v1672
    %v1674 = vrot.slane %v585, %v1673
    %v1675 = vlaneseq
    %v1676 = vshrl.u32 %v1675, 7
    %v1677 = vsub.s32 6, %v1676
    %v1678 = vrot.slane %v588, %v1677
    %v1679 = vlaneseq
    %v1680 = vshrl.u32 %v1679, 7
    %v1681 = vsub.s32 6, %v1680
    %v1682 = vrot.slane %v593, %v1681
    %v1683 = vlaneseq
    %v1684 = vshrl.u32 %v1683, 7
    %v1685 = vsub.s32 6, %v1684
    %v1686 = vrot.slane %v596, %v1685
    %v1687 = vmul.f32 %v1561, %v1626
    %v1688 = vmul.f32 %v1565, %v1630
    %v1689 = vmul.f32 %v1569, %v1634
    %v1690 = vmul.f32 %v1573, %v1638
    %v1691 = vmul.f32 %v1577, %v1642
    %v1692 = vmul.f32 %v1581, %v1646
    %v1693 = vmul.f32 %v1585, %v1650
    %v1694 = vmul.f32 %v1589, %v1654
    %v1695 = vmul.f32 %v1593, %v1658
    %v1696 = vmul.f32 %v1597, %v1662
    %v1697 = vmul.f32 %v1601, %v1666
    %v1698 = vmul.f32 %v1605, %v1670
    %v1699 = vmul.f32 %v1609, %v1674
    %v1700 = vmul.f32 %v1613, %v1678
    %v1701 = vmul.f32 %v1617, %v1682
    %v1702 = vmul.f32 %v1621, %v1686
    %v1703 = vadd.f32 %v1543, %v1687
    %v1704 = vadd.f32 %v1544, %v1688
    %v1705 = vadd.f32 %v1545, %v1689
    %v1706 = vadd.f32 %v1546, %v1690
    %v1707 = vadd.f32 %v1547, %v1691
    %v1708 = vadd.f32 %v1548, %v1692
    %v1709 = vadd.f32 %v1549, %v1693
    %v1710 = vadd.f32 %v1550, %v1694
    %v1711 = vadd.f32 %v1551, %v1695
    %v1712 = vadd.f32 %v1552, %v1696
    %v1713 = vadd.f32 %v1553, %v1697
    %v1714 = vadd.f32 %v1554, %v1698
    %v1715 = vadd.f32 %v1555, %v1699
    %v1716 = vadd.f32 %v1556, %v1700
    %v1717 = vadd.f32 %v1557, %v1701
    %v1718 = vadd.f32 %v1558, %v1702
    %1719 = vset.pattern.permute.xlu0 7
    %1720 = vperm.xlu0 %1719, %v37
    %v1721 = vpop.permute.xlu0 %1720
    %1723 = vset.pattern.permute.xlu0 7
    %1724 = vperm.xlu0 %1723, %v38
    %v1725 = vpop.permute.xlu0 %1724
    %1727 = vset.pattern.permute.xlu0 7
    %1728 = vperm.xlu0 %1727, %v39
    %v1729 = vpop.permute.xlu0 %1728
    %1731 = vset.pattern.permute.xlu0 7
    %1732 = vperm.xlu0 %1731, %v40
    %v1733 = vpop.permute.xlu0 %1732
    %1735 = vset.pattern.permute.xlu0 7
    %1736 = vperm.xlu0 %1735, %v41
    %v1737 = vpop.permute.xlu0 %1736
    %1739 = vset.pattern.permute.xlu0 7
    %1740 = vperm.xlu0 %1739, %v42
    %v1741 = vpop.permute.xlu0 %1740
    %1743 = vset.pattern.permute.xlu0 7
    %1744 = vperm.xlu0 %1743, %v43
    %v1745 = vpop.permute.xlu0 %1744
    %1747 = vset.pattern.permute.xlu0 7
    %1748 = vperm.xlu0 %1747, %v44
    %v1749 = vpop.permute.xlu0 %1748
    %1751 = vset.pattern.permute.xlu0 7
    %1752 = vperm.xlu0 %1751, %v45
    %v1753 = vpop.permute.xlu0 %1752
    %1755 = vset.pattern.permute.xlu0 7
    %1756 = vperm.xlu0 %1755, %v46
    %v1757 = vpop.permute.xlu0 %1756
    %1759 = vset.pattern.permute.xlu0 7
    %1760 = vperm.xlu0 %1759, %v47
    %v1761 = vpop.permute.xlu0 %1760
    %1763 = vset.pattern.permute.xlu0 7
    %1764 = vperm.xlu0 %1763, %v48
    %v1765 = vpop.permute.xlu0 %1764
    %1767 = vset.pattern.permute.xlu0 7
    %1768 = vperm.xlu0 %1767, %v49
    %v1769 = vpop.permute.xlu0 %1768
    %1771 = vset.pattern.permute.xlu0 7
    %1772 = vperm.xlu0 %1771, %v50
    %v1773 = vpop.permute.xlu0 %1772
    %1775 = vset.pattern.permute.xlu0 7
    %1776 = vperm.xlu0 %1775, %v51
    %v1777 = vpop.permute.xlu0 %1776
    %1779 = vset.pattern.permute.xlu0 7
    %1780 = vperm.xlu0 %1779, %v52
    %v1781 = vpop.permute.xlu0 %1780
    %v1783 = vlaneseq
    %v1784 = vshrl.u32 %v1783, 7
    %v1785 = vsub.s32 7, %v1784
    %v1786 = vrot.slane %v537, %v1785
    %v1787 = vlaneseq
    %v1788 = vshrl.u32 %v1787, 7
    %v1789 = vsub.s32 7, %v1788
    %v1790 = vrot.slane %v540, %v1789
    %v1791 = vlaneseq
    %v1792 = vshrl.u32 %v1791, 7
    %v1793 = vsub.s32 7, %v1792
    %v1794 = vrot.slane %v545, %v1793
    %v1795 = vlaneseq
    %v1796 = vshrl.u32 %v1795, 7
    %v1797 = vsub.s32 7, %v1796
    %v1798 = vrot.slane %v548, %v1797
    %v1799 = vlaneseq
    %v1800 = vshrl.u32 %v1799, 7
    %v1801 = vsub.s32 7, %v1800
    %v1802 = vrot.slane %v553, %v1801
    %v1803 = vlaneseq
    %v1804 = vshrl.u32 %v1803, 7
    %v1805 = vsub.s32 7, %v1804
    %v1806 = vrot.slane %v556, %v1805
    %v1807 = vlaneseq
    %v1808 = vshrl.u32 %v1807, 7
    %v1809 = vsub.s32 7, %v1808
    %v1810 = vrot.slane %v561, %v1809
    %v1811 = vlaneseq
    %v1812 = vshrl.u32 %v1811, 7
    %v1813 = vsub.s32 7, %v1812
    %v1814 = vrot.slane %v564, %v1813
    %v1815 = vlaneseq
    %v1816 = vshrl.u32 %v1815, 7
    %v1817 = vsub.s32 7, %v1816
    %v1818 = vrot.slane %v569, %v1817
    %v1819 = vlaneseq
    %v1820 = vshrl.u32 %v1819, 7
    %v1821 = vsub.s32 7, %v1820
    %v1822 = vrot.slane %v572, %v1821
    %v1823 = vlaneseq
    %v1824 = vshrl.u32 %v1823, 7
    %v1825 = vsub.s32 7, %v1824
    %v1826 = vrot.slane %v577, %v1825
    %v1827 = vlaneseq
    %v1828 = vshrl.u32 %v1827, 7
    %v1829 = vsub.s32 7, %v1828
    %v1830 = vrot.slane %v580, %v1829
    %v1831 = vlaneseq
    %v1832 = vshrl.u32 %v1831, 7
    %v1833 = vsub.s32 7, %v1832
    %v1834 = vrot.slane %v585, %v1833
    %v1835 = vlaneseq
    %v1836 = vshrl.u32 %v1835, 7
    %v1837 = vsub.s32 7, %v1836
    %v1838 = vrot.slane %v588, %v1837
    %v1839 = vlaneseq
    %v1840 = vshrl.u32 %v1839, 7
    %v1841 = vsub.s32 7, %v1840
    %v1842 = vrot.slane %v593, %v1841
    %v1843 = vlaneseq
    %v1844 = vshrl.u32 %v1843, 7
    %v1845 = vsub.s32 7, %v1844
    %v1846 = vrot.slane %v596, %v1845
    %v1847 = vmul.f32 %v1721, %v1786
    %v1848 = vmul.f32 %v1725, %v1790
    %v1849 = vmul.f32 %v1729, %v1794
    %v1850 = vmul.f32 %v1733, %v1798
    %v1851 = vmul.f32 %v1737, %v1802
    %v1852 = vmul.f32 %v1741, %v1806
    %v1853 = vmul.f32 %v1745, %v1810
    %v1854 = vmul.f32 %v1749, %v1814
    %v1855 = vmul.f32 %v1753, %v1818
    %v1856 = vmul.f32 %v1757, %v1822
    %v1857 = vmul.f32 %v1761, %v1826
    %v1858 = vmul.f32 %v1765, %v1830
    %v1859 = vmul.f32 %v1769, %v1834
    %v1860 = vmul.f32 %v1773, %v1838
    %v1861 = vmul.f32 %v1777, %v1842
    %v1862 = vmul.f32 %v1781, %v1846
    %v1863 = vadd.f32 %v1703, %v1847
    %v1864 = vadd.f32 %v1704, %v1848
    %v1865 = vadd.f32 %v1705, %v1849
    %v1866 = vadd.f32 %v1706, %v1850
    %v1867 = vadd.f32 %v1707, %v1851
    %v1868 = vadd.f32 %v1708, %v1852
    %v1869 = vadd.f32 %v1709, %v1853
    %v1870 = vadd.f32 %v1710, %v1854
    %v1871 = vadd.f32 %v1711, %v1855
    %v1872 = vadd.f32 %v1712, %v1856
    %v1873 = vadd.f32 %v1713, %v1857
    %v1874 = vadd.f32 %v1714, %v1858
    %v1875 = vadd.f32 %v1715, %v1859
    %v1876 = vadd.f32 %v1716, %v1860
    %v1877 = vadd.f32 %v1717, %v1861
    %v1878 = vadd.f32 %v1718, %v1862
    %v1879 = vld [vmem:[%s3] sm:$0x1]
    %v1881 = vlaneseq
    %v1882 = vshrl.u32 %v1881, 7
    %v1883 = vsub.s32 0, %v1882
    %v1884 = vrot.slane %v1879, %v1883
    %v1886 = vadd.f32 %v1863, %v1884
    %v1887 = vadd.f32 %v1864, %v1884
    %v1888 = vadd.f32 %v1865, %v1884
    %v1889 = vadd.f32 %v1866, %v1884
    %v1890 = vadd.f32 %v1867, %v1884
    %v1891 = vadd.f32 %v1868, %v1884
    %v1892 = vadd.f32 %v1869, %v1884
    %v1893 = vadd.f32 %v1870, %v1884
    %v1894 = vadd.f32 %v1871, %v1884
    %v1895 = vadd.f32 %v1872, %v1884
    %v1896 = vadd.f32 %v1873, %v1884
    %v1897 = vadd.f32 %v1874, %v1884
    %v1898 = vadd.f32 %v1875, %v1884
    %v1899 = vadd.f32 %v1876, %v1884
    %v1900 = vadd.f32 %v1877, %v1884
    %v1901 = vadd.f32 %v1878, %v1884
    %vm1902 = vcmp.gt.f32.partialorder %v1886, 0.0
    %vm1903 = vcmp.gt.f32.partialorder %v1887, 0.0
    %vm1904 = vcmp.gt.f32.partialorder %v1888, 0.0
    %vm1905 = vcmp.gt.f32.partialorder %v1889, 0.0
    %vm1906 = vcmp.gt.f32.partialorder %v1890, 0.0
    %vm1907 = vcmp.gt.f32.partialorder %v1891, 0.0
    %vm1908 = vcmp.gt.f32.partialorder %v1892, 0.0
    %vm1909 = vcmp.gt.f32.partialorder %v1893, 0.0
    %vm1910 = vcmp.gt.f32.partialorder %v1894, 0.0
    %vm1911 = vcmp.gt.f32.partialorder %v1895, 0.0
    %vm1912 = vcmp.gt.f32.partialorder %v1896, 0.0
    %vm1913 = vcmp.gt.f32.partialorder %v1897, 0.0
    %vm1914 = vcmp.gt.f32.partialorder %v1898, 0.0
    %vm1915 = vcmp.gt.f32.partialorder %v1899, 0.0
    %vm1916 = vcmp.gt.f32.partialorder %v1900, 0.0
    %vm1917 = vcmp.gt.f32.partialorder %v1901, 0.0
    %v1918 = vmul.f32 %v1886, 0.2
    %v1919 = vmul.f32 %v1887, 0.2
    %v1920 = vmul.f32 %v1888, 0.2
    %v1921 = vmul.f32 %v1889, 0.2
    %v1922 = vmul.f32 %v1890, 0.2
    %v1923 = vmul.f32 %v1891, 0.2
    %v1924 = vmul.f32 %v1892, 0.2
    %v1925 = vmul.f32 %v1893, 0.2
    %v1926 = vmul.f32 %v1894, 0.2
    %v1927 = vmul.f32 %v1895, 0.2
    %v1928 = vmul.f32 %v1896, 0.2
    %v1929 = vmul.f32 %v1897, 0.2
    %v1930 = vmul.f32 %v1898, 0.2
    %v1931 = vmul.f32 %v1899, 0.2
    %v1932 = vmul.f32 %v1900, 0.2
    %v1933 = vmul.f32 %v1901, 0.2
    %v1934 = vsel %vm1902, %v1886, %v1918
    %v1935 = vsel %vm1903, %v1887, %v1919
    %v1936 = vsel %vm1904, %v1888, %v1920
    %v1937 = vsel %vm1905, %v1889, %v1921
    %v1938 = vsel %vm1906, %v1890, %v1922
    %v1939 = vsel %vm1907, %v1891, %v1923
    %v1940 = vsel %vm1908, %v1892, %v1924
    %v1941 = vsel %vm1909, %v1893, %v1925
    %v1942 = vsel %vm1910, %v1894, %v1926
    %v1943 = vsel %vm1911, %v1895, %v1927
    %v1944 = vsel %vm1912, %v1896, %v1928
    %v1945 = vsel %vm1913, %v1897, %v1929
    %v1946 = vsel %vm1914, %v1898, %v1930
    %v1947 = vsel %vm1915, %v1899, %v1931
    %v1948 = vsel %vm1916, %v1900, %v1932
    %v1949 = vsel %vm1917, %v1901, %v1933
    %v1950 = vpack.c.bf16 %v1935, %v1934
    %v1951 = vpack.c.bf16 %v1937, %v1936
    %v1952 = vpack.c.bf16 %v1939, %v1938
    %v1953 = vpack.c.bf16 %v1941, %v1940
    %v1954 = vpack.c.bf16 %v1943, %v1942
    %v1955 = vpack.c.bf16 %v1945, %v1944
    %v1956 = vpack.c.bf16 %v1947, %v1946
    %v1957 = vpack.c.bf16 %v1949, %v1948
    %v1958 = vld [vmem:[%s4] sm:$0xf]
    %v1959 = vld [vmem:[%s4 + $0x4] sm:$0xf]
    %v1960 = vld [vmem:[%s4 + $0x8] sm:$0xf]
    %v1961 = vld [vmem:[%s4 + $0xc] sm:$0xf]
    %v1966 = vunpack.c.l.b16 %v1958
    %v1967 = vunpack.c.l.b16 %v1959
    %v1968 = vunpack.c.l.b16 %v1960
    %v1969 = vunpack.c.l.b16 %v1961
    %v1970 = vpack.c.b16 %v1967, %v1966
    %v1971 = vpack.c.b16 %v1969, %v1968
    %vm1974 = vcmask 261120
    %v1976 = vsel %vm1974, %v1950, 0
    %v1979 = vsel %vm1974, %v1951, 0
    %v1982 = vsel %vm1974, %v1952, 0
    %v1985 = vsel %vm1974, %v1953, 0
    %v1988 = vsel %vm1974, %v1954, 0
    %v1991 = vsel %vm1974, %v1955, 0
    %v1994 = vsel %vm1974, %v1956, 0
    %v1997 = vsel %vm1974, %v1957, 0
    %1999 = vmatprep.subr.bf16.mxu0 0
    %2000 = vmatpush1.bf16.msra.mxu0 %v1970
    %2001 = vmatprep.subr.bf16.mxu0 0
    %2002 = vmatpush1.bf16.msra.mxu0 %v1971
    %2003 = vmatprep.subr.bf16.mxu0 0
    %2004 = vmatpush1.bf16.msra.mxu0 0
    %2005 = vmatprep.subr.bf16.mxu0 0
    %2006 = vmatpush1.bf16.msra.mxu0 0
    %2007 = vmatprep.subr.bf16.mxu0 0
    %2008 = vmatpush1.bf16.msra.mxu0 0
    %2009 = vmatprep.subr.bf16.mxu0 0
    %2010 = vmatpush1.bf16.msra.mxu0 0
    %2011 = vmatprep.subr.bf16.mxu0 0
    %2012 = vmatpush1.bf16.msra.mxu0 0
    %2013 = vmatprep.subr.bf16.mxu0 0
    %2014 = vmatpush1.bf16.msra.mxu0 0
    %2015 = vmatprep.subr.bf16.mxu0 0
    %2016 = vmatpush1.bf16.msra.mxu0 0
    %2017 = vmatprep.subr.bf16.mxu0 0
    %2018 = vmatpush1.bf16.msra.mxu0 0
    %2019 = vmatprep.subr.bf16.mxu0 0
    %2020 = vmatpush1.bf16.msra.mxu0 0
    %2021 = vmatprep.subr.bf16.mxu0 0
    %2022 = vmatpush1.bf16.msra.mxu0 0
    %2023 = vmatprep.subr.bf16.mxu0 0
    %2024 = vmatpush1.bf16.msra.mxu0 0
    %2025 = vmatprep.subr.bf16.mxu0 0
    %2026 = vmatpush1.bf16.msra.mxu0 0
    %2027 = vmatprep.subr.bf16.mxu0 0
    %2028 = vmatpush1.bf16.msra.mxu0 0
    %2029 = vmatprep.subr.bf16.mxu0 0
    %2030 = vmatpush1.bf16.msra.mxu0 0
    %2031 = vmatprep.mubr.bf16.mxu0 0
    %2032 = vmatmul.mubr.bf16.gmra.mrb[0].mxu0 %v1976
    %v2033 = vpop.f32.mrb[0].mxu0
    %v2034 = vadd.f32 0.0, %v2033
    %v2035 = vpop.f32.mrb[0].mxu0
    %v2036 = vpop.f32.mrb[0].mxu0
    %v2037 = vadd.f32 0.0, %v2036
    %v2038 = vpop.f32.mrb[0].mxu0
    %2039 = vmatprep.mubr.bf16.mxu0 0
    %2040 = vmatmul.mubr.bf16.gmra.mrb[0].mxu0 %v1979
    %v2041 = vpop.f32.mrb[0].mxu0
    %v2042 = vadd.f32 0.0, %v2041
    %v2043 = vpop.f32.mrb[0].mxu0
    %v2044 = vpop.f32.mrb[0].mxu0
    %v2045 = vadd.f32 0.0, %v2044
    %v2046 = vpop.f32.mrb[0].mxu0
    %2047 = vmatprep.mubr.bf16.mxu0 0
    %2048 = vmatmul.mubr.bf16.gmra.mrb[0].mxu0 %v1982
    %v2049 = vpop.f32.mrb[0].mxu0
    %v2050 = vadd.f32 0.0, %v2049
    %v2051 = vpop.f32.mrb[0].mxu0
    %v2052 = vpop.f32.mrb[0].mxu0
    %v2053 = vadd.f32 0.0, %v2052
    %v2054 = vpop.f32.mrb[0].mxu0
    %2055 = vmatprep.mubr.bf16.mxu0 0
    %2056 = vmatmul.mubr.bf16.gmra.mrb[0].mxu0 %v1985
    %v2057 = vpop.f32.mrb[0].mxu0
    %v2058 = vadd.f32 0.0, %v2057
    %v2059 = vpop.f32.mrb[0].mxu0
    %v2060 = vpop.f32.mrb[0].mxu0
    %v2061 = vadd.f32 0.0, %v2060
    %v2062 = vpop.f32.mrb[0].mxu0
    %2063 = vmatprep.mubr.bf16.mxu0 0
    %2064 = vmatmul.mubr.bf16.gmra.mrb[0].mxu0 %v1988
    %v2065 = vpop.f32.mrb[0].mxu0
    %v2066 = vadd.f32 0.0, %v2065
    %v2067 = vpop.f32.mrb[0].mxu0
    %v2068 = vpop.f32.mrb[0].mxu0
    %v2069 = vadd.f32 0.0, %v2068
    %v2070 = vpop.f32.mrb[0].mxu0
    %2071 = vmatprep.mubr.bf16.mxu0 0
    %2072 = vmatmul.mubr.bf16.gmra.mrb[0].mxu0 %v1991
    %v2073 = vpop.f32.mrb[0].mxu0
    %v2074 = vadd.f32 0.0, %v2073
    %v2075 = vpop.f32.mrb[0].mxu0
    %v2076 = vpop.f32.mrb[0].mxu0
    %v2077 = vadd.f32 0.0, %v2076
    %v2078 = vpop.f32.mrb[0].mxu0
    %2079 = vmatprep.mubr.bf16.mxu0 0
    %2080 = vmatmul.mubr.bf16.gmra.mrb[0].mxu0 %v1994
    %v2081 = vpop.f32.mrb[0].mxu0
    %v2082 = vadd.f32 0.0, %v2081
    %v2083 = vpop.f32.mrb[0].mxu0
    %v2084 = vpop.f32.mrb[0].mxu0
    %v2085 = vadd.f32 0.0, %v2084
    %v2086 = vpop.f32.mrb[0].mxu0
    %2087 = vmatprep.mubr.bf16.mxu0 0
    %2088 = vmatmul.mubr.bf16.gmra.mrb[0].mxu0 %v1997
    %v2089 = vpop.f32.mrb[0].mxu0
    %v2090 = vadd.f32 0.0, %v2089
    %v2091 = vpop.f32.mrb[0].mxu0
    %v2092 = vpop.f32.mrb[0].mxu0
    %v2093 = vadd.f32 0.0, %v2092
    %v2094 = vpop.f32.mrb[0].mxu0
    %2095 = vdwg.mxu0
    %v2096 = vlaneseq
    %v2097 = vshrl.u32 %v2096, 7
    %v2098 = vsub.s32 0, %v2097
    %v2099 = vrot.slane %v2034, %v2098
    %v2100 = vlaneseq
    %v2101 = vshrl.u32 %v2100, 7
    %v2102 = vsub.s32 0, %v2101
    %v2103 = vrot.slane %v2037, %v2102
    %v2104 = vlaneseq
    %v2105 = vshrl.u32 %v2104, 7
    %v2106 = vsub.s32 0, %v2105
    %v2107 = vrot.slane %v2042, %v2106
    %v2108 = vlaneseq
    %v2109 = vshrl.u32 %v2108, 7
    %v2110 = vsub.s32 0, %v2109
    %v2111 = vrot.slane %v2045, %v2110
    %v2112 = vlaneseq
    %v2113 = vshrl.u32 %v2112, 7
    %v2114 = vsub.s32 0, %v2113
    %v2115 = vrot.slane %v2050, %v2114
    %v2116 = vlaneseq
    %v2117 = vshrl.u32 %v2116, 7
    %v2118 = vsub.s32 0, %v2117
    %v2119 = vrot.slane %v2053, %v2118
    %v2120 = vlaneseq
    %v2121 = vshrl.u32 %v2120, 7
    %v2122 = vsub.s32 0, %v2121
    %v2123 = vrot.slane %v2058, %v2122
    %v2124 = vlaneseq
    %v2125 = vshrl.u32 %v2124, 7
    %v2126 = vsub.s32 0, %v2125
    %v2127 = vrot.slane %v2061, %v2126
    %v2128 = vlaneseq
    %v2129 = vshrl.u32 %v2128, 7
    %v2130 = vsub.s32 0, %v2129
    %v2131 = vrot.slane %v2066, %v2130
    %v2132 = vlaneseq
    %v2133 = vshrl.u32 %v2132, 7
    %v2134 = vsub.s32 0, %v2133
    %v2135 = vrot.slane %v2069, %v2134
    %v2136 = vlaneseq
    %v2137 = vshrl.u32 %v2136, 7
    %v2138 = vsub.s32 0, %v2137
    %v2139 = vrot.slane %v2074, %v2138
    %v2140 = vlaneseq
    %v2141 = vshrl.u32 %v2140, 7
    %v2142 = vsub.s32 0, %v2141
    %v2143 = vrot.slane %v2077, %v2142
    %v2144 = vlaneseq
    %v2145 = vshrl.u32 %v2144, 7
    %v2146 = vsub.s32 0, %v2145
    %v2147 = vrot.slane %v2082, %v2146
    %v2148 = vlaneseq
    %v2149 = vshrl.u32 %v2148, 7
    %v2150 = vsub.s32 0, %v2149
    %v2151 = vrot.slane %v2085, %v2150
    %v2152 = vlaneseq
    %v2153 = vshrl.u32 %v2152, 7
    %v2154 = vsub.s32 0, %v2153
    %v2155 = vrot.slane %v2090, %v2154
    %v2156 = vlaneseq
    %v2157 = vshrl.u32 %v2156, 7
    %v2158 = vsub.s32 0, %v2157
    %v2159 = vrot.slane %v2093, %v2158
    %v2160 = vmul.f32 %v602, %v2099
    %v2161 = vmul.f32 %v607, %v2103
    %v2162 = vmul.f32 %v612, %v2107
    %v2163 = vmul.f32 %v617, %v2111
    %v2164 = vmul.f32 %v622, %v2115
    %v2165 = vmul.f32 %v627, %v2119
    %v2166 = vmul.f32 %v632, %v2123
    %v2167 = vmul.f32 %v637, %v2127
    %v2168 = vmul.f32 %v642, %v2131
    %v2169 = vmul.f32 %v647, %v2135
    %v2170 = vmul.f32 %v652, %v2139
    %v2171 = vmul.f32 %v657, %v2143
    %v2172 = vmul.f32 %v662, %v2147
    %v2173 = vmul.f32 %v667, %v2151
    %v2174 = vmul.f32 %v672, %v2155
    %v2175 = vmul.f32 %v677, %v2159
    %v2176 = vlaneseq
    %v2177 = vshrl.u32 %v2176, 7
    %v2178 = vsub.s32 1, %v2177
    %v2179 = vrot.slane %v2034, %v2178
    %v2180 = vlaneseq
    %v2181 = vshrl.u32 %v2180, 7
    %v2182 = vsub.s32 1, %v2181
    %v2183 = vrot.slane %v2037, %v2182
    %v2184 = vlaneseq
    %v2185 = vshrl.u32 %v2184, 7
    %v2186 = vsub.s32 1, %v2185
    %v2187 = vrot.slane %v2042, %v2186
    %v2188 = vlaneseq
    %v2189 = vshrl.u32 %v2188, 7
    %v2190 = vsub.s32 1, %v2189
    %v2191 = vrot.slane %v2045, %v2190
    %v2192 = vlaneseq
    %v2193 = vshrl.u32 %v2192, 7
    %v2194 = vsub.s32 1, %v2193
    %v2195 = vrot.slane %v2050, %v2194
    %v2196 = vlaneseq
    %v2197 = vshrl.u32 %v2196, 7
    %v2198 = vsub.s32 1, %v2197
    %v2199 = vrot.slane %v2053, %v2198
    %v2200 = vlaneseq
    %v2201 = vshrl.u32 %v2200, 7
    %v2202 = vsub.s32 1, %v2201
    %v2203 = vrot.slane %v2058, %v2202
    %v2204 = vlaneseq
    %v2205 = vshrl.u32 %v2204, 7
    %v2206 = vsub.s32 1, %v2205
    %v2207 = vrot.slane %v2061, %v2206
    %v2208 = vlaneseq
    %v2209 = vshrl.u32 %v2208, 7
    %v2210 = vsub.s32 1, %v2209
    %v2211 = vrot.slane %v2066, %v2210
    %v2212 = vlaneseq
    %v2213 = vshrl.u32 %v2212, 7
    %v2214 = vsub.s32 1, %v2213
    %v2215 = vrot.slane %v2069, %v2214
    %v2216 = vlaneseq
    %v2217 = vshrl.u32 %v2216, 7
    %v2218 = vsub.s32 1, %v2217
    %v2219 = vrot.slane %v2074, %v2218
    %v2220 = vlaneseq
    %v2221 = vshrl.u32 %v2220, 7
    %v2222 = vsub.s32 1, %v2221
    %v2223 = vrot.slane %v2077, %v2222
    %v2224 = vlaneseq
    %v2225 = vshrl.u32 %v2224, 7
    %v2226 = vsub.s32 1, %v2225
    %v2227 = vrot.slane %v2082, %v2226
    %v2228 = vlaneseq
    %v2229 = vshrl.u32 %v2228, 7
    %v2230 = vsub.s32 1, %v2229
    %v2231 = vrot.slane %v2085, %v2230
    %v2232 = vlaneseq
    %v2233 = vshrl.u32 %v2232, 7
    %v2234 = vsub.s32 1, %v2233
    %v2235 = vrot.slane %v2090, %v2234
    %v2236 = vlaneseq
    %v2237 = vshrl.u32 %v2236, 7
    %v2238 = vsub.s32 1, %v2237
    %v2239 = vrot.slane %v2093, %v2238
    %v2240 = vmul.f32 %v761, %v2179
    %v2241 = vmul.f32 %v765, %v2183
    %v2242 = vmul.f32 %v769, %v2187
    %v2243 = vmul.f32 %v773, %v2191
    %v2244 = vmul.f32 %v777, %v2195
    %v2245 = vmul.f32 %v781, %v2199
    %v2246 = vmul.f32 %v785, %v2203
    %v2247 = vmul.f32 %v789, %v2207
    %v2248 = vmul.f32 %v793, %v2211
    %v2249 = vmul.f32 %v797, %v2215
    %v2250 = vmul.f32 %v801, %v2219
    %v2251 = vmul.f32 %v805, %v2223
    %v2252 = vmul.f32 %v809, %v2227
    %v2253 = vmul.f32 %v813, %v2231
    %v2254 = vmul.f32 %v817, %v2235
    %v2255 = vmul.f32 %v821, %v2239
    %v2256 = vadd.f32 %v2160, %v2240
    %v2257 = vadd.f32 %v2161, %v2241
    %v2258 = vadd.f32 %v2162, %v2242
    %v2259 = vadd.f32 %v2163, %v2243
    %v2260 = vadd.f32 %v2164, %v2244
    %v2261 = vadd.f32 %v2165, %v2245
    %v2262 = vadd.f32 %v2166, %v2246
    %v2263 = vadd.f32 %v2167, %v2247
    %v2264 = vadd.f32 %v2168, %v2248
    %v2265 = vadd.f32 %v2169, %v2249
    %v2266 = vadd.f32 %v2170, %v2250
    %v2267 = vadd.f32 %v2171, %v2251
    %v2268 = vadd.f32 %v2172, %v2252
    %v2269 = vadd.f32 %v2173, %v2253
    %v2270 = vadd.f32 %v2174, %v2254
    %v2271 = vadd.f32 %v2175, %v2255
    %v2272 = vlaneseq
    %v2273 = vshrl.u32 %v2272, 7
    %v2274 = vsub.s32 2, %v2273
    %v2275 = vrot.slane %v2034, %v2274
    %v2276 = vlaneseq
    %v2277 = vshrl.u32 %v2276, 7
    %v2278 = vsub.s32 2, %v2277
    %v2279 = vrot.slane %v2037, %v2278
    %v2280 = vlaneseq
    %v2281 = vshrl.u32 %v2280, 7
    %v2282 = vsub.s32 2, %v2281
    %v2283 = vrot.slane %v2042, %v2282
    %v2284 = vlaneseq
    %v2285 = vshrl.u32 %v2284, 7
    %v2286 = vsub.s32 2, %v2285
    %v2287 = vrot.slane %v2045, %v2286
    %v2288 = vlaneseq
    %v2289 = vshrl.u32 %v2288, 7
    %v2290 = vsub.s32 2, %v2289
    %v2291 = vrot.slane %v2050, %v2290
    %v2292 = vlaneseq
    %v2293 = vshrl.u32 %v2292, 7
    %v2294 = vsub.s32 2, %v2293
    %v2295 = vrot.slane %v2053, %v2294
    %v2296 = vlaneseq
    %v2297 = vshrl.u32 %v2296, 7
    %v2298 = vsub.s32 2, %v2297
    %v2299 = vrot.slane %v2058, %v2298
    %v2300 = vlaneseq
    %v2301 = vshrl.u32 %v2300, 7
    %v2302 = vsub.s32 2, %v2301
    %v2303 = vrot.slane %v2061, %v2302
    %v2304 = vlaneseq
    %v2305 = vshrl.u32 %v2304, 7
    %v2306 = vsub.s32 2, %v2305
    %v2307 = vrot.slane %v2066, %v2306
    %v2308 = vlaneseq
    %v2309 = vshrl.u32 %v2308, 7
    %v2310 = vsub.s32 2, %v2309
    %v2311 = vrot.slane %v2069, %v2310
    %v2312 = vlaneseq
    %v2313 = vshrl.u32 %v2312, 7
    %v2314 = vsub.s32 2, %v2313
    %v2315 = vrot.slane %v2074, %v2314
    %v2316 = vlaneseq
    %v2317 = vshrl.u32 %v2316, 7
    %v2318 = vsub.s32 2, %v2317
    %v2319 = vrot.slane %v2077, %v2318
    %v2320 = vlaneseq
    %v2321 = vshrl.u32 %v2320, 7
    %v2322 = vsub.s32 2, %v2321
    %v2323 = vrot.slane %v2082, %v2322
    %v2324 = vlaneseq
    %v2325 = vshrl.u32 %v2324, 7
    %v2326 = vsub.s32 2, %v2325
    %v2327 = vrot.slane %v2085, %v2326
    %v2328 = vlaneseq
    %v2329 = vshrl.u32 %v2328, 7
    %v2330 = vsub.s32 2, %v2329
    %v2331 = vrot.slane %v2090, %v2330
    %v2332 = vlaneseq
    %v2333 = vshrl.u32 %v2332, 7
    %v2334 = vsub.s32 2, %v2333
    %v2335 = vrot.slane %v2093, %v2334
    %v2336 = vmul.f32 %v921, %v2275
    %v2337 = vmul.f32 %v925, %v2279
    %v2338 = vmul.f32 %v929, %v2283
    %v2339 = vmul.f32 %v933, %v2287
    %v2340 = vmul.f32 %v937, %v2291
    %v2341 = vmul.f32 %v941, %v2295
    %v2342 = vmul.f32 %v945, %v2299
    %v2343 = vmul.f32 %v949, %v2303
    %v2344 = vmul.f32 %v953, %v2307
    %v2345 = vmul.f32 %v957, %v2311
    %v2346 = vmul.f32 %v961, %v2315
    %v2347 = vmul.f32 %v965, %v2319
    %v2348 = vmul.f32 %v969, %v2323
    %v2349 = vmul.f32 %v973, %v2327
    %v2350 = vmul.f32 %v977, %v2331
    %v2351 = vmul.f32 %v981, %v2335
    %v2352 = vadd.f32 %v2256, %v2336
    %v2353 = vadd.f32 %v2257, %v2337
    %v2354 = vadd.f32 %v2258, %v2338
    %v2355 = vadd.f32 %v2259, %v2339
    %v2356 = vadd.f32 %v2260, %v2340
    %v2357 = vadd.f32 %v2261, %v2341
    %v2358 = vadd.f32 %v2262, %v2342
    %v2359 = vadd.f32 %v2263, %v2343
    %v2360 = vadd.f32 %v2264, %v2344
    %v2361 = vadd.f32 %v2265, %v2345
    %v2362 = vadd.f32 %v2266, %v2346
    %v2363 = vadd.f32 %v2267, %v2347
    %v2364 = vadd.f32 %v2268, %v2348
    %v2365 = vadd.f32 %v2269, %v2349
    %v2366 = vadd.f32 %v2270, %v2350
    %v2367 = vadd.f32 %v2271, %v2351
    %v2368 = vlaneseq
    %v2369 = vshrl.u32 %v2368, 7
    %v2370 = vsub.s32 3, %v2369
    %v2371 = vrot.slane %v2034, %v2370
    %v2372 = vlaneseq
    %v2373 = vshrl.u32 %v2372, 7
    %v2374 = vsub.s32 3, %v2373
    %v2375 = vrot.slane %v2037, %v2374
    %v2376 = vlaneseq
    %v2377 = vshrl.u32 %v2376, 7
    %v2378 = vsub.s32 3, %v2377
    %v2379 = vrot.slane %v2042, %v2378
    %v2380 = vlaneseq
    %v2381 = vshrl.u32 %v2380, 7
    %v2382 = vsub.s32 3, %v2381
    %v2383 = vrot.slane %v2045, %v2382
    %v2384 = vlaneseq
    %v2385 = vshrl.u32 %v2384, 7
    %v2386 = vsub.s32 3, %v2385
    %v2387 = vrot.slane %v2050, %v2386
    %v2388 = vlaneseq
    %v2389 = vshrl.u32 %v2388, 7
    %v2390 = vsub.s32 3, %v2389
    %v2391 = vrot.slane %v2053, %v2390
    %v2392 = vlaneseq
    %v2393 = vshrl.u32 %v2392, 7
    %v2394 = vsub.s32 3, %v2393
    %v2395 = vrot.slane %v2058, %v2394
    %v2396 = vlaneseq
    %v2397 = vshrl.u32 %v2396, 7
    %v2398 = vsub.s32 3, %v2397
    %v2399 = vrot.slane %v2061, %v2398
    %v2400 = vlaneseq
    %v2401 = vshrl.u32 %v2400, 7
    %v2402 = vsub.s32 3, %v2401
    %v2403 = vrot.slane %v2066, %v2402
    %v2404 = vlaneseq
    %v2405 = vshrl.u32 %v2404, 7
    %v2406 = vsub.s32 3, %v2405
    %v2407 = vrot.slane %v2069, %v2406
    %v2408 = vlaneseq
    %v2409 = vshrl.u32 %v2408, 7
    %v2410 = vsub.s32 3, %v2409
    %v2411 = vrot.slane %v2074, %v2410
    %v2412 = vlaneseq
    %v2413 = vshrl.u32 %v2412, 7
    %v2414 = vsub.s32 3, %v2413
    %v2415 = vrot.slane %v2077, %v2414
    %v2416 = vlaneseq
    %v2417 = vshrl.u32 %v2416, 7
    %v2418 = vsub.s32 3, %v2417
    %v2419 = vrot.slane %v2082, %v2418
    %v2420 = vlaneseq
    %v2421 = vshrl.u32 %v2420, 7
    %v2422 = vsub.s32 3, %v2421
    %v2423 = vrot.slane %v2085, %v2422
    %v2424 = vlaneseq
    %v2425 = vshrl.u32 %v2424, 7
    %v2426 = vsub.s32 3, %v2425
    %v2427 = vrot.slane %v2090, %v2426
    %v2428 = vlaneseq
    %v2429 = vshrl.u32 %v2428, 7
    %v2430 = vsub.s32 3, %v2429
    %v2431 = vrot.slane %v2093, %v2430
    %v2432 = vmul.f32 %v1081, %v2371
    %v2433 = vmul.f32 %v1085, %v2375
    %v2434 = vmul.f32 %v1089, %v2379
    %v2435 = vmul.f32 %v1093, %v2383
    %v2436 = vmul.f32 %v1097, %v2387
    %v2437 = vmul.f32 %v1101, %v2391
    %v2438 = vmul.f32 %v1105, %v2395
    %v2439 = vmul.f32 %v1109, %v2399
    %v2440 = vmul.f32 %v1113, %v2403
    %v2441 = vmul.f32 %v1117, %v2407
    %v2442 = vmul.f32 %v1121, %v2411
    %v2443 = vmul.f32 %v1125, %v2415
    %v2444 = vmul.f32 %v1129, %v2419
    %v2445 = vmul.f32 %v1133, %v2423
    %v2446 = vmul.f32 %v1137, %v2427
    %v2447 = vmul.f32 %v1141, %v2431
    %v2448 = vadd.f32 %v2352, %v2432
    %v2449 = vadd.f32 %v2353, %v2433
    %v2450 = vadd.f32 %v2354, %v2434
    %v2451 = vadd.f32 %v2355, %v2435
    %v2452 = vadd.f32 %v2356, %v2436
    %v2453 = vadd.f32 %v2357, %v2437
    %v2454 = vadd.f32 %v2358, %v2438
    %v2455 = vadd.f32 %v2359, %v2439
    %v2456 = vadd.f32 %v2360, %v2440
    %v2457 = vadd.f32 %v2361, %v2441
    %v2458 = vadd.f32 %v2362, %v2442
    %v2459 = vadd.f32 %v2363, %v2443
    %v2460 = vadd.f32 %v2364, %v2444
    %v2461 = vadd.f32 %v2365, %v2445
    %v2462 = vadd.f32 %v2366, %v2446
    %v2463 = vadd.f32 %v2367, %v2447
    %v2464 = vlaneseq
    %v2465 = vshrl.u32 %v2464, 7
    %v2466 = vsub.s32 4, %v2465
    %v2467 = vrot.slane %v2034, %v2466
    %v2468 = vlaneseq
    %v2469 = vshrl.u32 %v2468, 7
    %v2470 = vsub.s32 4, %v2469
    %v2471 = vrot.slane %v2037, %v2470
    %v2472 = vlaneseq
    %v2473 = vshrl.u32 %v2472, 7
    %v2474 = vsub.s32 4, %v2473
    %v2475 = vrot.slane %v2042, %v2474
    %v2476 = vlaneseq
    %v2477 = vshrl.u32 %v2476, 7
    %v2478 = vsub.s32 4, %v2477
    %v2479 = vrot.slane %v2045, %v2478
    %v2480 = vlaneseq
    %v2481 = vshrl.u32 %v2480, 7
    %v2482 = vsub.s32 4, %v2481
    %v2483 = vrot.slane %v2050, %v2482
    %v2484 = vlaneseq
    %v2485 = vshrl.u32 %v2484, 7
    %v2486 = vsub.s32 4, %v2485
    %v2487 = vrot.slane %v2053, %v2486
    %v2488 = vlaneseq
    %v2489 = vshrl.u32 %v2488, 7
    %v2490 = vsub.s32 4, %v2489
    %v2491 = vrot.slane %v2058, %v2490
    %v2492 = vlaneseq
    %v2493 = vshrl.u32 %v2492, 7
    %v2494 = vsub.s32 4, %v2493
    %v2495 = vrot.slane %v2061, %v2494
    %v2496 = vlaneseq
    %v2497 = vshrl.u32 %v2496, 7
    %v2498 = vsub.s32 4, %v2497
    %v2499 = vrot.slane %v2066, %v2498
    %v2500 = vlaneseq
    %v2501 = vshrl.u32 %v2500, 7
    %v2502 = vsub.s32 4, %v2501
    %v2503 = vrot.slane %v2069, %v2502
    %v2504 = vlaneseq
    %v2505 = vshrl.u32 %v2504, 7
    %v2506 = vsub.s32 4, %v2505
    %v2507 = vrot.slane %v2074, %v2506
    %v2508 = vlaneseq
    %v2509 = vshrl.u32 %v2508, 7
    %v2510 = vsub.s32 4, %v2509
    %v2511 = vrot.slane %v2077, %v2510
    %v2512 = vlaneseq
    %v2513 = vshrl.u32 %v2512, 7
    %v2514 = vsub.s32 4, %v2513
    %v2515 = vrot.slane %v2082, %v2514
    %v2516 = vlaneseq
    %v2517 = vshrl.u32 %v2516, 7
    %v2518 = vsub.s32 4, %v2517
    %v2519 = vrot.slane %v2085, %v2518
    %v2520 = vlaneseq
    %v2521 = vshrl.u32 %v2520, 7
    %v2522 = vsub.s32 4, %v2521
    %v2523 = vrot.slane %v2090, %v2522
    %v2524 = vlaneseq
    %v2525 = vshrl.u32 %v2524, 7
    %v2526 = vsub.s32 4, %v2525
    %v2527 = vrot.slane %v2093, %v2526
    %v2528 = vmul.f32 %v1241, %v2467
    %v2529 = vmul.f32 %v1245, %v2471
    %v2530 = vmul.f32 %v1249, %v2475
    %v2531 = vmul.f32 %v1253, %v2479
    %v2532 = vmul.f32 %v1257, %v2483
    %v2533 = vmul.f32 %v1261, %v2487
    %v2534 = vmul.f32 %v1265, %v2491
    %v2535 = vmul.f32 %v1269, %v2495
    %v2536 = vmul.f32 %v1273, %v2499
    %v2537 = vmul.f32 %v1277, %v2503
    %v2538 = vmul.f32 %v1281, %v2507
    %v2539 = vmul.f32 %v1285, %v2511
    %v2540 = vmul.f32 %v1289, %v2515
    %v2541 = vmul.f32 %v1293, %v2519
    %v2542 = vmul.f32 %v1297, %v2523
    %v2543 = vmul.f32 %v1301, %v2527
    %v2544 = vadd.f32 %v2448, %v2528
    %v2545 = vadd.f32 %v2449, %v2529
    %v2546 = vadd.f32 %v2450, %v2530
    %v2547 = vadd.f32 %v2451, %v2531
    %v2548 = vadd.f32 %v2452, %v2532
    %v2549 = vadd.f32 %v2453, %v2533
    %v2550 = vadd.f32 %v2454, %v2534
    %v2551 = vadd.f32 %v2455, %v2535
    %v2552 = vadd.f32 %v2456, %v2536
    %v2553 = vadd.f32 %v2457, %v2537
    %v2554 = vadd.f32 %v2458, %v2538
    %v2555 = vadd.f32 %v2459, %v2539
    %v2556 = vadd.f32 %v2460, %v2540
    %v2557 = vadd.f32 %v2461, %v2541
    %v2558 = vadd.f32 %v2462, %v2542
    %v2559 = vadd.f32 %v2463, %v2543
    %v2560 = vlaneseq
    %v2561 = vshrl.u32 %v2560, 7
    %v2562 = vsub.s32 5, %v2561
    %v2563 = vrot.slane %v2034, %v2562
    %v2564 = vlaneseq
    %v2565 = vshrl.u32 %v2564, 7
    %v2566 = vsub.s32 5, %v2565
    %v2567 = vrot.slane %v2037, %v2566
    %v2568 = vlaneseq
    %v2569 = vshrl.u32 %v2568, 7
    %v2570 = vsub.s32 5, %v2569
    %v2571 = vrot.slane %v2042, %v2570
    %v2572 = vlaneseq
    %v2573 = vshrl.u32 %v2572, 7
    %v2574 = vsub.s32 5, %v2573
    %v2575 = vrot.slane %v2045, %v2574
    %v2576 = vlaneseq
    %v2577 = vshrl.u32 %v2576, 7
    %v2578 = vsub.s32 5, %v2577
    %v2579 = vrot.slane %v2050, %v2578
    %v2580 = vlaneseq
    %v2581 = vshrl.u32 %v2580, 7
    %v2582 = vsub.s32 5, %v2581
    %v2583 = vrot.slane %v2053, %v2582
    %v2584 = vlaneseq
    %v2585 = vshrl.u32 %v2584, 7
    %v2586 = vsub.s32 5, %v2585
    %v2587 = vrot.slane %v2058, %v2586
    %v2588 = vlaneseq
    %v2589 = vshrl.u32 %v2588, 7
    %v2590 = vsub.s32 5, %v2589
    %v2591 = vrot.slane %v2061, %v2590
    %v2592 = vlaneseq
    %v2593 = vshrl.u32 %v2592, 7
    %v2594 = vsub.s32 5, %v2593
    %v2595 = vrot.slane %v2066, %v2594
    %v2596 = vlaneseq
    %v2597 = vshrl.u32 %v2596, 7
    %v2598 = vsub.s32 5, %v2597
    %v2599 = vrot.slane %v2069, %v2598
    %v2600 = vlaneseq
    %v2601 = vshrl.u32 %v2600, 7
    %v2602 = vsub.s32 5, %v2601
    %v2603 = vrot.slane %v2074, %v2602
    %v2604 = vlaneseq
    %v2605 = vshrl.u32 %v2604, 7
    %v2606 = vsub.s32 5, %v2605
    %v2607 = vrot.slane %v2077, %v2606
    %v2608 = vlaneseq
    %v2609 = vshrl.u32 %v2608, 7
    %v2610 = vsub.s32 5, %v2609
    %v2611 = vrot.slane %v2082, %v2610
    %v2612 = vlaneseq
    %v2613 = vshrl.u32 %v2612, 7
    %v2614 = vsub.s32 5, %v2613
    %v2615 = vrot.slane %v2085, %v2614
    %v2616 = vlaneseq
    %v2617 = vshrl.u32 %v2616, 7
    %v2618 = vsub.s32 5, %v2617
    %v2619 = vrot.slane %v2090, %v2618
    %v2620 = vlaneseq
    %v2621 = vshrl.u32 %v2620, 7
    %v2622 = vsub.s32 5, %v2621
    %v2623 = vrot.slane %v2093, %v2622
    %v2624 = vmul.f32 %v1401, %v2563
    %v2625 = vmul.f32 %v1405, %v2567
    %v2626 = vmul.f32 %v1409, %v2571
    %v2627 = vmul.f32 %v1413, %v2575
    %v2628 = vmul.f32 %v1417, %v2579
    %v2629 = vmul.f32 %v1421, %v2583
    %v2630 = vmul.f32 %v1425, %v2587
    %v2631 = vmul.f32 %v1429, %v2591
    %v2632 = vmul.f32 %v1433, %v2595
    %v2633 = vmul.f32 %v1437, %v2599
    %v2634 = vmul.f32 %v1441, %v2603
    %v2635 = vmul.f32 %v1445, %v2607
    %v2636 = vmul.f32 %v1449, %v2611
    %v2637 = vmul.f32 %v1453, %v2615
    %v2638 = vmul.f32 %v1457, %v2619
    %v2639 = vmul.f32 %v1461, %v2623
    %v2640 = vadd.f32 %v2544, %v2624
    %v2641 = vadd.f32 %v2545, %v2625
    %v2642 = vadd.f32 %v2546, %v2626
    %v2643 = vadd.f32 %v2547, %v2627
    %v2644 = vadd.f32 %v2548, %v2628
    %v2645 = vadd.f32 %v2549, %v2629
    %v2646 = vadd.f32 %v2550, %v2630
    %v2647 = vadd.f32 %v2551, %v2631
    %v2648 = vadd.f32 %v2552, %v2632
    %v2649 = vadd.f32 %v2553, %v2633
    %v2650 = vadd.f32 %v2554, %v2634
    %v2651 = vadd.f32 %v2555, %v2635
    %v2652 = vadd.f32 %v2556, %v2636
    %v2653 = vadd.f32 %v2557, %v2637
    %v2654 = vadd.f32 %v2558, %v2638
    %v2655 = vadd.f32 %v2559, %v2639
    %v2656 = vlaneseq
    %v2657 = vshrl.u32 %v2656, 7
    %v2658 = vsub.s32 6, %v2657
    %v2659 = vrot.slane %v2034, %v2658
    %v2660 = vlaneseq
    %v2661 = vshrl.u32 %v2660, 7
    %v2662 = vsub.s32 6, %v2661
    %v2663 = vrot.slane %v2037, %v2662
    %v2664 = vlaneseq
    %v2665 = vshrl.u32 %v2664, 7
    %v2666 = vsub.s32 6, %v2665
    %v2667 = vrot.slane %v2042, %v2666
    %v2668 = vlaneseq
    %v2669 = vshrl.u32 %v2668, 7
    %v2670 = vsub.s32 6, %v2669
    %v2671 = vrot.slane %v2045, %v2670
    %v2672 = vlaneseq
    %v2673 = vshrl.u32 %v2672, 7
    %v2674 = vsub.s32 6, %v2673
    %v2675 = vrot.slane %v2050, %v2674
    %v2676 = vlaneseq
    %v2677 = vshrl.u32 %v2676, 7
    %v2678 = vsub.s32 6, %v2677
    %v2679 = vrot.slane %v2053, %v2678
    %v2680 = vlaneseq
    %v2681 = vshrl.u32 %v2680, 7
    %v2682 = vsub.s32 6, %v2681
    %v2683 = vrot.slane %v2058, %v2682
    %v2684 = vlaneseq
    %v2685 = vshrl.u32 %v2684, 7
    %v2686 = vsub.s32 6, %v2685
    %v2687 = vrot.slane %v2061, %v2686
    %v2688 = vlaneseq
    %v2689 = vshrl.u32 %v2688, 7
    %v2690 = vsub.s32 6, %v2689
    %v2691 = vrot.slane %v2066, %v2690
    %v2692 = vlaneseq
    %v2693 = vshrl.u32 %v2692, 7
    %v2694 = vsub.s32 6, %v2693
    %v2695 = vrot.slane %v2069, %v2694
    %v2696 = vlaneseq
    %v2697 = vshrl.u32 %v2696, 7
    %v2698 = vsub.s32 6, %v2697
    %v2699 = vrot.slane %v2074, %v2698
    %v2700 = vlaneseq
    %v2701 = vshrl.u32 %v2700, 7
    %v2702 = vsub.s32 6, %v2701
    %v2703 = vrot.slane %v2077, %v2702
    %v2704 = vlaneseq
    %v2705 = vshrl.u32 %v2704, 7
    %v2706 = vsub.s32 6, %v2705
    %v2707 = vrot.slane %v2082, %v2706
    %v2708 = vlaneseq
    %v2709 = vshrl.u32 %v2708, 7
    %v2710 = vsub.s32 6, %v2709
    %v2711 = vrot.slane %v2085, %v2710
    %v2712 = vlaneseq
    %v2713 = vshrl.u32 %v2712, 7
    %v2714 = vsub.s32 6, %v2713
    %v2715 = vrot.slane %v2090, %v2714
    %v2716 = vlaneseq
    %v2717 = vshrl.u32 %v2716, 7
    %v2718 = vsub.s32 6, %v2717
    %v2719 = vrot.slane %v2093, %v2718
    %v2720 = vmul.f32 %v1561, %v2659
    %v2721 = vmul.f32 %v1565, %v2663
    %v2722 = vmul.f32 %v1569, %v2667
    %v2723 = vmul.f32 %v1573, %v2671
    %v2724 = vmul.f32 %v1577, %v2675
    %v2725 = vmul.f32 %v1581, %v2679
    %v2726 = vmul.f32 %v1585, %v2683
    %v2727 = vmul.f32 %v1589, %v2687
    %v2728 = vmul.f32 %v1593, %v2691
    %v2729 = vmul.f32 %v1597, %v2695
    %v2730 = vmul.f32 %v1601, %v2699
    %v2731 = vmul.f32 %v1605, %v2703
    %v2732 = vmul.f32 %v1609, %v2707
    %v2733 = vmul.f32 %v1613, %v2711
    %v2734 = vmul.f32 %v1617, %v2715
    %v2735 = vmul.f32 %v1621, %v2719
    %v2736 = vadd.f32 %v2640, %v2720
    %v2737 = vadd.f32 %v2641, %v2721
    %v2738 = vadd.f32 %v2642, %v2722
    %v2739 = vadd.f32 %v2643, %v2723
    %v2740 = vadd.f32 %v2644, %v2724
    %v2741 = vadd.f32 %v2645, %v2725
    %v2742 = vadd.f32 %v2646, %v2726
    %v2743 = vadd.f32 %v2647, %v2727
    %v2744 = vadd.f32 %v2648, %v2728
    %v2745 = vadd.f32 %v2649, %v2729
    %v2746 = vadd.f32 %v2650, %v2730
    %v2747 = vadd.f32 %v2651, %v2731
    %v2748 = vadd.f32 %v2652, %v2732
    %v2749 = vadd.f32 %v2653, %v2733
    %v2750 = vadd.f32 %v2654, %v2734
    %v2751 = vadd.f32 %v2655, %v2735
    %v2752 = vlaneseq
    %v2753 = vshrl.u32 %v2752, 7
    %v2754 = vsub.s32 7, %v2753
    %v2755 = vrot.slane %v2034, %v2754
    %v2756 = vlaneseq
    %v2757 = vshrl.u32 %v2756, 7
    %v2758 = vsub.s32 7, %v2757
    %v2759 = vrot.slane %v2037, %v2758
    %v2760 = vlaneseq
    %v2761 = vshrl.u32 %v2760, 7
    %v2762 = vsub.s32 7, %v2761
    %v2763 = vrot.slane %v2042, %v2762
    %v2764 = vlaneseq
    %v2765 = vshrl.u32 %v2764, 7
    %v2766 = vsub.s32 7, %v2765
    %v2767 = vrot.slane %v2045, %v2766
    %v2768 = vlaneseq
    %v2769 = vshrl.u32 %v2768, 7
    %v2770 = vsub.s32 7, %v2769
    %v2771 = vrot.slane %v2050, %v2770
    %v2772 = vlaneseq
    %v2773 = vshrl.u32 %v2772, 7
    %v2774 = vsub.s32 7, %v2773
    %v2775 = vrot.slane %v2053, %v2774
    %v2776 = vlaneseq
    %v2777 = vshrl.u32 %v2776, 7
    %v2778 = vsub.s32 7, %v2777
    %v2779 = vrot.slane %v2058, %v2778
    %v2780 = vlaneseq
    %v2781 = vshrl.u32 %v2780, 7
    %v2782 = vsub.s32 7, %v2781
    %v2783 = vrot.slane %v2061, %v2782
    %v2784 = vlaneseq
    %v2785 = vshrl.u32 %v2784, 7
    %v2786 = vsub.s32 7, %v2785
    %v2787 = vrot.slane %v2066, %v2786
    %v2788 = vlaneseq
    %v2789 = vshrl.u32 %v2788, 7
    %v2790 = vsub.s32 7, %v2789
    %v2791 = vrot.slane %v2069, %v2790
    %v2792 = vlaneseq
    %v2793 = vshrl.u32 %v2792, 7
    %v2794 = vsub.s32 7, %v2793
    %v2795 = vrot.slane %v2074, %v2794
    %v2796 = vlaneseq
    %v2797 = vshrl.u32 %v2796, 7
    %v2798 = vsub.s32 7, %v2797
    %v2799 = vrot.slane %v2077, %v2798
    %v2800 = vlaneseq
    %v2801 = vshrl.u32 %v2800, 7
    %v2802 = vsub.s32 7, %v2801
    %v2803 = vrot.slane %v2082, %v2802
    %v2804 = vlaneseq
    %v2805 = vshrl.u32 %v2804, 7
    %v2806 = vsub.s32 7, %v2805
    %v2807 = vrot.slane %v2085, %v2806
    %v2808 = vlaneseq
    %v2809 = vshrl.u32 %v2808, 7
    %v2810 = vsub.s32 7, %v2809
    %v2811 = vrot.slane %v2090, %v2810
    %v2812 = vlaneseq
    %v2813 = vshrl.u32 %v2812, 7
    %v2814 = vsub.s32 7, %v2813
    %v2815 = vrot.slane %v2093, %v2814
    %v2816 = vmul.f32 %v1721, %v2755
    %v2817 = vmul.f32 %v1725, %v2759
    %v2818 = vmul.f32 %v1729, %v2763
    %v2819 = vmul.f32 %v1733, %v2767
    %v2820 = vmul.f32 %v1737, %v2771
    %v2821 = vmul.f32 %v1741, %v2775
    %v2822 = vmul.f32 %v1745, %v2779
    %v2823 = vmul.f32 %v1749, %v2783
    %v2824 = vmul.f32 %v1753, %v2787
    %v2825 = vmul.f32 %v1757, %v2791
    %v2826 = vmul.f32 %v1761, %v2795
    %v2827 = vmul.f32 %v1765, %v2799
    %v2828 = vmul.f32 %v1769, %v2803
    %v2829 = vmul.f32 %v1773, %v2807
    %v2830 = vmul.f32 %v1777, %v2811
    %v2831 = vmul.f32 %v1781, %v2815
    %v2832 = vadd.f32 %v2736, %v2816
    %v2833 = vadd.f32 %v2737, %v2817
    %v2834 = vadd.f32 %v2738, %v2818
    %v2835 = vadd.f32 %v2739, %v2819
    %v2836 = vadd.f32 %v2740, %v2820
    %v2837 = vadd.f32 %v2741, %v2821
    %v2838 = vadd.f32 %v2742, %v2822
    %v2839 = vadd.f32 %v2743, %v2823
    %v2840 = vadd.f32 %v2744, %v2824
    %v2841 = vadd.f32 %v2745, %v2825
    %v2842 = vadd.f32 %v2746, %v2826
    %v2843 = vadd.f32 %v2747, %v2827
    %v2844 = vadd.f32 %v2748, %v2828
    %v2845 = vadd.f32 %v2749, %v2829
    %v2846 = vadd.f32 %v2750, %v2830
    %v2847 = vadd.f32 %v2751, %v2831
    %v2848 = vld [vmem:[%s5] sm:$0x1]
    %v2850 = vlaneseq
    %v2851 = vshrl.u32 %v2850, 7
    %v2852 = vsub.s32 0, %v2851
    %v2853 = vrot.slane %v2848, %v2852
    %v2855 = vadd.f32 %v2832, %v2853
    %v2856 = vadd.f32 %v2833, %v2853
    %v2857 = vadd.f32 %v2834, %v2853
    %v2858 = vadd.f32 %v2835, %v2853
    %v2859 = vadd.f32 %v2836, %v2853
    %v2860 = vadd.f32 %v2837, %v2853
    %v2861 = vadd.f32 %v2838, %v2853
    %v2862 = vadd.f32 %v2839, %v2853
    %v2863 = vadd.f32 %v2840, %v2853
    %v2864 = vadd.f32 %v2841, %v2853
    %v2865 = vadd.f32 %v2842, %v2853
    %v2866 = vadd.f32 %v2843, %v2853
    %v2867 = vadd.f32 %v2844, %v2853
    %v2868 = vadd.f32 %v2845, %v2853
    %v2869 = vadd.f32 %v2846, %v2853
    %v2870 = vadd.f32 %v2847, %v2853
    %vm2871 = vcmp.gt.f32.partialorder %v2855, 0.0
    %vm2872 = vcmp.gt.f32.partialorder %v2856, 0.0
    %vm2873 = vcmp.gt.f32.partialorder %v2857, 0.0
    %vm2874 = vcmp.gt.f32.partialorder %v2858, 0.0
    %vm2875 = vcmp.gt.f32.partialorder %v2859, 0.0
    %vm2876 = vcmp.gt.f32.partialorder %v2860, 0.0
    %vm2877 = vcmp.gt.f32.partialorder %v2861, 0.0
    %vm2878 = vcmp.gt.f32.partialorder %v2862, 0.0
    %vm2879 = vcmp.gt.f32.partialorder %v2863, 0.0
    %vm2880 = vcmp.gt.f32.partialorder %v2864, 0.0
    %vm2881 = vcmp.gt.f32.partialorder %v2865, 0.0
    %vm2882 = vcmp.gt.f32.partialorder %v2866, 0.0
    %vm2883 = vcmp.gt.f32.partialorder %v2867, 0.0
    %vm2884 = vcmp.gt.f32.partialorder %v2868, 0.0
    %vm2885 = vcmp.gt.f32.partialorder %v2869, 0.0
    %vm2886 = vcmp.gt.f32.partialorder %v2870, 0.0
    %v2887 = vmul.f32 %v2855, 0.2
    %v2888 = vmul.f32 %v2856, 0.2
    %v2889 = vmul.f32 %v2857, 0.2
    %v2890 = vmul.f32 %v2858, 0.2
    %v2891 = vmul.f32 %v2859, 0.2
    %v2892 = vmul.f32 %v2860, 0.2
    %v2893 = vmul.f32 %v2861, 0.2
    %v2894 = vmul.f32 %v2862, 0.2
    %v2895 = vmul.f32 %v2863, 0.2
    %v2896 = vmul.f32 %v2864, 0.2
    %v2897 = vmul.f32 %v2865, 0.2
    %v2898 = vmul.f32 %v2866, 0.2
    %v2899 = vmul.f32 %v2867, 0.2
    %v2900 = vmul.f32 %v2868, 0.2
    %v2901 = vmul.f32 %v2869, 0.2
    %v2902 = vmul.f32 %v2870, 0.2
    %v2903 = vsel %vm2871, %v2855, %v2887
    %v2904 = vsel %vm2872, %v2856, %v2888
    %v2905 = vsel %vm2873, %v2857, %v2889
    %v2906 = vsel %vm2874, %v2858, %v2890
    %v2907 = vsel %vm2875, %v2859, %v2891
    %v2908 = vsel %vm2876, %v2860, %v2892
    %v2909 = vsel %vm2877, %v2861, %v2893
    %v2910 = vsel %vm2878, %v2862, %v2894
    %v2911 = vsel %vm2879, %v2863, %v2895
    %v2912 = vsel %vm2880, %v2864, %v2896
    %v2913 = vsel %vm2881, %v2865, %v2897
    %v2914 = vsel %vm2882, %v2866, %v2898
    %v2915 = vsel %vm2883, %v2867, %v2899
    %v2916 = vsel %vm2884, %v2868, %v2900
    %v2917 = vsel %vm2885, %v2869, %v2901
    %v2918 = vsel %vm2886, %v2870, %v2902
    %vm2919 = vcmask 64512
    %v2920 = vsel %vm2919, %v2903, 0.0
    %v2921 = vrot.slane %v2920, 4
    %v2922 = vadd.f32 %v2920, %v2921
    %v2923 = vrot.slane %v2922, 2
    %v2924 = vadd.f32 %v2922, %v2923
    %v2925 = vrot.slane %v2924, 1
    %v2926 = vadd.f32 %v2924, %v2925
    %v2927 = vsel %vm2919, %v2904, 0.0
    %v2928 = vrot.slane %v2927, 4
    %v2929 = vadd.f32 %v2927, %v2928
    %v2930 = vrot.slane %v2929, 2
    %v2931 = vadd.f32 %v2929, %v2930
    %v2932 = vrot.slane %v2931, 1
    %v2933 = vadd.f32 %v2931, %v2932
    %v2934 = vsel %vm2919, %v2905, 0.0
    %v2935 = vrot.slane %v2934, 4
    %v2936 = vadd.f32 %v2934, %v2935
    %v2937 = vrot.slane %v2936, 2
    %v2938 = vadd.f32 %v2936, %v2937
    %v2939 = vrot.slane %v2938, 1
    %v2940 = vadd.f32 %v2938, %v2939
    %v2941 = vsel %vm2919, %v2906, 0.0
    %v2942 = vrot.slane %v2941, 4
    %v2943 = vadd.f32 %v2941, %v2942
    %v2944 = vrot.slane %v2943, 2
    %v2945 = vadd.f32 %v2943, %v2944
    %v2946 = vrot.slane %v2945, 1
    %v2947 = vadd.f32 %v2945, %v2946
    %v2948 = vsel %vm2919, %v2907, 0.0
    %v2949 = vrot.slane %v2948, 4
    %v2950 = vadd.f32 %v2948, %v2949
    %v2951 = vrot.slane %v2950, 2
    %v2952 = vadd.f32 %v2950, %v2951
    %v2953 = vrot.slane %v2952, 1
    %v2954 = vadd.f32 %v2952, %v2953
    %v2955 = vsel %vm2919, %v2908, 0.0
    %v2956 = vrot.slane %v2955, 4
    %v2957 = vadd.f32 %v2955, %v2956
    %v2958 = vrot.slane %v2957, 2
    %v2959 = vadd.f32 %v2957, %v2958
    %v2960 = vrot.slane %v2959, 1
    %v2961 = vadd.f32 %v2959, %v2960
    %v2962 = vsel %vm2919, %v2909, 0.0
    %v2963 = vrot.slane %v2962, 4
    %v2964 = vadd.f32 %v2962, %v2963
    %v2965 = vrot.slane %v2964, 2
    %v2966 = vadd.f32 %v2964, %v2965
    %v2967 = vrot.slane %v2966, 1
    %v2968 = vadd.f32 %v2966, %v2967
    %v2969 = vsel %vm2919, %v2910, 0.0
    %v2970 = vrot.slane %v2969, 4
    %v2971 = vadd.f32 %v2969, %v2970
    %v2972 = vrot.slane %v2971, 2
    %v2973 = vadd.f32 %v2971, %v2972
    %v2974 = vrot.slane %v2973, 1
    %v2975 = vadd.f32 %v2973, %v2974
    %v2976 = vsel %vm2919, %v2911, 0.0
    %v2977 = vrot.slane %v2976, 4
    %v2978 = vadd.f32 %v2976, %v2977
    %v2979 = vrot.slane %v2978, 2
    %v2980 = vadd.f32 %v2978, %v2979
    %v2981 = vrot.slane %v2980, 1
    %v2982 = vadd.f32 %v2980, %v2981
    %v2983 = vsel %vm2919, %v2912, 0.0
    %v2984 = vrot.slane %v2983, 4
    %v2985 = vadd.f32 %v2983, %v2984
    %v2986 = vrot.slane %v2985, 2
    %v2987 = vadd.f32 %v2985, %v2986
    %v2988 = vrot.slane %v2987, 1
    %v2989 = vadd.f32 %v2987, %v2988
    %v2990 = vsel %vm2919, %v2913, 0.0
    %v2991 = vrot.slane %v2990, 4
    %v2992 = vadd.f32 %v2990, %v2991
    %v2993 = vrot.slane %v2992, 2
    %v2994 = vadd.f32 %v2992, %v2993
    %v2995 = vrot.slane %v2994, 1
    %v2996 = vadd.f32 %v2994, %v2995
    %v2997 = vsel %vm2919, %v2914, 0.0
    %v2998 = vrot.slane %v2997, 4
    %v2999 = vadd.f32 %v2997, %v2998
    %v3000 = vrot.slane %v2999, 2
    %v3001 = vadd.f32 %v2999, %v3000
    %v3002 = vrot.slane %v3001, 1
    %v3003 = vadd.f32 %v3001, %v3002
    %v3004 = vsel %vm2919, %v2915, 0.0
    %v3005 = vrot.slane %v3004, 4
    %v3006 = vadd.f32 %v3004, %v3005
    %v3007 = vrot.slane %v3006, 2
    %v3008 = vadd.f32 %v3006, %v3007
    %v3009 = vrot.slane %v3008, 1
    %v3010 = vadd.f32 %v3008, %v3009
    %v3011 = vsel %vm2919, %v2916, 0.0
    %v3012 = vrot.slane %v3011, 4
    %v3013 = vadd.f32 %v3011, %v3012
    %v3014 = vrot.slane %v3013, 2
    %v3015 = vadd.f32 %v3013, %v3014
    %v3016 = vrot.slane %v3015, 1
    %v3017 = vadd.f32 %v3015, %v3016
    %v3018 = vsel %vm2919, %v2917, 0.0
    %v3019 = vrot.slane %v3018, 4
    %v3020 = vadd.f32 %v3018, %v3019
    %v3021 = vrot.slane %v3020, 2
    %v3022 = vadd.f32 %v3020, %v3021
    %v3023 = vrot.slane %v3022, 1
    %v3024 = vadd.f32 %v3022, %v3023
    %v3025 = vsel %vm2919, %v2918, 0.0
    %v3026 = vrot.slane %v3025, 4
    %v3027 = vadd.f32 %v3025, %v3026
    %v3028 = vrot.slane %v3027, 2
    %v3029 = vadd.f32 %v3027, %v3028
    %v3030 = vrot.slane %v3029, 1
    %v3031 = vadd.f32 %v3029, %v3030
    %v3032 = vrcp.pop 8.0
    %v3033 = vmul.f32 %v2926, %v3032
    %v3034 = vmul.f32 %v2933, %v3032
    %v3035 = vmul.f32 %v2940, %v3032
    %v3036 = vmul.f32 %v2947, %v3032
    %v3037 = vmul.f32 %v2954, %v3032
    %v3038 = vmul.f32 %v2961, %v3032
    %v3039 = vmul.f32 %v2968, %v3032
    %v3040 = vmul.f32 %v2975, %v3032
    %v3041 = vmul.f32 %v2982, %v3032
    %v3042 = vmul.f32 %v2989, %v3032
    %v3043 = vmul.f32 %v2996, %v3032
    %v3044 = vmul.f32 %v3003, %v3032
    %v3045 = vmul.f32 %v3010, %v3032
    %v3046 = vmul.f32 %v3017, %v3032
    %v3047 = vmul.f32 %v3024, %v3032
    %v3048 = vmul.f32 %v3031, %v3032
    %v3049 = vld [vmem:[%s6] sm:$0xff]
    %v3050 = vld [vmem:[%s7] sm:$0x1]
    %v3052 = vlaneseq
    %v3053 = vshrl.u32 %v3052, 7
    %v3054 = vsub.s32 0, %v3053
    %v3055 = vrot.slane %v3050, %v3054
    %vm3073 = vcmask 1041409
    %v3074 = vsel %vm3073, %v3034, %v3033
    %vm3075 = vcmask 1042434
    %v3076 = vsel %vm3075, %v3035, %v3074
    %vm3077 = vcmask 1043459
    %v3078 = vsel %vm3077, %v3036, %v3076
    %vm3079 = vcmask 1044484
    %v3080 = vsel %vm3079, %v3037, %v3078
    %vm3081 = vcmask 1045509
    %v3082 = vsel %vm3081, %v3038, %v3080
    %vm3083 = vcmask 1046534
    %v3084 = vsel %vm3083, %v3039, %v3082
    %vm3085 = vcmask 1047559
    %v3086 = vsel %vm3085, %v3040, %v3084
    %v3087 = vsel %vm3073, %v3042, %v3041
    %v3088 = vsel %vm3075, %v3043, %v3087
    %v3089 = vsel %vm3077, %v3044, %v3088
    %v3090 = vsel %vm3079, %v3045, %v3089
    %v3091 = vsel %vm3081, %v3046, %v3090
    %v3092 = vsel %vm3083, %v3047, %v3091
    %v3093 = vsel %vm3085, %v3048, %v3092
    %v3094 = vsel %vm2919, %v3086, 0
    %v3096 = vsel %vm2919, %v3093, 0
    %3098 = vmatprep.subr.mxu0 0.0
    %3099 = vmatpush1.msra.mxu0 %v3049
    %3100 = vmatprep.subr.mxu0 0.0
    %3101 = vmatpush1.msra.mxu0 0.0
    %3102 = vmatprep.subr.mxu0 0.0
    %3103 = vmatpush1.msra.mxu0 0.0
    %3104 = vmatprep.subr.mxu0 0.0
    %3105 = vmatpush1.msra.mxu0 0.0
    %3106 = vmatprep.subr.mxu0 0.0
    %3107 = vmatpush1.msra.mxu0 0.0
    %3108 = vmatprep.subr.mxu0 0.0
    %3109 = vmatpush1.msra.mxu0 0.0
    %3110 = vmatprep.subr.mxu0 0.0
    %3111 = vmatpush1.msra.mxu0 0.0
    %3112 = vmatprep.subr.mxu0 0.0
    %3113 = vmatpush1.msra.mxu0 0.0
    %3114 = vmatprep.subr.mxu0 0.0
    %3115 = vmatpush1.msra.mxu0 0.0
    %3116 = vmatprep.subr.mxu0 0.0
    %3117 = vmatpush1.msra.mxu0 0.0
    %3118 = vmatprep.subr.mxu0 0.0
    %3119 = vmatpush1.msra.mxu0 0.0
    %3120 = vmatprep.subr.mxu0 0.0
    %3121 = vmatpush1.msra.mxu0 0.0
    %3122 = vmatprep.subr.mxu0 0.0
    %3123 = vmatpush1.msra.mxu0 0.0
    %3124 = vmatprep.subr.mxu0 0.0
    %3125 = vmatpush1.msra.mxu0 0.0
    %3126 = vmatprep.subr.mxu0 0.0
    %3127 = vmatpush1.msra.mxu0 0.0
    %3128 = vmatprep.subr.mxu0 0.0
    %3129 = vmatpush1.msra.mxu0 0.0
    %3130 = vmatprep.subr.mxu0 0.0
    %3131 = vmatpush1.msra.mxu0 0.0
    %3132 = vmatprep.subr.mxu0 0.0
    %3133 = vmatpush1.msra.mxu0 0.0
    %3134 = vmatprep.subr.mxu0 0.0
    %3135 = vmatpush1.msra.mxu0 0.0
    %3136 = vmatprep.subr.mxu0 0.0
    %3137 = vmatpush1.msra.mxu0 0.0
    %3138 = vmatprep.subr.mxu0 0.0
    %3139 = vmatpush1.msra.mxu0 0.0
    %3140 = vmatprep.subr.mxu0 0.0
    %3141 = vmatpush1.msra.mxu0 0.0
    %3142 = vmatprep.subr.mxu0 0.0
    %3143 = vmatpush1.msra.mxu0 0.0
    %3144 = vmatprep.subr.mxu0 0.0
    %3145 = vmatpush1.msra.mxu0 0.0
    %3146 = vmatprep.subr.mxu0 0.0
    %3147 = vmatpush1.msra.mxu0 0.0
    %3148 = vmatprep.subr.mxu0 0.0
    %3149 = vmatpush1.msra.mxu0 0.0
    %3150 = vmatprep.subr.mxu0 0.0
    %3151 = vmatpush1.msra.mxu0 0.0
    %3152 = vmatprep.subr.mxu0 0.0
    %3153 = vmatpush1.msra.mxu0 0.0
    %3154 = vmatprep.subr.mxu0 0.0
    %3155 = vmatpush1.msra.mxu0 0.0
    %3156 = vmatprep.subr.mxu0 0.0
    %3157 = vmatpush1.msra.mxu0 0.0
    %3158 = vmatprep.subr.mxu0 0.0
    %3159 = vmatpush1.msra.mxu0 0.0
    %3160 = vmatprep.subr.mxu0 0.0
    %3161 = vmatpush1.msra.mxu0 0.0
    %3162 = vmatprep.mubr.f32.mxu0 0.0
    %3163 = vmatmul.mubr.f32.gmra.mrb[0].mxu0 %v3094
    %v3164 = vpop.f32.mrb[0].mxu0
    %v3165 = vadd.f32 %v3055, %v3164
    %v3166 = vpop.f32.mrb[0].mxu0
    %3167 = vmatprep.mubr.f32.mxu0 0.0
    %3168 = vmatmul.mubr.f32.gmra.mrb[0].mxu0 %v3096
    %v3169 = vpop.f32.mrb[0].mxu0
    %v3170 = vadd.f32 %v3055, %v3169
    %v3171 = vpop.f32.mrb[0].mxu0
    %3172 = vdwg.mxu0
    %vm3173 = vcmp.gt.f32.partialorder %v3165, 0.0
    %vm3174 = vcmp.gt.f32.partialorder %v3170, 0.0
    %v3175 = vmul.f32 %v3165, 0.2
    %v3176 = vmul.f32 %v3170, 0.2
    %v3177 = vsel %vm3173, %v3165, %v3175
    %v3178 = vsel %vm3174, %v3170, %v3176
    %v3179 = vld [vmem:[%s8] sm:$0xff]
    %v3180 = vld [vmem:[%s9] sm:$0x1]
    %v3182 = vlaneseq
    %v3183 = vshrl.u32 %v3182, 7
    %v3184 = vsub.s32 0, %v3183
    %v3185 = vrot.slane %v3180, %v3184
    %v3188 = vsel %vm2919, %v3177, 0
    %v3191 = vsel %vm2919, %v3178, 0
    %3193 = vmatprep.subr.mxu0 0.0
    %3194 = vmatpush1.msra.mxu0 %v3179
    %3195 = vmatprep.subr.mxu0 0.0
    %3196 = vmatpush1.msra.mxu0 0.0
    %3197 = vmatprep.subr.mxu0 0.0
    %3198 = vmatpush1.msra.mxu0 0.0
    %3199 = vmatprep.subr.mxu0 0.0
    %3200 = vmatpush1.msra.mxu0 0.0
    %3201 = vmatprep.subr.mxu0 0.0
    %3202 = vmatpush1.msra.mxu0 0.0
    %3203 = vmatprep.subr.mxu0 0.0
    %3204 = vmatpush1.msra.mxu0 0.0
    %3205 = vmatprep.subr.mxu0 0.0
    %3206 = vmatpush1.msra.mxu0 0.0
    %3207 = vmatprep.subr.mxu0 0.0
    %3208 = vmatpush1.msra.mxu0 0.0
    %3209 = vmatprep.subr.mxu0 0.0
    %3210 = vmatpush1.msra.mxu0 0.0
    %3211 = vmatprep.subr.mxu0 0.0
    %3212 = vmatpush1.msra.mxu0 0.0
    %3213 = vmatprep.subr.mxu0 0.0
    %3214 = vmatpush1.msra.mxu0 0.0
    %3215 = vmatprep.subr.mxu0 0.0
    %3216 = vmatpush1.msra.mxu0 0.0
    %3217 = vmatprep.subr.mxu0 0.0
    %3218 = vmatpush1.msra.mxu0 0.0
    %3219 = vmatprep.subr.mxu0 0.0
    %3220 = vmatpush1.msra.mxu0 0.0
    %3221 = vmatprep.subr.mxu0 0.0
    %3222 = vmatpush1.msra.mxu0 0.0
    %3223 = vmatprep.subr.mxu0 0.0
    %3224 = vmatpush1.msra.mxu0 0.0
    %3225 = vmatprep.subr.mxu0 0.0
    %3226 = vmatpush1.msra.mxu0 0.0
    %3227 = vmatprep.subr.mxu0 0.0
    %3228 = vmatpush1.msra.mxu0 0.0
    %3229 = vmatprep.subr.mxu0 0.0
    %3230 = vmatpush1.msra.mxu0 0.0
    %3231 = vmatprep.subr.mxu0 0.0
    %3232 = vmatpush1.msra.mxu0 0.0
    %3233 = vmatprep.subr.mxu0 0.0
    %3234 = vmatpush1.msra.mxu0 0.0
    %3235 = vmatprep.subr.mxu0 0.0
    %3236 = vmatpush1.msra.mxu0 0.0
    %3237 = vmatprep.subr.mxu0 0.0
    %3238 = vmatpush1.msra.mxu0 0.0
    %3239 = vmatprep.subr.mxu0 0.0
    %3240 = vmatpush1.msra.mxu0 0.0
    %3241 = vmatprep.subr.mxu0 0.0
    %3242 = vmatpush1.msra.mxu0 0.0
    %3243 = vmatprep.subr.mxu0 0.0
    %3244 = vmatpush1.msra.mxu0 0.0
    %3245 = vmatprep.subr.mxu0 0.0
    %3246 = vmatpush1.msra.mxu0 0.0
    %3247 = vmatprep.subr.mxu0 0.0
    %3248 = vmatpush1.msra.mxu0 0.0
    %3249 = vmatprep.subr.mxu0 0.0
    %3250 = vmatpush1.msra.mxu0 0.0
    %3251 = vmatprep.subr.mxu0 0.0
    %3252 = vmatpush1.msra.mxu0 0.0
    %3253 = vmatprep.subr.mxu0 0.0
    %3254 = vmatpush1.msra.mxu0 0.0
    %3255 = vmatprep.subr.mxu0 0.0
    %3256 = vmatpush1.msra.mxu0 0.0
    %3257 = vmatprep.mubr.f32.mxu0 0.0
    %3258 = vmatmul.mubr.f32.gmra.mrb[0].mxu0 %v3188
    %v3259 = vpop.f32.mrb[0].mxu0
    %v3260 = vadd.f32 %v3185, %v3259
    %v3261 = vpop.f32.mrb[0].mxu0
    %3262 = vmatprep.mubr.f32.mxu0 0.0
    %3263 = vmatmul.mubr.f32.gmra.mrb[0].mxu0 %v3191
    %v3264 = vpop.f32.mrb[0].mxu0
    %v3265 = vadd.f32 %v3185, %v3264
    %v3266 = vpop.f32.mrb[0].mxu0
    %3267 = vdwg.mxu0
    %v3268 = vpack.c.bf16 %v3265, %v3260
    %v3270 = vunpack.c.l.b16 %v3268
    %v3271 = vunpack.c.h.b16 %v3268
    %v3272 = vpack.c.b16 %v3270, %v3270
    %v3273 = vpack.c.b16 %v3271, %v3271
    %3276 = vst [vmem:[#allocation2] sm:$0xf] %v3272
    %3277 = vst [vmem:[#allocation2 + $0x4] sm:$0xf] %v3273
    // Predicated region
    $region42: #{tpu_custom_call.1} parent=1 // pred_check
      _
    $region43: #{tpu_custom_call.1} parent=1 // pred_check_branch
      %3279 = sbr.rel (0) target = $region45
    $region44: #{tpu_custom_call.1} parent=1 // pred_region
      %s3281 = ssub.s32 128, 128
      %3282 = vsyncadd [#allocation3], %s3281
      %s3283 = sshll.u32 [#allocation2], 4
      %s3284 = int_to_ptr.vmem [resolvable:$true] %s3283
      %3289 = dma.vmem_to_hbm [thread:$0]  %s3284, 128, %s10, [#allocation3], 64, 64, 4
    $region45: #{tpu_custom_call.1} parent=1 // pred_fallthru
      _
    // Predicated region
    $region46: #{tpu_custom_call.1} parent=1 // pred_check
      _
    $region47: #{tpu_custom_call.1} parent=1 // pred_check_branch
      %3291 = sbr.rel (0) target = $region49
    $region48: #{tpu_custom_call.1} parent=1 // pred_region
      %3292 = dma.done [#allocation3], 128
    $region49: #{tpu_custom_call.1} parent=1 // pred_fallthru
      _
    %3293 = vsyncpa [#allocation3], 1

</llo_original>
